<compile_context>
chip_gen: v7x
topology: tpu7x:2x2x1
jax: 0.10.0
libtpu: 0.0.40
codegen_flags: <defaults>
</compile_context>

<pallas_src>
import functools

import jax
import jax.numpy as jnp
from jax.experimental import pallas as pl
from jax.experimental.pallas import tpu as pltpu

INPUT_SIZE = 28
HIDDEN_SIZE = 128
NUM_CLASSES = 10
NUM_LAYERS = 2

H = HIDDEN_SIZE


def lstm_fc_kernel(x_ref,            # (T*B, I)   time-major, flattened
                   wih0_ref,         # (I, 4H)
                   whh0_ref,         # (H, 4H)
                   b0_ref,           # (1, 4H)
                   w1_ref,           # (2H, 4H)   = [wih1; whh1] stacked
                   b1_ref,           # (1, 4H)
                   wfc_ref,          # (H, C)
                   bfc_ref,          # (1, C)
                   out_ref,          # (B, C)
                   *, T, B):
    """Single invocation (no grid). The whole LSTM + FC head runs in VMEM."""

    # ---- Hoisted layer-0 input projection: no recurrent dependence, so do
    # ---- all T timesteps as one (T*B, I) @ (I, 4H) matmul.
    g0_all = (jnp.dot(x_ref[...], wih0_ref[...],
                      preferred_element_type=jnp.float32)
              + b0_ref[...])                                   # (T*B, 4H)

    whh0 = whh0_ref[...]                                       # (H, 4H)
    w1 = w1_ref[...]                                           # (2H, 4H)
    # Hoist the bias broadcast out of the unrolled loop (JAX does not CSE it).
    b1 = jnp.broadcast_to(b1_ref[...], (B, 4 * H))

    def gates_to_hc(gates, c_prev):
        # Gate slices are all at 128-lane multiples (H = 128) -> aligned.
        i = jax.nn.sigmoid(gates[:, 0 * H:1 * H])
        f = jax.nn.sigmoid(gates[:, 1 * H:2 * H])
        g = jnp.tanh(gates[:, 2 * H:3 * H])
        o = jax.nn.sigmoid(gates[:, 3 * H:4 * H])
        c_new = f * c_prev + i * g
        h_new = o * jnp.tanh(c_new)
        return h_new, c_new

    zeros = jnp.zeros((B, H), jnp.float32)
    h0, c0 = zeros, zeros
    h1, c1 = zeros, zeros

    # T is small and static -> fully unrolled time loop (one basic block).
    for t in range(T):
        # Layer 0: only the recurrent matmul remains inside the loop.
        gates0 = (g0_all[t * B:(t + 1) * B, :]
                  + jnp.dot(h0, whh0, preferred_element_type=jnp.float32))
        h0, c0 = gates_to_hc(gates0, c0)

        # Layer 1: fused [h_l0, h_l1] @ [W_ih1; W_hh1]  (one K = 2H matmul).
        xh = jnp.concatenate([h0, h1], axis=1)                 # (B, 2H)
        gates1 = jnp.dot(xh, w1, preferred_element_type=jnp.float32) + b1
        h1, c1 = gates_to_hc(gates1, c1)

    # FC head on the last timestep's layer-1 hidden state.
    out_ref[...] = (jnp.dot(h1, wfc_ref[...],
                            preferred_element_type=jnp.float32)
                    + bfc_ref[...])


def rnn_forward(x, params):
    """x: (B, T, I) float32 (batch_first, like the PyTorch module).
    Returns logits of shape (B, num_classes)."""
    (wih0, whh0, b0, wih1, whh1, b1, wfc, bfc) = params
    B, T, I = x.shape
    C = wfc.shape[1]

    # Pad the batch to a full sublane group (multiple of 8); padded rows are
    # computed but discarded.
    Bp = max(8, ((B + 7) // 8) * 8)
    if Bp != B:
        x = jnp.pad(x, ((0, Bp - B), (0, 0), (0, 0)))

    # Time-major, flattened so the hoisted layer-0 projection is one matmul
    # and per-timestep slices are sublane-aligned static slices.
    x_flat = jnp.transpose(x, (1, 0, 2)).reshape(T * Bp, I)    # (T*Bp, I)

    # Stack layer-1 input/recurrent weights for the fused K=2H matmul.
    w1 = jnp.concatenate([wih1, whh1], axis=0)                 # (2H, 4H)

    vmem = pl.BlockSpec(memory_space=pltpu.MemorySpace.VMEM)   # full array
    kernel = functools.partial(lstm_fc_kernel, T=T, B=Bp)
    out = pl.pallas_call(
        kernel,
        out_shape=jax.ShapeDtypeStruct((Bp, C), jnp.float32),
        in_specs=[vmem] * 8,
        out_specs=vmem,
    )(x_flat, wih0, whh0, b0, w1, b1, wfc, bfc)
    return out[:B]


def init_params(key):
    """Deterministic synthetic parameters mirroring nn.LSTM + nn.Linear shapes.
    Stored pre-transposed as (in_features, 4H) / (H, C); biases combined
    (b_ih + b_hh) per layer."""
    k = 1.0 / jnp.sqrt(jnp.float32(H))
    keys = jax.random.split(key, 10)

    def u(kk, shape):
        return jax.random.uniform(kk, shape, jnp.float32, -k, k)

    # layer 0: input -> 4H
    wih0 = u(keys[0], (INPUT_SIZE, 4 * H))
    whh0 = u(keys[1], (H, 4 * H))
    b0 = u(keys[2], (1, 4 * H)) + u(keys[3], (1, 4 * H))   # b_ih + b_hh
    # layer 1: H -> 4H
    wih1 = u(keys[4], (H, 4 * H))
    whh1 = u(keys[5], (H, 4 * H))
    b1 = u(keys[6], (1, 4 * H)) + u(keys[7], (1, 4 * H))
    # fc head
    kf = 1.0 / jnp.sqrt(jnp.float32(H))
    wfc = jax.random.uniform(keys[8], (H, NUM_CLASSES), jnp.float32, -kf, kf)
    bfc = jax.random.uniform(keys[9], (1, NUM_CLASSES), jnp.float32, -kf, kf)
    return (wih0, whh0, b0, wih1, whh1, b1, wfc, bfc)


def rnn_reference(x, params):
    """Pure-JAX reference with identical semantics (correctness check)."""
    (wih0, whh0, b0, wih1, whh1, b1, wfc, bfc) = params
    B, T, _ = x.shape

    def cell(x_t, h, c, wih, whh, b):
        gates = x_t @ wih + h @ whh + b
        i = jax.nn.sigmoid(gates[:, 0 * H:1 * H])
        f = jax.nn.sigmoid(gates[:, 1 * H:2 * H])
        g = jnp.tanh(gates[:, 2 * H:3 * H])
        o = jax.nn.sigmoid(gates[:, 3 * H:4 * H])
        c = f * c + i * g
        h = o * jnp.tanh(c)
        return h, c

    h0 = c0 = h1 = c1 = jnp.zeros((B, H), jnp.float32)
    for t in range(T):
        x_t = x[:, t, :]
        h0, c0 = cell(x_t, h0, c0, wih0, whh0, b0)
        h1, c1 = cell(h0, h1, c1, wih1, whh1, b1)
    return h1 @ wfc + bfc


if __name__ == "__main__":
    key = jax.random.PRNGKey(0)
    k_x, k_p = jax.random.split(key)

    B, T = 8, 8   # batch is a full sublane group; short sequence
    x = jax.random.normal(k_x, (B, T, INPUT_SIZE), jnp.float32)
    params = init_params(k_p)

    out = jax.block_until_ready(rnn_forward(x, params))
    ref = rnn_reference(x, params)

    assert out.shape == (B, NUM_CLASSES)
    # Tolerance accounts for MXU f32-via-bf16-pass matmul precision differing
    # slightly between the Mosaic kernel and the XLA reference.
    assert jnp.allclose(out, ref, atol=2e-2, rtol=2e-2), (
        f"max err {jnp.max(jnp.abs(out - ref))}")

    print("KERNEL_OK")
</pallas_src>

<mosaic_0001>
module attributes {stable_mosaic.version = 11 : i64} {
  func.func @lstm_fc_kernel(%arg0: memref<64x28xf32, #tpu.memory_space<vmem>>, %arg1: memref<28x512xf32, #tpu.memory_space<vmem>>, %arg2: memref<128x512xf32, #tpu.memory_space<vmem>>, %arg3: memref<1x512xf32, #tpu.memory_space<vmem>>, %arg4: memref<256x512xf32, #tpu.memory_space<vmem>>, %arg5: memref<1x512xf32, #tpu.memory_space<vmem>>, %arg6: memref<128x10xf32, #tpu.memory_space<vmem>>, %arg7: memref<1x10xf32, #tpu.memory_space<vmem>>, %arg8: memref<8x10xf32, #tpu.memory_space<vmem>>) attributes {dimension_semantics = [], scalar_prefetch = 0 : i64, scratch_operands = 0 : i64, tpu.core_type = #tpu.core_type<tc>} {
    %c0 = arith.constant 0 : index
    %c0_0 = arith.constant 0 : index
    %0 = vector.load %arg0[%c0, %c0_0] : memref<64x28xf32, #tpu.memory_space<vmem>>, vector<64x28xf32>
    %c0_1 = arith.constant 0 : index
    %c0_2 = arith.constant 0 : index
    %1 = vector.load %arg1[%c0_1, %c0_2] : memref<28x512xf32, #tpu.memory_space<vmem>>, vector<28x512xf32>
    %cst = arith.constant dense<0.000000e+00> : vector<64x512xf32>
    %2 = tpu.matmul %0, %1, %cst {dimension_numbers = #tpu.dot_dimension_numbers<[1], [0], [0], [1], [0, 0, 1, 1], [], []>} : vector<64x28xf32>, vector<28x512xf32>, vector<64x512xf32> -> vector<64x512xf32>
    %c0_3 = arith.constant 0 : index
    %c0_4 = arith.constant 0 : index
    %3 = vector.load %arg3[%c0_3, %c0_4] : memref<1x512xf32, #tpu.memory_space<vmem>>, vector<1x512xf32>
    %4 = vector.broadcast %3 : vector<1x512xf32> to vector<64x512xf32>
    %5 = arith.addf %2, %4 : vector<64x512xf32>
    %c0_5 = arith.constant 0 : index
    %c0_6 = arith.constant 0 : index
    %6 = vector.load %arg2[%c0_5, %c0_6] : memref<128x512xf32, #tpu.memory_space<vmem>>, vector<128x512xf32>
    %c0_7 = arith.constant 0 : index
    %c0_8 = arith.constant 0 : index
    %7 = vector.load %arg4[%c0_7, %c0_8] : memref<256x512xf32, #tpu.memory_space<vmem>>, vector<256x512xf32>
    %c0_9 = arith.constant 0 : index
    %c0_10 = arith.constant 0 : index
    %8 = vector.load %arg5[%c0_9, %c0_10] : memref<1x512xf32, #tpu.memory_space<vmem>>, vector<1x512xf32>
    %9 = vector.shape_cast %8 : vector<1x512xf32> to vector<1x512xf32>
    %10 = vector.broadcast %9 : vector<1x512xf32> to vector<8x512xf32>
    %cst_11 = arith.constant 0.000000e+00 : f32
    %11 = vector.broadcast %cst_11 : f32 to vector<8x128xf32>
    %12 = vector.extract_strided_slice %5 {offsets = [0, 0], sizes = [8, 512], strides = [1, 1]} : vector<64x512xf32> to vector<8x512xf32>
    %cst_12 = arith.constant dense<0.000000e+00> : vector<8x512xf32>
    %13 = tpu.matmul %11, %6, %cst_12 {dimension_numbers = #tpu.dot_dimension_numbers<[1], [0], [0], [1], [0, 0, 1, 1], [], []>} : vector<8x128xf32>, vector<128x512xf32>, vector<8x512xf32> -> vector<8x512xf32>
    %14 = arith.addf %12, %13 : vector<8x512xf32>
    %15 = vector.extract_strided_slice %14 {offsets = [0, 0], sizes = [8, 128], strides = [1, 1]} : vector<8x512xf32> to vector<8x128xf32>
    %16 = arith.negf %15 : vector<8x128xf32>
    %17 = math.exp %16 : vector<8x128xf32>
    %cst_13 = arith.constant 1.000000e+00 : f32
    %18 = vector.broadcast %cst_13 : f32 to vector<8x128xf32>
    %19 = arith.addf %18, %17 : vector<8x128xf32>
    %20 = arith.divf %18, %19 : vector<8x128xf32>
    %21 = vector.extract_strided_slice %14 {offsets = [0, 128], sizes = [8, 128], strides = [1, 1]} : vector<8x512xf32> to vector<8x128xf32>
    %22 = arith.negf %21 : vector<8x128xf32>
    %23 = math.exp %22 : vector<8x128xf32>
    %cst_14 = arith.constant 1.000000e+00 : f32
    %24 = vector.broadcast %cst_14 : f32 to vector<8x128xf32>
    %25 = arith.addf %24, %23 : vector<8x128xf32>
    %26 = arith.divf %24, %25 : vector<8x128xf32>
    %27 = vector.extract_strided_slice %14 {offsets = [0, 256], sizes = [8, 128], strides = [1, 1]} : vector<8x512xf32> to vector<8x128xf32>
    %28 = math.tanh %27 : vector<8x128xf32>
    %29 = vector.extract_strided_slice %14 {offsets = [0, 384], sizes = [8, 128], strides = [1, 1]} : vector<8x512xf32> to vector<8x128xf32>
    %30 = arith.negf %29 : vector<8x128xf32>
    %31 = math.exp %30 : vector<8x128xf32>
    %cst_15 = arith.constant 1.000000e+00 : f32
    %32 = vector.broadcast %cst_15 : f32 to vector<8x128xf32>
    %33 = arith.addf %32, %31 : vector<8x128xf32>
    %34 = arith.divf %32, %33 : vector<8x128xf32>
    %35 = arith.mulf %26, %11 : vector<8x128xf32>
    %36 = arith.mulf %20, %28 : vector<8x128xf32>
    %37 = arith.addf %35, %36 : vector<8x128xf32>
    %38 = math.tanh %37 : vector<8x128xf32>
    %39 = arith.mulf %34, %38 : vector<8x128xf32>
    %40 = tpu.concatenate %39, %11 in 1 : vector<8x128xf32>, vector<8x128xf32> -> vector<8x256xf32>
    %cst_16 = arith.constant dense<0.000000e+00> : vector<8x512xf32>
    %41 = tpu.matmul %40, %7, %cst_16 {dimension_numbers = #tpu.dot_dimension_numbers<[1], [0], [0], [1], [0, 0, 1, 1], [], []>} : vector<8x256xf32>, vector<256x512xf32>, vector<8x512xf32> -> vector<8x512xf32>
    %42 = arith.addf %41, %10 : vector<8x512xf32>
    %43 = vector.extract_strided_slice %42 {offsets = [0, 0], sizes = [8, 128], strides = [1, 1]} : vector<8x512xf32> to vector<8x128xf32>
    %44 = arith.negf %43 : vector<8x128xf32>
    %45 = math.exp %44 : vector<8x128xf32>
    %cst_17 = arith.constant 1.000000e+00 : f32
    %46 = vector.broadcast %cst_17 : f32 to vector<8x128xf32>
    %47 = arith.addf %46, %45 : vector<8x128xf32>
    %48 = arith.divf %46, %47 : vector<8x128xf32>
    %49 = vector.extract_strided_slice %42 {offsets = [0, 128], sizes = [8, 128], strides = [1, 1]} : vector<8x512xf32> to vector<8x128xf32>
    %50 = arith.negf %49 : vector<8x128xf32>
    %51 = math.exp %50 : vector<8x128xf32>
    %cst_18 = arith.constant 1.000000e+00 : f32
    %52 = vector.broadcast %cst_18 : f32 to vector<8x128xf32>
    %53 = arith.addf %52, %51 : vector<8x128xf32>
    %54 = arith.divf %52, %53 : vector<8x128xf32>
    %55 = vector.extract_strided_slice %42 {offsets = [0, 256], sizes = [8, 128], strides = [1, 1]} : vector<8x512xf32> to vector<8x128xf32>
    %56 = math.tanh %55 : vector<8x128xf32>
    %57 = vector.extract_strided_slice %42 {offsets = [0, 384], sizes = [8, 128], strides = [1, 1]} : vector<8x512xf32> to vector<8x128xf32>
    %58 = arith.negf %57 : vector<8x128xf32>
    %59 = math.exp %58 : vector<8x128xf32>
    %cst_19 = arith.constant 1.000000e+00 : f32
    %60 = vector.broadcast %cst_19 : f32 to vector<8x128xf32>
    %61 = arith.addf %60, %59 : vector<8x128xf32>
    %62 = arith.divf %60, %61 : vector<8x128xf32>
    %63 = arith.mulf %54, %11 : vector<8x128xf32>
    %64 = arith.mulf %48, %56 : vector<8x128xf32>
    %65 = arith.addf %63, %64 : vector<8x128xf32>
    %66 = math.tanh %65 : vector<8x128xf32>
    %67 = arith.mulf %62, %66 : vector<8x128xf32>
    %68 = vector.extract_strided_slice %5 {offsets = [8, 0], sizes = [8, 512], strides = [1, 1]} : vector<64x512xf32> to vector<8x512xf32>
    %cst_20 = arith.constant dense<0.000000e+00> : vector<8x512xf32>
    %69 = tpu.matmul %39, %6, %cst_20 {dimension_numbers = #tpu.dot_dimension_numbers<[1], [0], [0], [1], [0, 0, 1, 1], [], []>} : vector<8x128xf32>, vector<128x512xf32>, vector<8x512xf32> -> vector<8x512xf32>
    %70 = arith.addf %68, %69 : vector<8x512xf32>
    %71 = vector.extract_strided_slice %70 {offsets = [0, 0], sizes = [8, 128], strides = [1, 1]} : vector<8x512xf32> to vector<8x128xf32>
    %72 = arith.negf %71 : vector<8x128xf32>
    %73 = math.exp %72 : vector<8x128xf32>
    %cst_21 = arith.constant 1.000000e+00 : f32
    %74 = vector.broadcast %cst_21 : f32 to vector<8x128xf32>
    %75 = arith.addf %74, %73 : vector<8x128xf32>
    %76 = arith.divf %74, %75 : vector<8x128xf32>
    %77 = vector.extract_strided_slice %70 {offsets = [0, 128], sizes = [8, 128], strides = [1, 1]} : vector<8x512xf32> to vector<8x128xf32>
    %78 = arith.negf %77 : vector<8x128xf32>
    %79 = math.exp %78 : vector<8x128xf32>
    %cst_22 = arith.constant 1.000000e+00 : f32
    %80 = vector.broadcast %cst_22 : f32 to vector<8x128xf32>
    %81 = arith.addf %80, %79 : vector<8x128xf32>
    %82 = arith.divf %80, %81 : vector<8x128xf32>
    %83 = vector.extract_strided_slice %70 {offsets = [0, 256], sizes = [8, 128], strides = [1, 1]} : vector<8x512xf32> to vector<8x128xf32>
    %84 = math.tanh %83 : vector<8x128xf32>
    %85 = vector.extract_strided_slice %70 {offsets = [0, 384], sizes = [8, 128], strides = [1, 1]} : vector<8x512xf32> to vector<8x128xf32>
    %86 = arith.negf %85 : vector<8x128xf32>
    %87 = math.exp %86 : vector<8x128xf32>
    %cst_23 = arith.constant 1.000000e+00 : f32
    %88 = vector.broadcast %cst_23 : f32 to vector<8x128xf32>
    %89 = arith.addf %88, %87 : vector<8x128xf32>
    %90 = arith.divf %88, %89 : vector<8x128xf32>
    %91 = arith.mulf %82, %37 : vector<8x128xf32>
    %92 = arith.mulf %76, %84 : vector<8x128xf32>
    %93 = arith.addf %91, %92 : vector<8x128xf32>
    %94 = math.tanh %93 : vector<8x128xf32>
    %95 = arith.mulf %90, %94 : vector<8x128xf32>
    %96 = tpu.concatenate %95, %67 in 1 : vector<8x128xf32>, vector<8x128xf32> -> vector<8x256xf32>
    %cst_24 = arith.constant dense<0.000000e+00> : vector<8x512xf32>
    %97 = tpu.matmul %96, %7, %cst_24 {dimension_numbers = #tpu.dot_dimension_numbers<[1], [0], [0], [1], [0, 0, 1, 1], [], []>} : vector<8x256xf32>, vector<256x512xf32>, vector<8x512xf32> -> vector<8x512xf32>
    %98 = arith.addf %97, %10 : vector<8x512xf32>
    %99 = vector.extract_strided_slice %98 {offsets = [0, 0], sizes = [8, 128], strides = [1, 1]} : vector<8x512xf32> to vector<8x128xf32>
    %100 = arith.negf %99 : vector<8x128xf32>
    %101 = math.exp %100 : vector<8x128xf32>
    %cst_25 = arith.constant 1.000000e+00 : f32
    %102 = vector.broadcast %cst_25 : f32 to vector<8x128xf32>
    %103 = arith.addf %102, %101 : vector<8x128xf32>
    %104 = arith.divf %102, %103 : vector<8x128xf32>
    %105 = vector.extract_strided_slice %98 {offsets = [0, 128], sizes = [8, 128], strides = [1, 1]} : vector<8x512xf32> to vector<8x128xf32>
    %106 = arith.negf %105 : vector<8x128xf32>
    %107 = math.exp %106 : vector<8x128xf32>
    %cst_26 = arith.constant 1.000000e+00 : f32
    %108 = vector.broadcast %cst_26 : f32 to vector<8x128xf32>
    %109 = arith.addf %108, %107 : vector<8x128xf32>
    %110 = arith.divf %108, %109 : vector<8x128xf32>
    %111 = vector.extract_strided_slice %98 {offsets = [0, 256], sizes = [8, 128], strides = [1, 1]} : vector<8x512xf32> to vector<8x128xf32>
    %112 = math.tanh %111 : vector<8x128xf32>
    %113 = vector.extract_strided_slice %98 {offsets = [0, 384], sizes = [8, 128], strides = [1, 1]} : vector<8x512xf32> to vector<8x128xf32>
    %114 = arith.negf %113 : vector<8x128xf32>
    %115 = math.exp %114 : vector<8x128xf32>
    %cst_27 = arith.constant 1.000000e+00 : f32
    %116 = vector.broadcast %cst_27 : f32 to vector<8x128xf32>
    %117 = arith.addf %116, %115 : vector<8x128xf32>
    %118 = arith.divf %116, %117 : vector<8x128xf32>
    %119 = arith.mulf %110, %65 : vector<8x128xf32>
    %120 = arith.mulf %104, %112 : vector<8x128xf32>
    %121 = arith.addf %119, %120 : vector<8x128xf32>
    %122 = math.tanh %121 : vector<8x128xf32>
    %123 = arith.mulf %118, %122 : vector<8x128xf32>
    %124 = vector.extract_strided_slice %5 {offsets = [16, 0], sizes = [8, 512], strides = [1, 1]} : vector<64x512xf32> to vector<8x512xf32>
    %cst_28 = arith.constant dense<0.000000e+00> : vector<8x512xf32>
    %125 = tpu.matmul %95, %6, %cst_28 {dimension_numbers = #tpu.dot_dimension_numbers<[1], [0], [0], [1], [0, 0, 1, 1], [], []>} : vector<8x128xf32>, vector<128x512xf32>, vector<8x512xf32> -> vector<8x512xf32>
    %126 = arith.addf %124, %125 : vector<8x512xf32>
    %127 = vector.extract_strided_slice %126 {offsets = [0, 0], sizes = [8, 128], strides = [1, 1]} : vector<8x512xf32> to vector<8x128xf32>
    %128 = arith.negf %127 : vector<8x128xf32>
    %129 = math.exp %128 : vector<8x128xf32>
    %cst_29 = arith.constant 1.000000e+00 : f32
    %130 = vector.broadcast %cst_29 : f32 to vector<8x128xf32>
    %131 = arith.addf %130, %129 : vector<8x128xf32>
    %132 = arith.divf %130, %131 : vector<8x128xf32>
    %133 = vector.extract_strided_slice %126 {offsets = [0, 128], sizes = [8, 128], strides = [1, 1]} : vector<8x512xf32> to vector<8x128xf32>
    %134 = arith.negf %133 : vector<8x128xf32>
    %135 = math.exp %134 : vector<8x128xf32>
    %cst_30 = arith.constant 1.000000e+00 : f32
    %136 = vector.broadcast %cst_30 : f32 to vector<8x128xf32>
    %137 = arith.addf %136, %135 : vector<8x128xf32>
    %138 = arith.divf %136, %137 : vector<8x128xf32>
    %139 = vector.extract_strided_slice %126 {offsets = [0, 256], sizes = [8, 128], strides = [1, 1]} : vector<8x512xf32> to vector<8x128xf32>
    %140 = math.tanh %139 : vector<8x128xf32>
    %141 = vector.extract_strided_slice %126 {offsets = [0, 384], sizes = [8, 128], strides = [1, 1]} : vector<8x512xf32> to vector<8x128xf32>
    %142 = arith.negf %141 : vector<8x128xf32>
    %143 = math.exp %142 : vector<8x128xf32>
    %cst_31 = arith.constant 1.000000e+00 : f32
    %144 = vector.broadcast %cst_31 : f32 to vector<8x128xf32>
    %145 = arith.addf %144, %143 : vector<8x128xf32>
    %146 = arith.divf %144, %145 : vector<8x128xf32>
    %147 = arith.mulf %138, %93 : vector<8x128xf32>
    %148 = arith.mulf %132, %140 : vector<8x128xf32>
    %149 = arith.addf %147, %148 : vector<8x128xf32>
    %150 = math.tanh %149 : vector<8x128xf32>
    %151 = arith.mulf %146, %150 : vector<8x128xf32>
    %152 = tpu.concatenate %151, %123 in 1 : vector<8x128xf32>, vector<8x128xf32> -> vector<8x256xf32>
    %cst_32 = arith.constant dense<0.000000e+00> : vector<8x512xf32>
    %153 = tpu.matmul %152, %7, %cst_32 {dimension_numbers = #tpu.dot_dimension_numbers<[1], [0], [0], [1], [0, 0, 1, 1], [], []>} : vector<8x256xf32>, vector<256x512xf32>, vector<8x512xf32> -> vector<8x512xf32>
    %154 = arith.addf %153, %10 : vector<8x512xf32>
    %155 = vector.extract_strided_slice %154 {offsets = [0, 0], sizes = [8, 128], strides = [1, 1]} : vector<8x512xf32> to vector<8x128xf32>
    %156 = arith.negf %155 : vector<8x128xf32>
    %157 = math.exp %156 : vector<8x128xf32>
    %cst_33 = arith.constant 1.000000e+00 : f32
    %158 = vector.broadcast %cst_33 : f32 to vector<8x128xf32>
    %159 = arith.addf %158, %157 : vector<8x128xf32>
    %160 = arith.divf %158, %159 : vector<8x128xf32>
    %161 = vector.extract_strided_slice %154 {offsets = [0, 128], sizes = [8, 128], strides = [1, 1]} : vector<8x512xf32> to vector<8x128xf32>
    %162 = arith.negf %161 : vector<8x128xf32>
    %163 = math.exp %162 : vector<8x128xf32>
    %cst_34 = arith.constant 1.000000e+00 : f32
    %164 = vector.broadcast %cst_34 : f32 to vector<8x128xf32>
    %165 = arith.addf %164, %163 : vector<8x128xf32>
    %166 = arith.divf %164, %165 : vector<8x128xf32>
    %167 = vector.extract_strided_slice %154 {offsets = [0, 256], sizes = [8, 128], strides = [1, 1]} : vector<8x512xf32> to vector<8x128xf32>
    %168 = math.tanh %167 : vector<8x128xf32>
    %169 = vector.extract_strided_slice %154 {offsets = [0, 384], sizes = [8, 128], strides = [1, 1]} : vector<8x512xf32> to vector<8x128xf32>
    %170 = arith.negf %169 : vector<8x128xf32>
    %171 = math.exp %170 : vector<8x128xf32>
    %cst_35 = arith.constant 1.000000e+00 : f32
    %172 = vector.broadcast %cst_35 : f32 to vector<8x128xf32>
    %173 = arith.addf %172, %171 : vector<8x128xf32>
    %174 = arith.divf %172, %173 : vector<8x128xf32>
    %175 = arith.mulf %166, %121 : vector<8x128xf32>
    %176 = arith.mulf %160, %168 : vector<8x128xf32>
    %177 = arith.addf %175, %176 : vector<8x128xf32>
    %178 = math.tanh %177 : vector<8x128xf32>
    %179 = arith.mulf %174, %178 : vector<8x128xf32>
    %180 = vector.extract_strided_slice %5 {offsets = [24, 0], sizes = [8, 512], strides = [1, 1]} : vector<64x512xf32> to vector<8x512xf32>
    %cst_36 = arith.constant dense<0.000000e+00> : vector<8x512xf32>
    %181 = tpu.matmul %151, %6, %cst_36 {dimension_numbers = #tpu.dot_dimension_numbers<[1], [0], [0], [1], [0, 0, 1, 1], [], []>} : vector<8x128xf32>, vector<128x512xf32>, vector<8x512xf32> -> vector<8x512xf32>
    %182 = arith.addf %180, %181 : vector<8x512xf32>
    %183 = vector.extract_strided_slice %182 {offsets = [0, 0], sizes = [8, 128], strides = [1, 1]} : vector<8x512xf32> to vector<8x128xf32>
    %184 = arith.negf %183 : vector<8x128xf32>
    %185 = math.exp %184 : vector<8x128xf32>
    %cst_37 = arith.constant 1.000000e+00 : f32
    %186 = vector.broadcast %cst_37 : f32 to vector<8x128xf32>
    %187 = arith.addf %186, %185 : vector<8x128xf32>
    %188 = arith.divf %186, %187 : vector<8x128xf32>
    %189 = vector.extract_strided_slice %182 {offsets = [0, 128], sizes = [8, 128], strides = [1, 1]} : vector<8x512xf32> to vector<8x128xf32>
    %190 = arith.negf %189 : vector<8x128xf32>
    %191 = math.exp %190 : vector<8x128xf32>
    %cst_38 = arith.constant 1.000000e+00 : f32
    %192 = vector.broadcast %cst_38 : f32 to vector<8x128xf32>
    %193 = arith.addf %192, %191 : vector<8x128xf32>
    %194 = arith.divf %192, %193 : vector<8x128xf32>
    %195 = vector.extract_strided_slice %182 {offsets = [0, 256], sizes = [8, 128], strides = [1, 1]} : vector<8x512xf32> to vector<8x128xf32>
    %196 = math.tanh %195 : vector<8x128xf32>
    %197 = vector.extract_strided_slice %182 {offsets = [0, 384], sizes = [8, 128], strides = [1, 1]} : vector<8x512xf32> to vector<8x128xf32>
    %198 = arith.negf %197 : vector<8x128xf32>
    %199 = math.exp %198 : vector<8x128xf32>
    %cst_39 = arith.constant 1.000000e+00 : f32
    %200 = vector.broadcast %cst_39 : f32 to vector<8x128xf32>
    %201 = arith.addf %200, %199 : vector<8x128xf32>
    %202 = arith.divf %200, %201 : vector<8x128xf32>
    %203 = arith.mulf %194, %149 : vector<8x128xf32>
    %204 = arith.mulf %188, %196 : vector<8x128xf32>
    %205 = arith.addf %203, %204 : vector<8x128xf32>
    %206 = math.tanh %205 : vector<8x128xf32>
    %207 = arith.mulf %202, %206 : vector<8x128xf32>
    %208 = tpu.concatenate %207, %179 in 1 : vector<8x128xf32>, vector<8x128xf32> -> vector<8x256xf32>
    %cst_40 = arith.constant dense<0.000000e+00> : vector<8x512xf32>
    %209 = tpu.matmul %208, %7, %cst_40 {dimension_numbers = #tpu.dot_dimension_numbers<[1], [0], [0], [1], [0, 0, 1, 1], [], []>} : vector<8x256xf32>, vector<256x512xf32>, vector<8x512xf32> -> vector<8x512xf32>
    %210 = arith.addf %209, %10 : vector<8x512xf32>
    %211 = vector.extract_strided_slice %210 {offsets = [0, 0], sizes = [8, 128], strides = [1, 1]} : vector<8x512xf32> to vector<8x128xf32>
    %212 = arith.negf %211 : vector<8x128xf32>
    %213 = math.exp %212 : vector<8x128xf32>
    %cst_41 = arith.constant 1.000000e+00 : f32
    %214 = vector.broadcast %cst_41 : f32 to vector<8x128xf32>
    %215 = arith.addf %214, %213 : vector<8x128xf32>
    %216 = arith.divf %214, %215 : vector<8x128xf32>
    %217 = vector.extract_strided_slice %210 {offsets = [0, 128], sizes = [8, 128], strides = [1, 1]} : vector<8x512xf32> to vector<8x128xf32>
    %218 = arith.negf %217 : vector<8x128xf32>
    %219 = math.exp %218 : vector<8x128xf32>
    %cst_42 = arith.constant 1.000000e+00 : f32
    %220 = vector.broadcast %cst_42 : f32 to vector<8x128xf32>
    %221 = arith.addf %220, %219 : vector<8x128xf32>
    %222 = arith.divf %220, %221 : vector<8x128xf32>
    %223 = vector.extract_strided_slice %210 {offsets = [0, 256], sizes = [8, 128], strides = [1, 1]} : vector<8x512xf32> to vector<8x128xf32>
    %224 = math.tanh %223 : vector<8x128xf32>
    %225 = vector.extract_strided_slice %210 {offsets = [0, 384], sizes = [8, 128], strides = [1, 1]} : vector<8x512xf32> to vector<8x128xf32>
    %226 = arith.negf %225 : vector<8x128xf32>
    %227 = math.exp %226 : vector<8x128xf32>
    %cst_43 = arith.constant 1.000000e+00 : f32
    %228 = vector.broadcast %cst_43 : f32 to vector<8x128xf32>
    %229 = arith.addf %228, %227 : vector<8x128xf32>
    %230 = arith.divf %228, %229 : vector<8x128xf32>
    %231 = arith.mulf %222, %177 : vector<8x128xf32>
    %232 = arith.mulf %216, %224 : vector<8x128xf32>
    %233 = arith.addf %231, %232 : vector<8x128xf32>
    %234 = math.tanh %233 : vector<8x128xf32>
    %235 = arith.mulf %230, %234 : vector<8x128xf32>
    %236 = vector.extract_strided_slice %5 {offsets = [32, 0], sizes = [8, 512], strides = [1, 1]} : vector<64x512xf32> to vector<8x512xf32>
    %cst_44 = arith.constant dense<0.000000e+00> : vector<8x512xf32>
    %237 = tpu.matmul %207, %6, %cst_44 {dimension_numbers = #tpu.dot_dimension_numbers<[1], [0], [0], [1], [0, 0, 1, 1], [], []>} : vector<8x128xf32>, vector<128x512xf32>, vector<8x512xf32> -> vector<8x512xf32>
    %238 = arith.addf %236, %237 : vector<8x512xf32>
    %239 = vector.extract_strided_slice %238 {offsets = [0, 0], sizes = [8, 128], strides = [1, 1]} : vector<8x512xf32> to vector<8x128xf32>
    %240 = arith.negf %239 : vector<8x128xf32>
    %241 = math.exp %240 : vector<8x128xf32>
    %cst_45 = arith.constant 1.000000e+00 : f32
    %242 = vector.broadcast %cst_45 : f32 to vector<8x128xf32>
    %243 = arith.addf %242, %241 : vector<8x128xf32>
    %244 = arith.divf %242, %243 : vector<8x128xf32>
    %245 = vector.extract_strided_slice %238 {offsets = [0, 128], sizes = [8, 128], strides = [1, 1]} : vector<8x512xf32> to vector<8x128xf32>
    %246 = arith.negf %245 : vector<8x128xf32>
    %247 = math.exp %246 : vector<8x128xf32>
    %cst_46 = arith.constant 1.000000e+00 : f32
    %248 = vector.broadcast %cst_46 : f32 to vector<8x128xf32>
    %249 = arith.addf %248, %247 : vector<8x128xf32>
    %250 = arith.divf %248, %249 : vector<8x128xf32>
    %251 = vector.extract_strided_slice %238 {offsets = [0, 256], sizes = [8, 128], strides = [1, 1]} : vector<8x512xf32> to vector<8x128xf32>
    %252 = math.tanh %251 : vector<8x128xf32>
    %253 = vector.extract_strided_slice %238 {offsets = [0, 384], sizes = [8, 128], strides = [1, 1]} : vector<8x512xf32> to vector<8x128xf32>
    %254 = arith.negf %253 : vector<8x128xf32>
    %255 = math.exp %254 : vector<8x128xf32>
    %cst_47 = arith.constant 1.000000e+00 : f32
    %256 = vector.broadcast %cst_47 : f32 to vector<8x128xf32>
    %257 = arith.addf %256, %255 : vector<8x128xf32>
    %258 = arith.divf %256, %257 : vector<8x128xf32>
    %259 = arith.mulf %250, %205 : vector<8x128xf32>
    %260 = arith.mulf %244, %252 : vector<8x128xf32>
    %261 = arith.addf %259, %260 : vector<8x128xf32>
    %262 = math.tanh %261 : vector<8x128xf32>
    %263 = arith.mulf %258, %262 : vector<8x128xf32>
    %264 = tpu.concatenate %263, %235 in 1 : vector<8x128xf32>, vector<8x128xf32> -> vector<8x256xf32>
    %cst_48 = arith.constant dense<0.000000e+00> : vector<8x512xf32>
    %265 = tpu.matmul %264, %7, %cst_48 {dimension_numbers = #tpu.dot_dimension_numbers<[1], [0], [0], [1], [0, 0, 1, 1], [], []>} : vector<8x256xf32>, vector<256x512xf32>, vector<8x512xf32> -> vector<8x512xf32>
    %266 = arith.addf %265, %10 : vector<8x512xf32>
    %267 = vector.extract_strided_slice %266 {offsets = [0, 0], sizes = [8, 128], strides = [1, 1]} : vector<8x512xf32> to vector<8x128xf32>
    %268 = arith.negf %267 : vector<8x128xf32>
    %269 = math.exp %268 : vector<8x128xf32>
    %cst_49 = arith.constant 1.000000e+00 : f32
    %270 = vector.broadcast %cst_49 : f32 to vector<8x128xf32>
    %271 = arith.addf %270, %269 : vector<8x128xf32>
    %272 = arith.divf %270, %271 : vector<8x128xf32>
    %273 = vector.extract_strided_slice %266 {offsets = [0, 128], sizes = [8, 128], strides = [1, 1]} : vector<8x512xf32> to vector<8x128xf32>
    %274 = arith.negf %273 : vector<8x128xf32>
    %275 = math.exp %274 : vector<8x128xf32>
    %cst_50 = arith.constant 1.000000e+00 : f32
    %276 = vector.broadcast %cst_50 : f32 to vector<8x128xf32>
    %277 = arith.addf %276, %275 : vector<8x128xf32>
    %278 = arith.divf %276, %277 : vector<8x128xf32>
    %279 = vector.extract_strided_slice %266 {offsets = [0, 256], sizes = [8, 128], strides = [1, 1]} : vector<8x512xf32> to vector<8x128xf32>
    %280 = math.tanh %279 : vector<8x128xf32>
    %281 = vector.extract_strided_slice %266 {offsets = [0, 384], sizes = [8, 128], strides = [1, 1]} : vector<8x512xf32> to vector<8x128xf32>
    %282 = arith.negf %281 : vector<8x128xf32>
    %283 = math.exp %282 : vector<8x128xf32>
    %cst_51 = arith.constant 1.000000e+00 : f32
    %284 = vector.broadcast %cst_51 : f32 to vector<8x128xf32>
    %285 = arith.addf %284, %283 : vector<8x128xf32>
    %286 = arith.divf %284, %285 : vector<8x128xf32>
    %287 = arith.mulf %278, %233 : vector<8x128xf32>
    %288 = arith.mulf %272, %280 : vector<8x128xf32>
    %289 = arith.addf %287, %288 : vector<8x128xf32>
    %290 = math.tanh %289 : vector<8x128xf32>
    %291 = arith.mulf %286, %290 : vector<8x128xf32>
    %292 = vector.extract_strided_slice %5 {offsets = [40, 0], sizes = [8, 512], strides = [1, 1]} : vector<64x512xf32> to vector<8x512xf32>
    %cst_52 = arith.constant dense<0.000000e+00> : vector<8x512xf32>
    %293 = tpu.matmul %263, %6, %cst_52 {dimension_numbers = #tpu.dot_dimension_numbers<[1], [0], [0], [1], [0, 0, 1, 1], [], []>} : vector<8x128xf32>, vector<128x512xf32>, vector<8x512xf32> -> vector<8x512xf32>
    %294 = arith.addf %292, %293 : vector<8x512xf32>
    %295 = vector.extract_strided_slice %294 {offsets = [0, 0], sizes = [8, 128], strides = [1, 1]} : vector<8x512xf32> to vector<8x128xf32>
    %296 = arith.negf %295 : vector<8x128xf32>
    %297 = math.exp %296 : vector<8x128xf32>
    %cst_53 = arith.constant 1.000000e+00 : f32
    %298 = vector.broadcast %cst_53 : f32 to vector<8x128xf32>
    %299 = arith.addf %298, %297 : vector<8x128xf32>
    %300 = arith.divf %298, %299 : vector<8x128xf32>
    %301 = vector.extract_strided_slice %294 {offsets = [0, 128], sizes = [8, 128], strides = [1, 1]} : vector<8x512xf32> to vector<8x128xf32>
    %302 = arith.negf %301 : vector<8x128xf32>
    %303 = math.exp %302 : vector<8x128xf32>
    %cst_54 = arith.constant 1.000000e+00 : f32
    %304 = vector.broadcast %cst_54 : f32 to vector<8x128xf32>
    %305 = arith.addf %304, %303 : vector<8x128xf32>
    %306 = arith.divf %304, %305 : vector<8x128xf32>
    %307 = vector.extract_strided_slice %294 {offsets = [0, 256], sizes = [8, 128], strides = [1, 1]} : vector<8x512xf32> to vector<8x128xf32>
    %308 = math.tanh %307 : vector<8x128xf32>
    %309 = vector.extract_strided_slice %294 {offsets = [0, 384], sizes = [8, 128], strides = [1, 1]} : vector<8x512xf32> to vector<8x128xf32>
    %310 = arith.negf %309 : vector<8x128xf32>
    %311 = math.exp %310 : vector<8x128xf32>
    %cst_55 = arith.constant 1.000000e+00 : f32
    %312 = vector.broadcast %cst_55 : f32 to vector<8x128xf32>
    %313 = arith.addf %312, %311 : vector<8x128xf32>
    %314 = arith.divf %312, %313 : vector<8x128xf32>
    %315 = arith.mulf %306, %261 : vector<8x128xf32>
    %316 = arith.mulf %300, %308 : vector<8x128xf32>
    %317 = arith.addf %315, %316 : vector<8x128xf32>
    %318 = math.tanh %317 : vector<8x128xf32>
    %319 = arith.mulf %314, %318 : vector<8x128xf32>
    %320 = tpu.concatenate %319, %291 in 1 : vector<8x128xf32>, vector<8x128xf32> -> vector<8x256xf32>
    %cst_56 = arith.constant dense<0.000000e+00> : vector<8x512xf32>
    %321 = tpu.matmul %320, %7, %cst_56 {dimension_numbers = #tpu.dot_dimension_numbers<[1], [0], [0], [1], [0, 0, 1, 1], [], []>} : vector<8x256xf32>, vector<256x512xf32>, vector<8x512xf32> -> vector<8x512xf32>
    %322 = arith.addf %321, %10 : vector<8x512xf32>
    %323 = vector.extract_strided_slice %322 {offsets = [0, 0], sizes = [8, 128], strides = [1, 1]} : vector<8x512xf32> to vector<8x128xf32>
    %324 = arith.negf %323 : vector<8x128xf32>
    %325 = math.exp %324 : vector<8x128xf32>
    %cst_57 = arith.constant 1.000000e+00 : f32
    %326 = vector.broadcast %cst_57 : f32 to vector<8x128xf32>
    %327 = arith.addf %326, %325 : vector<8x128xf32>
    %328 = arith.divf %326, %327 : vector<8x128xf32>
    %329 = vector.extract_strided_slice %322 {offsets = [0, 128], sizes = [8, 128], strides = [1, 1]} : vector<8x512xf32> to vector<8x128xf32>
    %330 = arith.negf %329 : vector<8x128xf32>
    %331 = math.exp %330 : vector<8x128xf32>
    %cst_58 = arith.constant 1.000000e+00 : f32
    %332 = vector.broadcast %cst_58 : f32 to vector<8x128xf32>
    %333 = arith.addf %332, %331 : vector<8x128xf32>
    %334 = arith.divf %332, %333 : vector<8x128xf32>
    %335 = vector.extract_strided_slice %322 {offsets = [0, 256], sizes = [8, 128], strides = [1, 1]} : vector<8x512xf32> to vector<8x128xf32>
    %336 = math.tanh %335 : vector<8x128xf32>
    %337 = vector.extract_strided_slice %322 {offsets = [0, 384], sizes = [8, 128], strides = [1, 1]} : vector<8x512xf32> to vector<8x128xf32>
    %338 = arith.negf %337 : vector<8x128xf32>
    %339 = math.exp %338 : vector<8x128xf32>
    %cst_59 = arith.constant 1.000000e+00 : f32
    %340 = vector.broadcast %cst_59 : f32 to vector<8x128xf32>
    %341 = arith.addf %340, %339 : vector<8x128xf32>
    %342 = arith.divf %340, %341 : vector<8x128xf32>
    %343 = arith.mulf %334, %289 : vector<8x128xf32>
    %344 = arith.mulf %328, %336 : vector<8x128xf32>
    %345 = arith.addf %343, %344 : vector<8x128xf32>
    %346 = math.tanh %345 : vector<8x128xf32>
    %347 = arith.mulf %342, %346 : vector<8x128xf32>
    %348 = vector.extract_strided_slice %5 {offsets = [48, 0], sizes = [8, 512], strides = [1, 1]} : vector<64x512xf32> to vector<8x512xf32>
    %cst_60 = arith.constant dense<0.000000e+00> : vector<8x512xf32>
    %349 = tpu.matmul %319, %6, %cst_60 {dimension_numbers = #tpu.dot_dimension_numbers<[1], [0], [0], [1], [0, 0, 1, 1], [], []>} : vector<8x128xf32>, vector<128x512xf32>, vector<8x512xf32> -> vector<8x512xf32>
    %350 = arith.addf %348, %349 : vector<8x512xf32>
    %351 = vector.extract_strided_slice %350 {offsets = [0, 0], sizes = [8, 128], strides = [1, 1]} : vector<8x512xf32> to vector<8x128xf32>
    %352 = arith.negf %351 : vector<8x128xf32>
    %353 = math.exp %352 : vector<8x128xf32>
    %cst_61 = arith.constant 1.000000e+00 : f32
    %354 = vector.broadcast %cst_61 : f32 to vector<8x128xf32>
    %355 = arith.addf %354, %353 : vector<8x128xf32>
    %356 = arith.divf %354, %355 : vector<8x128xf32>
    %357 = vector.extract_strided_slice %350 {offsets = [0, 128], sizes = [8, 128], strides = [1, 1]} : vector<8x512xf32> to vector<8x128xf32>
    %358 = arith.negf %357 : vector<8x128xf32>
    %359 = math.exp %358 : vector<8x128xf32>
    %cst_62 = arith.constant 1.000000e+00 : f32
    %360 = vector.broadcast %cst_62 : f32 to vector<8x128xf32>
    %361 = arith.addf %360, %359 : vector<8x128xf32>
    %362 = arith.divf %360, %361 : vector<8x128xf32>
    %363 = vector.extract_strided_slice %350 {offsets = [0, 256], sizes = [8, 128], strides = [1, 1]} : vector<8x512xf32> to vector<8x128xf32>
    %364 = math.tanh %363 : vector<8x128xf32>
    %365 = vector.extract_strided_slice %350 {offsets = [0, 384], sizes = [8, 128], strides = [1, 1]} : vector<8x512xf32> to vector<8x128xf32>
    %366 = arith.negf %365 : vector<8x128xf32>
    %367 = math.exp %366 : vector<8x128xf32>
    %cst_63 = arith.constant 1.000000e+00 : f32
    %368 = vector.broadcast %cst_63 : f32 to vector<8x128xf32>
    %369 = arith.addf %368, %367 : vector<8x128xf32>
    %370 = arith.divf %368, %369 : vector<8x128xf32>
    %371 = arith.mulf %362, %317 : vector<8x128xf32>
    %372 = arith.mulf %356, %364 : vector<8x128xf32>
    %373 = arith.addf %371, %372 : vector<8x128xf32>
    %374 = math.tanh %373 : vector<8x128xf32>
    %375 = arith.mulf %370, %374 : vector<8x128xf32>
    %376 = tpu.concatenate %375, %347 in 1 : vector<8x128xf32>, vector<8x128xf32> -> vector<8x256xf32>
    %cst_64 = arith.constant dense<0.000000e+00> : vector<8x512xf32>
    %377 = tpu.matmul %376, %7, %cst_64 {dimension_numbers = #tpu.dot_dimension_numbers<[1], [0], [0], [1], [0, 0, 1, 1], [], []>} : vector<8x256xf32>, vector<256x512xf32>, vector<8x512xf32> -> vector<8x512xf32>
    %378 = arith.addf %377, %10 : vector<8x512xf32>
    %379 = vector.extract_strided_slice %378 {offsets = [0, 0], sizes = [8, 128], strides = [1, 1]} : vector<8x512xf32> to vector<8x128xf32>
    %380 = arith.negf %379 : vector<8x128xf32>
    %381 = math.exp %380 : vector<8x128xf32>
    %cst_65 = arith.constant 1.000000e+00 : f32
    %382 = vector.broadcast %cst_65 : f32 to vector<8x128xf32>
    %383 = arith.addf %382, %381 : vector<8x128xf32>
    %384 = arith.divf %382, %383 : vector<8x128xf32>
    %385 = vector.extract_strided_slice %378 {offsets = [0, 128], sizes = [8, 128], strides = [1, 1]} : vector<8x512xf32> to vector<8x128xf32>
    %386 = arith.negf %385 : vector<8x128xf32>
    %387 = math.exp %386 : vector<8x128xf32>
    %cst_66 = arith.constant 1.000000e+00 : f32
    %388 = vector.broadcast %cst_66 : f32 to vector<8x128xf32>
    %389 = arith.addf %388, %387 : vector<8x128xf32>
    %390 = arith.divf %388, %389 : vector<8x128xf32>
    %391 = vector.extract_strided_slice %378 {offsets = [0, 256], sizes = [8, 128], strides = [1, 1]} : vector<8x512xf32> to vector<8x128xf32>
    %392 = math.tanh %391 : vector<8x128xf32>
    %393 = vector.extract_strided_slice %378 {offsets = [0, 384], sizes = [8, 128], strides = [1, 1]} : vector<8x512xf32> to vector<8x128xf32>
    %394 = arith.negf %393 : vector<8x128xf32>
    %395 = math.exp %394 : vector<8x128xf32>
    %cst_67 = arith.constant 1.000000e+00 : f32
    %396 = vector.broadcast %cst_67 : f32 to vector<8x128xf32>
    %397 = arith.addf %396, %395 : vector<8x128xf32>
    %398 = arith.divf %396, %397 : vector<8x128xf32>
    %399 = arith.mulf %390, %345 : vector<8x128xf32>
    %400 = arith.mulf %384, %392 : vector<8x128xf32>
    %401 = arith.addf %399, %400 : vector<8x128xf32>
    %402 = math.tanh %401 : vector<8x128xf32>
    %403 = arith.mulf %398, %402 : vector<8x128xf32>
    %404 = vector.extract_strided_slice %5 {offsets = [56, 0], sizes = [8, 512], strides = [1, 1]} : vector<64x512xf32> to vector<8x512xf32>
    %cst_68 = arith.constant dense<0.000000e+00> : vector<8x512xf32>
    %405 = tpu.matmul %375, %6, %cst_68 {dimension_numbers = #tpu.dot_dimension_numbers<[1], [0], [0], [1], [0, 0, 1, 1], [], []>} : vector<8x128xf32>, vector<128x512xf32>, vector<8x512xf32> -> vector<8x512xf32>
    %406 = arith.addf %404, %405 : vector<8x512xf32>
    %407 = vector.extract_strided_slice %406 {offsets = [0, 0], sizes = [8, 128], strides = [1, 1]} : vector<8x512xf32> to vector<8x128xf32>
    %408 = arith.negf %407 : vector<8x128xf32>
    %409 = math.exp %408 : vector<8x128xf32>
    %cst_69 = arith.constant 1.000000e+00 : f32
    %410 = vector.broadcast %cst_69 : f32 to vector<8x128xf32>
    %411 = arith.addf %410, %409 : vector<8x128xf32>
    %412 = arith.divf %410, %411 : vector<8x128xf32>
    %413 = vector.extract_strided_slice %406 {offsets = [0, 128], sizes = [8, 128], strides = [1, 1]} : vector<8x512xf32> to vector<8x128xf32>
    %414 = arith.negf %413 : vector<8x128xf32>
    %415 = math.exp %414 : vector<8x128xf32>
    %cst_70 = arith.constant 1.000000e+00 : f32
    %416 = vector.broadcast %cst_70 : f32 to vector<8x128xf32>
    %417 = arith.addf %416, %415 : vector<8x128xf32>
    %418 = arith.divf %416, %417 : vector<8x128xf32>
    %419 = vector.extract_strided_slice %406 {offsets = [0, 256], sizes = [8, 128], strides = [1, 1]} : vector<8x512xf32> to vector<8x128xf32>
    %420 = math.tanh %419 : vector<8x128xf32>
    %421 = vector.extract_strided_slice %406 {offsets = [0, 384], sizes = [8, 128], strides = [1, 1]} : vector<8x512xf32> to vector<8x128xf32>
    %422 = arith.negf %421 : vector<8x128xf32>
    %423 = math.exp %422 : vector<8x128xf32>
    %cst_71 = arith.constant 1.000000e+00 : f32
    %424 = vector.broadcast %cst_71 : f32 to vector<8x128xf32>
    %425 = arith.addf %424, %423 : vector<8x128xf32>
    %426 = arith.divf %424, %425 : vector<8x128xf32>
    %427 = arith.mulf %418, %373 : vector<8x128xf32>
    %428 = arith.mulf %412, %420 : vector<8x128xf32>
    %429 = arith.addf %427, %428 : vector<8x128xf32>
    %430 = math.tanh %429 : vector<8x128xf32>
    %431 = arith.mulf %426, %430 : vector<8x128xf32>
    %432 = tpu.concatenate %431, %403 in 1 : vector<8x128xf32>, vector<8x128xf32> -> vector<8x256xf32>
    %cst_72 = arith.constant dense<0.000000e+00> : vector<8x512xf32>
    %433 = tpu.matmul %432, %7, %cst_72 {dimension_numbers = #tpu.dot_dimension_numbers<[1], [0], [0], [1], [0, 0, 1, 1], [], []>} : vector<8x256xf32>, vector<256x512xf32>, vector<8x512xf32> -> vector<8x512xf32>
    %434 = arith.addf %433, %10 : vector<8x512xf32>
    %435 = vector.extract_strided_slice %434 {offsets = [0, 0], sizes = [8, 128], strides = [1, 1]} : vector<8x512xf32> to vector<8x128xf32>
    %436 = arith.negf %435 : vector<8x128xf32>
    %437 = math.exp %436 : vector<8x128xf32>
    %cst_73 = arith.constant 1.000000e+00 : f32
    %438 = vector.broadcast %cst_73 : f32 to vector<8x128xf32>
    %439 = arith.addf %438, %437 : vector<8x128xf32>
    %440 = arith.divf %438, %439 : vector<8x128xf32>
    %441 = vector.extract_strided_slice %434 {offsets = [0, 128], sizes = [8, 128], strides = [1, 1]} : vector<8x512xf32> to vector<8x128xf32>
    %442 = arith.negf %441 : vector<8x128xf32>
    %443 = math.exp %442 : vector<8x128xf32>
    %cst_74 = arith.constant 1.000000e+00 : f32
    %444 = vector.broadcast %cst_74 : f32 to vector<8x128xf32>
    %445 = arith.addf %444, %443 : vector<8x128xf32>
    %446 = arith.divf %444, %445 : vector<8x128xf32>
    %447 = vector.extract_strided_slice %434 {offsets = [0, 256], sizes = [8, 128], strides = [1, 1]} : vector<8x512xf32> to vector<8x128xf32>
    %448 = math.tanh %447 : vector<8x128xf32>
    %449 = vector.extract_strided_slice %434 {offsets = [0, 384], sizes = [8, 128], strides = [1, 1]} : vector<8x512xf32> to vector<8x128xf32>
    %450 = arith.negf %449 : vector<8x128xf32>
    %451 = math.exp %450 : vector<8x128xf32>
    %cst_75 = arith.constant 1.000000e+00 : f32
    %452 = vector.broadcast %cst_75 : f32 to vector<8x128xf32>
    %453 = arith.addf %452, %451 : vector<8x128xf32>
    %454 = arith.divf %452, %453 : vector<8x128xf32>
    %455 = arith.mulf %446, %401 : vector<8x128xf32>
    %456 = arith.mulf %440, %448 : vector<8x128xf32>
    %457 = arith.addf %455, %456 : vector<8x128xf32>
    %458 = math.tanh %457 : vector<8x128xf32>
    %459 = arith.mulf %454, %458 : vector<8x128xf32>
    %c0_76 = arith.constant 0 : index
    %c0_77 = arith.constant 0 : index
    %460 = vector.load %arg6[%c0_76, %c0_77] : memref<128x10xf32, #tpu.memory_space<vmem>>, vector<128x10xf32>
    %cst_78 = arith.constant dense<0.000000e+00> : vector<8x10xf32>
    %461 = tpu.matmul %459, %460, %cst_78 {dimension_numbers = #tpu.dot_dimension_numbers<[1], [0], [0], [1], [0, 0, 1, 1], [], []>} : vector<8x128xf32>, vector<128x10xf32>, vector<8x10xf32> -> vector<8x10xf32>
    %c0_79 = arith.constant 0 : index
    %c0_80 = arith.constant 0 : index
    %462 = vector.load %arg7[%c0_79, %c0_80] : memref<1x10xf32, #tpu.memory_space<vmem>>, vector<1x10xf32>
    %463 = vector.broadcast %462 : vector<1x10xf32> to vector<8x10xf32>
    %464 = arith.addf %461, %463 : vector<8x10xf32>
    %c0_81 = arith.constant 0 : index
    %c0_82 = arith.constant 0 : index
    %465 = vector.load %arg8[%c0_81, %c0_82] : memref<8x10xf32, #tpu.memory_space<vmem>>, vector<8x10xf32>
    tpu.vector_store %arg8[%c0_81, %c0_82], %464 {strides = array<i32>} : memref<8x10xf32, #tpu.memory_space<vmem>>, vector<8x10xf32>,
    return
  }
}

</mosaic_0001>

<llo_original>
// kernel: tpu_custom_call.1
$region0: #{tpu_custom_call.1}
  #allocation0 [shape = 'u32[]', space=smem, size = 0x4, offset = 0x4, fixed_abs, tag = 'smem constant byte address 0x4 - core index']
  #allocation1 [shape = 'u32[144,128]{1,0:T(1,128)}', space=vmem, size = 0x12000, scoped, tag = 'internal scratch']
  %s0 = inlined_call_operand.vmem [shape: f32[64,28], index: 0, kind: input, shape index: {}]
  %s1 = inlined_call_operand.vmem [shape: f32[28,512], index: 1, kind: input, shape index: {}]
  %s2 = inlined_call_operand.hbm [shape: f32[128,512], index: 2, kind: input, shape index: {}]
  %s3 = inlined_call_operand.vmem [shape: f32[1,512], index: 3, kind: input, shape index: {}]
  %s4 = inlined_call_operand.hbm [shape: f32[256,512], index: 4, kind: input, shape index: {}]
  %s5 = inlined_call_operand.vmem [shape: f32[1,512], index: 5, kind: input, shape index: {}]
  %s6 = inlined_call_operand.vmem [shape: f32[128,10], index: 6, kind: input, shape index: {}]
  %s7 = inlined_call_operand.vmem [shape: f32[1,10], index: 7, kind: input, shape index: {}]
  %s8 = inlined_call_operand.hbm [shape: f32[8,10], index: 8, kind: output, shape index: {}]
  %s9 = sld [smem:[#allocation0]]
  $region50: #{tpu_custom_call.1} parent=0
    _
  %s11 = ssub.s32 1, %s9
  %s12 = scalar_select 0, %s11, %s9
  $region1: #{tpu_custom_call.1} parent=0
    #allocation2 [shape = 'u8[262144]{0}', space=vmem, size = 0x40000, scoped, tag = 'input window, operand 2, single buffered']
    #allocation3 [shape = 's32[1]{0}', space=sflag, size = 0x4, scoped, tag = 'scoped memory for tpu_custom_call.1']
    #allocation4 [shape = 's32[1]{0}', space=sflag, size = 0x4, scoped, tag = 'scoped memory for tpu_custom_call.1']
    #allocation5 [shape = 'u8[524288]{0}', space=vmem, size = 0x80000, scoped, tag = 'input window, operand 4, single buffered']
    #allocation6 [shape = 's32[1]{0}', space=sflag, size = 0x4, scoped, tag = 'scoped memory for tpu_custom_call.1']
    #allocation7 [shape = 'u8[4096]{0}', space=vmem, size = 0x1000, scoped, tag = 'output window, operand 0, single buffered']
    %13 = vsyncpa [#allocation3], 0
    %14 = vsyncpa [#allocation6], 0
    %15 = vsyncpa [#allocation4], 0
    // Predicated region
    $region2: #{tpu_custom_call.1} parent=1 // pred_check
      _
    $region3: #{tpu_custom_call.1} parent=1 // pred_check_branch
      %17 = sbr.rel (0) target = $region5
    $region4: #{tpu_custom_call.1} parent=1 // pred_region
      _
    $region5: #{tpu_custom_call.1} parent=1 // pred_fallthru
      _
    // Predicated region
    $region6: #{tpu_custom_call.1} parent=1 // pred_check
      _
    $region7: #{tpu_custom_call.1} parent=1 // pred_check_branch
      %19 = sbr.rel (0) target = $region9
    $region8: #{tpu_custom_call.1} parent=1 // pred_region
      _
    $region9: #{tpu_custom_call.1} parent=1 // pred_fallthru
      _
    // Predicated region
    $region10: #{tpu_custom_call.1} parent=1 // pred_check
      _
    $region11: #{tpu_custom_call.1} parent=1 // pred_check_branch
      %21 = sbr.rel (0) target = $region13
    $region12: #{tpu_custom_call.1} parent=1 // pred_region
      %s23 = ssub.s32 8192, 8192
      %24 = vsyncadd [#allocation3], %s23
      %s25 = sshll.u32 [#allocation2], 4
      %s26 = int_to_ptr.vmem [resolvable:$true] %s25
      %31 = dma.hbm_to_vmem [thread:$0]  %s2, 8192, %s26, [#allocation3], 512, 512, 32
    $region13: #{tpu_custom_call.1} parent=1 // pred_fallthru
      _
    // Predicated region
    $region14: #{tpu_custom_call.1} parent=1 // pred_check
      _
    $region15: #{tpu_custom_call.1} parent=1 // pred_check_branch
      %33 = sbr.rel (0) target = $region17
    $region16: #{tpu_custom_call.1} parent=1 // pred_region
      _
    $region17: #{tpu_custom_call.1} parent=1 // pred_fallthru
      _
    // Predicated region
    $region18: #{tpu_custom_call.1} parent=1 // pred_check
      _
    $region19: #{tpu_custom_call.1} parent=1 // pred_check_branch
      %35 = sbr.rel (0) target = $region21
    $region20: #{tpu_custom_call.1} parent=1 // pred_region
      %s37 = ssub.s32 16384, 16384
      %38 = vsyncadd [#allocation6], %s37
      %s39 = sshll.u32 [#allocation5], 4
      %s40 = int_to_ptr.vmem [resolvable:$true] %s39
      %45 = dma.hbm_to_vmem [thread:$0]  %s4, 16384, %s40, [#allocation6], 512, 512, 32
    $region21: #{tpu_custom_call.1} parent=1 // pred_fallthru
      _
    // Predicated region
    $region22: #{tpu_custom_call.1} parent=1 // pred_check
      _
    $region23: #{tpu_custom_call.1} parent=1 // pred_check_branch
      %47 = sbr.rel (0) target = $region25
    $region24: #{tpu_custom_call.1} parent=1 // pred_region
      _
    $region25: #{tpu_custom_call.1} parent=1 // pred_fallthru
      _
    // Predicated region
    $region26: #{tpu_custom_call.1} parent=1 // pred_check
      _
    $region27: #{tpu_custom_call.1} parent=1 // pred_check_branch
      %49 = sbr.rel (0) target = $region29
    $region28: #{tpu_custom_call.1} parent=1 // pred_region
      _
    $region29: #{tpu_custom_call.1} parent=1 // pred_fallthru
      _
    // Predicated region
    $region30: #{tpu_custom_call.1} parent=1 // pred_check
      _
    $region31: #{tpu_custom_call.1} parent=1 // pred_check_branch
      %51 = sbr.rel (0) target = $region33
    $region32: #{tpu_custom_call.1} parent=1 // pred_region
      _
    $region33: #{tpu_custom_call.1} parent=1 // pred_fallthru
      _
    // Predicated region
    $region34: #{tpu_custom_call.1} parent=1 // pred_check
      _
    $region35: #{tpu_custom_call.1} parent=1 // pred_check_branch
      %53 = sbr.rel (0) target = $region37
    $region36: #{tpu_custom_call.1} parent=1 // pred_region
      %54 = dma.done [#allocation3], 8192
    $region37: #{tpu_custom_call.1} parent=1 // pred_fallthru
      _
    // Predicated region
    $region38: #{tpu_custom_call.1} parent=1 // pred_check
      _
    $region39: #{tpu_custom_call.1} parent=1 // pred_check_branch
      %56 = sbr.rel (0) target = $region41
    $region40: #{tpu_custom_call.1} parent=1 // pred_region
      %57 = dma.done [#allocation6], 16384
    $region41: #{tpu_custom_call.1} parent=1 // pred_fallthru
      _
    %v58 = vld [vmem:[%s0] sm:$0xff]
    %v59 = vld [vmem:[%s0 + $0x8] sm:$0xff]
    %v60 = vld [vmem:[%s0 + $0x10] sm:$0xff]
    %v61 = vld [vmem:[%s0 + $0x18] sm:$0xff]
    %v62 = vld [vmem:[%s0 + $0x20] sm:$0xff]
    %v63 = vld [vmem:[%s0 + $0x28] sm:$0xff]
    %v64 = vld [vmem:[%s0 + $0x30] sm:$0xff]
    %v65 = vld [vmem:[%s0 + $0x38] sm:$0xff]
    %v66 = vld [vmem:[%s1] sm:$0xff]
    %v67 = vld [vmem:[%s1 + $0x8] sm:$0xff]
    %v68 = vld [vmem:[%s1 + $0x10] sm:$0xff]
    %v69 = vld [vmem:[%s1 + $0x18] sm:$0xff]
    %v70 = vld [vmem:[%s1 + $0x20] sm:$0xff]
    %v71 = vld [vmem:[%s1 + $0x28] sm:$0xff]
    %v72 = vld [vmem:[%s1 + $0x30] sm:$0xff]
    %v73 = vld [vmem:[%s1 + $0x38] sm:$0xff]
    %v74 = vld [vmem:[%s1 + $0x40] sm:$0xff]
    %v75 = vld [vmem:[%s1 + $0x48] sm:$0xff]
    %v76 = vld [vmem:[%s1 + $0x50] sm:$0xff]
    %v77 = vld [vmem:[%s1 + $0x58] sm:$0xff]
    %v78 = vld [vmem:[%s1 + $0x60] sm:$0xf]
    %v79 = vld [vmem:[%s1 + $0x68] sm:$0xf]
    %v80 = vld [vmem:[%s1 + $0x70] sm:$0xf]
    %v81 = vld [vmem:[%s1 + $0x78] sm:$0xf]
    %v82 = vld [vmem:[%s3] sm:$0xf]
    %v84 = vlaneseq
    %v85 = vshrl.u32 %v84, 7
    %v86 = vsub.s32 0, %v85
    %v87 = vrot.slane %v82, %v86
    %v88 = vlaneseq
    %v89 = vshrl.u32 %v88, 7
    %v90 = vsub.s32 1, %v89
    %v91 = vrot.slane %v82, %v90
    %v92 = vlaneseq
    %v93 = vshrl.u32 %v92, 7
    %v94 = vsub.s32 2, %v93
    %v95 = vrot.slane %v82, %v94
    %v96 = vlaneseq
    %v97 = vshrl.u32 %v96, 7
    %v98 = vsub.s32 3, %v97
    %v99 = vrot.slane %v82, %v98
    %vm104 = vcmask 228352
    %v106 = vsel %vm104, %v58, 0
    %v109 = vsel %vm104, %v59, 0
    %v112 = vsel %vm104, %v60, 0
    %v115 = vsel %vm104, %v61, 0
    %v118 = vsel %vm104, %v62, 0
    %v121 = vsel %vm104, %v63, 0
    %v124 = vsel %vm104, %v64, 0
    %v127 = vsel %vm104, %v65, 0
    %vm129 = vcmask 1043456
    %v131 = vsel %vm129, %v78, 0
    %v134 = vsel %vm129, %v79, 0
    %v137 = vsel %vm129, %v80, 0
    %v140 = vsel %vm129, %v81, 0
    %142 = vmatprep.subr.mxu0 %v67
    %143 = vmatpush1.msra.mxu0 %v66
    %144 = vmatprep.subr.mxu0 %v71
    %145 = vmatpush1.msra.mxu0 %v70
    %146 = vmatprep.subr.mxu0 %v75
    %147 = vmatpush1.msra.mxu0 %v74
    %148 = vmatprep.subr.mxu0 %v134
    %149 = vmatpush1.msra.mxu0 %v131
    %150 = vmatprep.subr.mxu0 0.0
    %151 = vmatpush1.msra.mxu0 0.0
    %152 = vmatprep.subr.mxu0 0.0
    %153 = vmatpush1.msra.mxu0 0.0
    %154 = vmatprep.subr.mxu0 0.0
    %155 = vmatpush1.msra.mxu0 0.0
    %156 = vmatprep.subr.mxu0 0.0
    %157 = vmatpush1.msra.mxu0 0.0
    %158 = vmatprep.subr.mxu0 0.0
    %159 = vmatpush1.msra.mxu0 0.0
    %160 = vmatprep.subr.mxu0 0.0
    %161 = vmatpush1.msra.mxu0 0.0
    %162 = vmatprep.subr.mxu0 0.0
    %163 = vmatpush1.msra.mxu0 0.0
    %164 = vmatprep.subr.mxu0 0.0
    %165 = vmatpush1.msra.mxu0 0.0
    %166 = vmatprep.subr.mxu0 0.0
    %167 = vmatpush1.msra.mxu0 0.0
    %168 = vmatprep.subr.mxu0 0.0
    %169 = vmatpush1.msra.mxu0 0.0
    %170 = vmatprep.subr.mxu0 0.0
    %171 = vmatpush1.msra.mxu0 0.0
    %172 = vmatprep.subr.mxu0 0.0
    %173 = vmatpush1.msra.mxu0 0.0
    %174 = vmatprep.subr.mxu0 0.0
    %175 = vmatpush1.msra.mxu0 0.0
    %176 = vmatprep.subr.mxu0 0.0
    %177 = vmatpush1.msra.mxu0 0.0
    %178 = vmatprep.subr.mxu0 0.0
    %179 = vmatpush1.msra.mxu0 0.0
    %180 = vmatprep.subr.mxu0 0.0
    %181 = vmatpush1.msra.mxu0 0.0
    %182 = vmatprep.subr.mxu0 0.0
    %183 = vmatpush1.msra.mxu0 0.0
    %184 = vmatprep.subr.mxu0 0.0
    %185 = vmatpush1.msra.mxu0 0.0
    %186 = vmatprep.subr.mxu0 0.0
    %187 = vmatpush1.msra.mxu0 0.0
    %188 = vmatprep.subr.mxu0 0.0
    %189 = vmatpush1.msra.mxu0 0.0
    %190 = vmatprep.subr.mxu0 0.0
    %191 = vmatpush1.msra.mxu0 0.0
    %192 = vmatprep.subr.mxu0 0.0
    %193 = vmatpush1.msra.mxu0 0.0
    %194 = vmatprep.subr.mxu0 0.0
    %195 = vmatpush1.msra.mxu0 0.0
    %196 = vmatprep.subr.mxu0 0.0
    %197 = vmatpush1.msra.mxu0 0.0
    %198 = vmatprep.subr.mxu0 0.0
    %199 = vmatpush1.msra.mxu0 0.0
    %200 = vmatprep.subr.mxu0 0.0
    %201 = vmatpush1.msra.mxu0 0.0
    %202 = vmatprep.subr.mxu0 0.0
    %203 = vmatpush1.msra.mxu0 0.0
    %204 = vmatprep.subr.mxu0 0.0
    %205 = vmatpush1.msra.mxu0 0.0
    %206 = vmatprep.mubr.f32.mxu0 0.0
    %207 = vmatmul.mubr.f32.gmra.mrb[0].mxu0 %v106
    %v208 = vpop.f32.mrb[0].mxu0
    %v209 = vadd.f32 %v87, %v208
    %v210 = vpop.f32.mrb[0].mxu0
    %v211 = vadd.f32 %v91, %v210
    %212 = vmatprep.mubr.f32.mxu0 0.0
    %213 = vmatmul.mubr.f32.gmra.mrb[0].mxu0 %v109
    %v214 = vpop.f32.mrb[0].mxu0
    %v215 = vadd.f32 %v87, %v214
    %v216 = vpop.f32.mrb[0].mxu0
    %v217 = vadd.f32 %v91, %v216
    %218 = vmatprep.mubr.f32.mxu0 0.0
    %219 = vmatmul.mubr.f32.gmra.mrb[0].mxu0 %v112
    %v220 = vpop.f32.mrb[0].mxu0
    %v221 = vadd.f32 %v87, %v220
    %v222 = vpop.f32.mrb[0].mxu0
    %v223 = vadd.f32 %v91, %v222
    %224 = vmatprep.mubr.f32.mxu0 0.0
    %225 = vmatmul.mubr.f32.gmra.mrb[0].mxu0 %v115
    %v226 = vpop.f32.mrb[0].mxu0
    %v227 = vadd.f32 %v87, %v226
    %v228 = vpop.f32.mrb[0].mxu0
    %v229 = vadd.f32 %v91, %v228
    %230 = vmatprep.mubr.f32.mxu0 0.0
    %231 = vmatmul.mubr.f32.gmra.mrb[0].mxu0 %v118
    %v232 = vpop.f32.mrb[0].mxu0
    %v233 = vadd.f32 %v87, %v232
    %v234 = vpop.f32.mrb[0].mxu0
    %v235 = vadd.f32 %v91, %v234
    %236 = vmatprep.mubr.f32.mxu0 0.0
    %237 = vmatmul.mubr.f32.gmra.mrb[0].mxu0 %v121
    %v238 = vpop.f32.mrb[0].mxu0
    %v239 = vadd.f32 %v87, %v238
    %v240 = vpop.f32.mrb[0].mxu0
    %v241 = vadd.f32 %v91, %v240
    %242 = vmatprep.mubr.f32.mxu0 0.0
    %243 = vmatmul.mubr.f32.gmra.mrb[0].mxu0 %v124
    %v244 = vpop.f32.mrb[0].mxu0
    %v245 = vadd.f32 %v87, %v244
    %v246 = vpop.f32.mrb[0].mxu0
    %v247 = vadd.f32 %v91, %v246
    %248 = vmatprep.mubr.f32.mxu0 0.0
    %249 = vmatmul.mubr.f32.gmra.mrb[0].mxu0 %v127
    %v250 = vpop.f32.mrb[0].mxu0
    %v251 = vadd.f32 %v87, %v250
    %v252 = vpop.f32.mrb[0].mxu0
    %v253 = vadd.f32 %v91, %v252
    %254 = vdwg.mxu0
    %255 = vmatprep.subr.mxu0 %v69
    %256 = vmatpush1.msra.mxu0 %v68
    %257 = vmatprep.subr.mxu0 %v73
    %258 = vmatpush1.msra.mxu0 %v72
    %259 = vmatprep.subr.mxu0 %v77
    %260 = vmatpush1.msra.mxu0 %v76
    %261 = vmatprep.subr.mxu0 %v140
    %262 = vmatpush1.msra.mxu0 %v137
    %263 = vmatprep.subr.mxu0 0.0
    %264 = vmatpush1.msra.mxu0 0.0
    %265 = vmatprep.subr.mxu0 0.0
    %266 = vmatpush1.msra.mxu0 0.0
    %267 = vmatprep.subr.mxu0 0.0
    %268 = vmatpush1.msra.mxu0 0.0
    %269 = vmatprep.subr.mxu0 0.0
    %270 = vmatpush1.msra.mxu0 0.0
    %271 = vmatprep.subr.mxu0 0.0
    %272 = vmatpush1.msra.mxu0 0.0
    %273 = vmatprep.subr.mxu0 0.0
    %274 = vmatpush1.msra.mxu0 0.0
    %275 = vmatprep.subr.mxu0 0.0
    %276 = vmatpush1.msra.mxu0 0.0
    %277 = vmatprep.subr.mxu0 0.0
    %278 = vmatpush1.msra.mxu0 0.0
    %279 = vmatprep.subr.mxu0 0.0
    %280 = vmatpush1.msra.mxu0 0.0
    %281 = vmatprep.subr.mxu0 0.0
    %282 = vmatpush1.msra.mxu0 0.0
    %283 = vmatprep.subr.mxu0 0.0
    %284 = vmatpush1.msra.mxu0 0.0
    %285 = vmatprep.subr.mxu0 0.0
    %286 = vmatpush1.msra.mxu0 0.0
    %287 = vmatprep.subr.mxu0 0.0
    %288 = vmatpush1.msra.mxu0 0.0
    %289 = vmatprep.subr.mxu0 0.0
    %290 = vmatpush1.msra.mxu0 0.0
    %291 = vmatprep.subr.mxu0 0.0
    %292 = vmatpush1.msra.mxu0 0.0
    %293 = vmatprep.subr.mxu0 0.0
    %294 = vmatpush1.msra.mxu0 0.0
    %295 = vmatprep.subr.mxu0 0.0
    %296 = vmatpush1.msra.mxu0 0.0
    %297 = vmatprep.subr.mxu0 0.0
    %298 = vmatpush1.msra.mxu0 0.0
    %299 = vmatprep.subr.mxu0 0.0
    %300 = vmatpush1.msra.mxu0 0.0
    %301 = vmatprep.subr.mxu0 0.0
    %302 = vmatpush1.msra.mxu0 0.0
    %303 = vmatprep.subr.mxu0 0.0
    %304 = vmatpush1.msra.mxu0 0.0
    %305 = vmatprep.subr.mxu0 0.0
    %306 = vmatpush1.msra.mxu0 0.0
    %307 = vmatprep.subr.mxu0 0.0
    %308 = vmatpush1.msra.mxu0 0.0
    %309 = vmatprep.subr.mxu0 0.0
    %310 = vmatpush1.msra.mxu0 0.0
    %311 = vmatprep.subr.mxu0 0.0
    %312 = vmatpush1.msra.mxu0 0.0
    %313 = vmatprep.subr.mxu0 0.0
    %314 = vmatpush1.msra.mxu0 0.0
    %315 = vmatprep.subr.mxu0 0.0
    %316 = vmatpush1.msra.mxu0 0.0
    %317 = vmatprep.subr.mxu0 0.0
    %318 = vmatpush1.msra.mxu0 0.0
    %319 = vmatprep.mubr.f32.mxu0 0.0
    %320 = vmatmul.mubr.f32.gmra.mrb[0].mxu0 %v106
    %v321 = vpop.f32.mrb[0].mxu0
    %v322 = vadd.f32 %v95, %v321
    %v323 = vpop.f32.mrb[0].mxu0
    %v324 = vadd.f32 %v99, %v323
    %325 = vmatprep.mubr.f32.mxu0 0.0
    %326 = vmatmul.mubr.f32.gmra.mrb[0].mxu0 %v109
    %v327 = vpop.f32.mrb[0].mxu0
    %v328 = vadd.f32 %v95, %v327
    %v329 = vpop.f32.mrb[0].mxu0
    %v330 = vadd.f32 %v99, %v329
    %331 = vmatprep.mubr.f32.mxu0 0.0
    %332 = vmatmul.mubr.f32.gmra.mrb[0].mxu0 %v112
    %v333 = vpop.f32.mrb[0].mxu0
    %v334 = vadd.f32 %v95, %v333
    %v335 = vpop.f32.mrb[0].mxu0
    %v336 = vadd.f32 %v99, %v335
    %337 = vmatprep.mubr.f32.mxu0 0.0
    %338 = vmatmul.mubr.f32.gmra.mrb[0].mxu0 %v115
    %v339 = vpop.f32.mrb[0].mxu0
    %v340 = vadd.f32 %v95, %v339
    %v341 = vpop.f32.mrb[0].mxu0
    %v342 = vadd.f32 %v99, %v341
    %343 = vmatprep.mubr.f32.mxu0 0.0
    %344 = vmatmul.mubr.f32.gmra.mrb[0].mxu0 %v118
    %v345 = vpop.f32.mrb[0].mxu0
    %v346 = vadd.f32 %v95, %v345
    %v347 = vpop.f32.mrb[0].mxu0
    %v348 = vadd.f32 %v99, %v347
    %349 = vmatprep.mubr.f32.mxu0 0.0
    %350 = vmatmul.mubr.f32.gmra.mrb[0].mxu0 %v121
    %v351 = vpop.f32.mrb[0].mxu0
    %v352 = vadd.f32 %v95, %v351
    %v353 = vpop.f32.mrb[0].mxu0
    %v354 = vadd.f32 %v99, %v353
    %355 = vmatprep.mubr.f32.mxu0 0.0
    %356 = vmatmul.mubr.f32.gmra.mrb[0].mxu0 %v124
    %v357 = vpop.f32.mrb[0].mxu0
    %v358 = vadd.f32 %v95, %v357
    %v359 = vpop.f32.mrb[0].mxu0
    %v360 = vadd.f32 %v99, %v359
    %361 = vmatprep.mubr.f32.mxu0 0.0
    %362 = vmatmul.mubr.f32.gmra.mrb[0].mxu0 %v127
    %v363 = vpop.f32.mrb[0].mxu0
    %v364 = vadd.f32 %v95, %v363
    %v365 = vpop.f32.mrb[0].mxu0
    %v366 = vadd.f32 %v99, %v365
    %367 = vdwg.mxu0
    %v368 = vld [vmem:[#allocation2] sm:$0xff]
    %v369 = vld [vmem:[#allocation2 + $0x8] sm:$0xff]
    %v370 = vld [vmem:[#allocation2 + $0x10] sm:$0xff]
    %v371 = vld [vmem:[#allocation2 + $0x18] sm:$0xff]
    %v372 = vld [vmem:[#allocation2 + $0x20] sm:$0xff]
    %v373 = vld [vmem:[#allocation2 + $0x28] sm:$0xff]
    %v374 = vld [vmem:[#allocation2 + $0x30] sm:$0xff]
    %v375 = vld [vmem:[#allocation2 + $0x38] sm:$0xff]
    %v376 = vld [vmem:[#allocation2 + $0x40] sm:$0xff]
    %v377 = vld [vmem:[#allocation2 + $0x48] sm:$0xff]
    %v378 = vld [vmem:[#allocation2 + $0x50] sm:$0xff]
    %v379 = vld [vmem:[#allocation2 + $0x58] sm:$0xff]
    %v380 = vld [vmem:[#allocation2 + $0x60] sm:$0xff]
    %v381 = vld [vmem:[#allocation2 + $0x68] sm:$0xff]
    %v382 = vld [vmem:[#allocation2 + $0x70] sm:$0xff]
    %v383 = vld [vmem:[#allocation2 + $0x78] sm:$0xff]
    %v384 = vld [vmem:[#allocation2 + $0x80] sm:$0xff]
    %v385 = vld [vmem:[#allocation2 + $0x88] sm:$0xff]
    %v386 = vld [vmem:[#allocation2 + $0x90] sm:$0xff]
    %v387 = vld [vmem:[#allocation2 + $0x98] sm:$0xff]
    %v388 = vld [vmem:[#allocation2 + $0xa0] sm:$0xff]
    %v389 = vld [vmem:[#allocation2 + $0xa8] sm:$0xff]
    %v390 = vld [vmem:[#allocation2 + $0xb0] sm:$0xff]
    %v391 = vld [vmem:[#allocation2 + $0xb8] sm:$0xff]
    %v392 = vld [vmem:[#allocation2 + $0xc0] sm:$0xff]
    %v393 = vld [vmem:[#allocation2 + $0xc8] sm:$0xff]
    %v394 = vld [vmem:[#allocation2 + $0xd0] sm:$0xff]
    %v395 = vld [vmem:[#allocation2 + $0xd8] sm:$0xff]
    %v396 = vld [vmem:[#allocation2 + $0xe0] sm:$0xff]
    %v397 = vld [vmem:[#allocation2 + $0xe8] sm:$0xff]
    %v398 = vld [vmem:[#allocation2 + $0xf0] sm:$0xff]
    %v399 = vld [vmem:[#allocation2 + $0xf8] sm:$0xff]
    %v400 = vld [vmem:[#allocation2 + $0x100] sm:$0xff]
    %v401 = vld [vmem:[#allocation2 + $0x108] sm:$0xff]
    %v402 = vld [vmem:[#allocation2 + $0x110] sm:$0xff]
    %v403 = vld [vmem:[#allocation2 + $0x118] sm:$0xff]
    %v404 = vld [vmem:[#allocation2 + $0x120] sm:$0xff]
    %v405 = vld [vmem:[#allocation2 + $0x128] sm:$0xff]
    %v406 = vld [vmem:[#allocation2 + $0x130] sm:$0xff]
    %v407 = vld [vmem:[#allocation2 + $0x138] sm:$0xff]
    %v408 = vld [vmem:[#allocation2 + $0x140] sm:$0xff]
    %v409 = vld [vmem:[#allocation2 + $0x148] sm:$0xff]
    %v410 = vld [vmem:[#allocation2 + $0x150] sm:$0xff]
    %v411 = vld [vmem:[#allocation2 + $0x158] sm:$0xff]
    %v412 = vld [vmem:[#allocation2 + $0x160] sm:$0xff]
    %v413 = vld [vmem:[#allocation2 + $0x168] sm:$0xff]
    %v414 = vld [vmem:[#allocation2 + $0x170] sm:$0xff]
    %v415 = vld [vmem:[#allocation2 + $0x178] sm:$0xff]
    %v416 = vld [vmem:[#allocation2 + $0x180] sm:$0xff]
    %v417 = vld [vmem:[#allocation2 + $0x188] sm:$0xff]
    %v418 = vld [vmem:[#allocation2 + $0x190] sm:$0xff]
    %v419 = vld [vmem:[#allocation2 + $0x198] sm:$0xff]
    %v420 = vld [vmem:[#allocation2 + $0x1a0] sm:$0xff]
    %v421 = vld [vmem:[#allocation2 + $0x1a8] sm:$0xff]
    %v422 = vld [vmem:[#allocation2 + $0x1b0] sm:$0xff]
    %v423 = vld [vmem:[#allocation2 + $0x1b8] sm:$0xff]
    %v424 = vld [vmem:[#allocation2 + $0x1c0] sm:$0xff]
    %v425 = vld [vmem:[#allocation2 + $0x1c8] sm:$0xff]
    %v426 = vld [vmem:[#allocation2 + $0x1d0] sm:$0xff]
    %v427 = vld [vmem:[#allocation2 + $0x1d8] sm:$0xff]
    %v428 = vld [vmem:[#allocation2 + $0x1e0] sm:$0xff]
    %v429 = vld [vmem:[#allocation2 + $0x1e8] sm:$0xff]
    %v430 = vld [vmem:[#allocation2 + $0x1f0] sm:$0xff]
    %v431 = vld [vmem:[#allocation2 + $0x1f8] sm:$0xff]
    %v432 = vld [vmem:[#allocation5] sm:$0xff]
    %v433 = vld [vmem:[#allocation5 + $0x8] sm:$0xff]
    %v434 = vld [vmem:[#allocation5 + $0x10] sm:$0xff]
    %v435 = vld [vmem:[#allocation5 + $0x18] sm:$0xff]
    %v436 = vld [vmem:[#allocation5 + $0x20] sm:$0xff]
    %v437 = vld [vmem:[#allocation5 + $0x28] sm:$0xff]
    %v438 = vld [vmem:[#allocation5 + $0x30] sm:$0xff]
    %v439 = vld [vmem:[#allocation5 + $0x38] sm:$0xff]
    %v440 = vld [vmem:[#allocation5 + $0x40] sm:$0xff]
    %v441 = vld [vmem:[#allocation5 + $0x48] sm:$0xff]
    %v442 = vld [vmem:[#allocation5 + $0x50] sm:$0xff]
    %v443 = vld [vmem:[#allocation5 + $0x58] sm:$0xff]
    %v444 = vld [vmem:[#allocation5 + $0x60] sm:$0xff]
    %v445 = vld [vmem:[#allocation5 + $0x68] sm:$0xff]
    %v446 = vld [vmem:[#allocation5 + $0x70] sm:$0xff]
    %v447 = vld [vmem:[#allocation5 + $0x78] sm:$0xff]
    %v448 = vld [vmem:[#allocation5 + $0x80] sm:$0xff]
    %v449 = vld [vmem:[#allocation5 + $0x88] sm:$0xff]
    %v450 = vld [vmem:[#allocation5 + $0x90] sm:$0xff]
    %v451 = vld [vmem:[#allocation5 + $0x98] sm:$0xff]
    %v452 = vld [vmem:[#allocation5 + $0xa0] sm:$0xff]
    %v453 = vld [vmem:[#allocation5 + $0xa8] sm:$0xff]
    %v454 = vld [vmem:[#allocation5 + $0xb0] sm:$0xff]
    %v455 = vld [vmem:[#allocation5 + $0xb8] sm:$0xff]
    %v456 = vld [vmem:[#allocation5 + $0xc0] sm:$0xff]
    %v457 = vld [vmem:[#allocation5 + $0xc8] sm:$0xff]
    %v458 = vld [vmem:[#allocation5 + $0xd0] sm:$0xff]
    %v459 = vld [vmem:[#allocation5 + $0xd8] sm:$0xff]
    %v460 = vld [vmem:[#allocation5 + $0xe0] sm:$0xff]
    %v461 = vld [vmem:[#allocation5 + $0xe8] sm:$0xff]
    %v462 = vld [vmem:[#allocation5 + $0xf0] sm:$0xff]
    %v463 = vld [vmem:[#allocation5 + $0xf8] sm:$0xff]
    %v464 = vld [vmem:[#allocation5 + $0x100] sm:$0xff]
    %v465 = vld [vmem:[#allocation5 + $0x108] sm:$0xff]
    %v466 = vld [vmem:[#allocation5 + $0x110] sm:$0xff]
    %v467 = vld [vmem:[#allocation5 + $0x118] sm:$0xff]
    %v468 = vld [vmem:[#allocation5 + $0x120] sm:$0xff]
    %v469 = vld [vmem:[#allocation5 + $0x128] sm:$0xff]
    %v470 = vld [vmem:[#allocation5 + $0x130] sm:$0xff]
    %v471 = vld [vmem:[#allocation5 + $0x138] sm:$0xff]
    %v472 = vld [vmem:[#allocation5 + $0x140] sm:$0xff]
    %v473 = vld [vmem:[#allocation5 + $0x148] sm:$0xff]
    %v474 = vld [vmem:[#allocation5 + $0x150] sm:$0xff]
    %v475 = vld [vmem:[#allocation5 + $0x158] sm:$0xff]
    %v476 = vld [vmem:[#allocation5 + $0x160] sm:$0xff]
    %v477 = vld [vmem:[#allocation5 + $0x168] sm:$0xff]
    %v478 = vld [vmem:[#allocation5 + $0x170] sm:$0xff]
    %v479 = vld [vmem:[#allocation5 + $0x178] sm:$0xff]
    %v480 = vld [vmem:[#allocation5 + $0x180] sm:$0xff]
    %v481 = vld [vmem:[#allocation5 + $0x188] sm:$0xff]
    %v482 = vld [vmem:[#allocation5 + $0x190] sm:$0xff]
    %v483 = vld [vmem:[#allocation5 + $0x198] sm:$0xff]
    %v484 = vld [vmem:[#allocation5 + $0x1a0] sm:$0xff]
    %v485 = vld [vmem:[#allocation5 + $0x1a8] sm:$0xff]
    %v486 = vld [vmem:[#allocation5 + $0x1b0] sm:$0xff]
    %v487 = vld [vmem:[#allocation5 + $0x1b8] sm:$0xff]
    %v488 = vld [vmem:[#allocation5 + $0x1c0] sm:$0xff]
    %v489 = vld [vmem:[#allocation5 + $0x1c8] sm:$0xff]
    %v490 = vld [vmem:[#allocation5 + $0x1d0] sm:$0xff]
    %v491 = vld [vmem:[#allocation5 + $0x1d8] sm:$0xff]
    %v492 = vld [vmem:[#allocation5 + $0x1e0] sm:$0xff]
    %v493 = vld [vmem:[#allocation5 + $0x1e8] sm:$0xff]
    %v494 = vld [vmem:[#allocation5 + $0x1f0] sm:$0xff]
    %v495 = vld [vmem:[#allocation5 + $0x1f8] sm:$0xff]
    %v496 = vld [vmem:[#allocation5 + $0x200] sm:$0xff]
    %v497 = vld [vmem:[#allocation5 + $0x208] sm:$0xff]
    %v498 = vld [vmem:[#allocation5 + $0x210] sm:$0xff]
    %v499 = vld [vmem:[#allocation5 + $0x218] sm:$0xff]
    %v500 = vld [vmem:[#allocation5 + $0x220] sm:$0xff]
    %v501 = vld [vmem:[#allocation5 + $0x228] sm:$0xff]
    %v502 = vld [vmem:[#allocation5 + $0x230] sm:$0xff]
    %v503 = vld [vmem:[#allocation5 + $0x238] sm:$0xff]
    %v504 = vld [vmem:[#allocation5 + $0x240] sm:$0xff]
    %v505 = vld [vmem:[#allocation5 + $0x248] sm:$0xff]
    %v506 = vld [vmem:[#allocation5 + $0x250] sm:$0xff]
    %v507 = vld [vmem:[#allocation5 + $0x258] sm:$0xff]
    %v508 = vld [vmem:[#allocation5 + $0x260] sm:$0xff]
    %v509 = vld [vmem:[#allocation5 + $0x268] sm:$0xff]
    %v510 = vld [vmem:[#allocation5 + $0x270] sm:$0xff]
    %v511 = vld [vmem:[#allocation5 + $0x278] sm:$0xff]
    %v512 = vld [vmem:[#allocation5 + $0x280] sm:$0xff]
    %v513 = vld [vmem:[#allocation5 + $0x288] sm:$0xff]
    %v514 = vld [vmem:[#allocation5 + $0x290] sm:$0xff]
    %v515 = vld [vmem:[#allocation5 + $0x298] sm:$0xff]
    %v516 = vld [vmem:[#allocation5 + $0x2a0] sm:$0xff]
    %v517 = vld [vmem:[#allocation5 + $0x2a8] sm:$0xff]
    %v518 = vld [vmem:[#allocation5 + $0x2b0] sm:$0xff]
    %v519 = vld [vmem:[#allocation5 + $0x2b8] sm:$0xff]
    %v520 = vld [vmem:[#allocation5 + $0x2c0] sm:$0xff]
    %v521 = vld [vmem:[#allocation5 + $0x2c8] sm:$0xff]
    %v522 = vld [vmem:[#allocation5 + $0x2d0] sm:$0xff]
    %v523 = vld [vmem:[#allocation5 + $0x2d8] sm:$0xff]
    %v524 = vld [vmem:[#allocation5 + $0x2e0] sm:$0xff]
    %v525 = vld [vmem:[#allocation5 + $0x2e8] sm:$0xff]
    %v526 = vld [vmem:[#allocation5 + $0x2f0] sm:$0xff]
    %v527 = vld [vmem:[#allocation5 + $0x2f8] sm:$0xff]
    %v528 = vld [vmem:[#allocation5 + $0x300] sm:$0xff]
    %v529 = vld [vmem:[#allocation5 + $0x308] sm:$0xff]
    %v530 = vld [vmem:[#allocation5 + $0x310] sm:$0xff]
    %v531 = vld [vmem:[#allocation5 + $0x318] sm:$0xff]
    %v532 = vld [vmem:[#allocation5 + $0x320] sm:$0xff]
    %v533 = vld [vmem:[#allocation5 + $0x328] sm:$0xff]
    %v534 = vld [vmem:[#allocation5 + $0x330] sm:$0xff]
    %v535 = vld [vmem:[#allocation5 + $0x338] sm:$0xff]
    %v536 = vld [vmem:[#allocation5 + $0x340] sm:$0xff]
    %v537 = vld [vmem:[#allocation5 + $0x348] sm:$0xff]
    %v538 = vld [vmem:[#allocation5 + $0x350] sm:$0xff]
    %v539 = vld [vmem:[#allocation5 + $0x358] sm:$0xff]
    %v540 = vld [vmem:[#allocation5 + $0x360] sm:$0xff]
    %v541 = vld [vmem:[#allocation5 + $0x368] sm:$0xff]
    %v542 = vld [vmem:[#allocation5 + $0x370] sm:$0xff]
    %v543 = vld [vmem:[#allocation5 + $0x378] sm:$0xff]
    %v544 = vld [vmem:[#allocation5 + $0x380] sm:$0xff]
    %v545 = vld [vmem:[#allocation5 + $0x388] sm:$0xff]
    %v546 = vld [vmem:[#allocation5 + $0x390] sm:$0xff]
    %v547 = vld [vmem:[#allocation5 + $0x398] sm:$0xff]
    %v548 = vld [vmem:[#allocation5 + $0x3a0] sm:$0xff]
    %v549 = vld [vmem:[#allocation5 + $0x3a8] sm:$0xff]
    %v550 = vld [vmem:[#allocation5 + $0x3b0] sm:$0xff]
    %v551 = vld [vmem:[#allocation5 + $0x3b8] sm:$0xff]
    %v552 = vld [vmem:[#allocation5 + $0x3c0] sm:$0xff]
    %v553 = vld [vmem:[#allocation5 + $0x3c8] sm:$0xff]
    %v554 = vld [vmem:[#allocation5 + $0x3d0] sm:$0xff]
    %v555 = vld [vmem:[#allocation5 + $0x3d8] sm:$0xff]
    %v556 = vld [vmem:[#allocation5 + $0x3e0] sm:$0xff]
    %v557 = vld [vmem:[#allocation5 + $0x3e8] sm:$0xff]
    %v558 = vld [vmem:[#allocation5 + $0x3f0] sm:$0xff]
    %v559 = vld [vmem:[#allocation5 + $0x3f8] sm:$0xff]
    %v560 = vld [vmem:[%s5] sm:$0xf]
    %v562 = vlaneseq
    %v563 = vshrl.u32 %v562, 7
    %v564 = vsub.s32 0, %v563
    %v565 = vrot.slane %v560, %v564
    %v566 = vlaneseq
    %v567 = vshrl.u32 %v566, 7
    %v568 = vsub.s32 1, %v567
    %v569 = vrot.slane %v560, %v568
    %v570 = vlaneseq
    %v571 = vshrl.u32 %v570, 7
    %v572 = vsub.s32 2, %v571
    %v573 = vrot.slane %v560, %v572
    %v574 = vlaneseq
    %v575 = vshrl.u32 %v574, 7
    %v576 = vsub.s32 3, %v575
    %v577 = vrot.slane %v560, %v576
    %582 = vmatprep.subr.mxu0 %v369
    %583 = vmatpush1.msra.mxu0 %v368
    %584 = vmatprep.subr.mxu0 %v373
    %585 = vmatpush1.msra.mxu0 %v372
    %586 = vmatprep.subr.mxu0 %v377
    %587 = vmatpush1.msra.mxu0 %v376
    %588 = vmatprep.subr.mxu0 %v381
    %589 = vmatpush1.msra.mxu0 %v380
    %590 = vmatprep.subr.mxu0 %v385
    %591 = vmatpush1.msra.mxu0 %v384
    %592 = vmatprep.subr.mxu0 %v389
    %593 = vmatpush1.msra.mxu0 %v388
    %594 = vmatprep.subr.mxu0 %v393
    %595 = vmatpush1.msra.mxu0 %v392
    %596 = vmatprep.subr.mxu0 %v397
    %597 = vmatpush1.msra.mxu0 %v396
    %598 = vmatprep.subr.mxu0 %v401
    %599 = vmatpush1.msra.mxu0 %v400
    %600 = vmatprep.subr.mxu0 %v405
    %601 = vmatpush1.msra.mxu0 %v404
    %602 = vmatprep.subr.mxu0 %v409
    %603 = vmatpush1.msra.mxu0 %v408
    %604 = vmatprep.subr.mxu0 %v413
    %605 = vmatpush1.msra.mxu0 %v412
    %606 = vmatprep.subr.mxu0 %v417
    %607 = vmatpush1.msra.mxu0 %v416
    %608 = vmatprep.subr.mxu0 %v421
    %609 = vmatpush1.msra.mxu0 %v420
    %610 = vmatprep.subr.mxu0 %v425
    %611 = vmatpush1.msra.mxu0 %v424
    %612 = vmatprep.subr.mxu0 %v429
    %613 = vmatpush1.msra.mxu0 %v428
    %614 = vmatprep.subr.mxu0 0.0
    %615 = vmatpush1.msra.mxu0 0.0
    %616 = vmatprep.subr.mxu0 0.0
    %617 = vmatpush1.msra.mxu0 0.0
    %618 = vmatprep.subr.mxu0 0.0
    %619 = vmatpush1.msra.mxu0 0.0
    %620 = vmatprep.subr.mxu0 0.0
    %621 = vmatpush1.msra.mxu0 0.0
    %622 = vmatprep.subr.mxu0 0.0
    %623 = vmatpush1.msra.mxu0 0.0
    %624 = vmatprep.subr.mxu0 0.0
    %625 = vmatpush1.msra.mxu0 0.0
    %626 = vmatprep.subr.mxu0 0.0
    %627 = vmatpush1.msra.mxu0 0.0
    %628 = vmatprep.subr.mxu0 0.0
    %629 = vmatpush1.msra.mxu0 0.0
    %630 = vmatprep.subr.mxu0 0.0
    %631 = vmatpush1.msra.mxu0 0.0
    %632 = vmatprep.subr.mxu0 0.0
    %633 = vmatpush1.msra.mxu0 0.0
    %634 = vmatprep.subr.mxu0 0.0
    %635 = vmatpush1.msra.mxu0 0.0
    %636 = vmatprep.subr.mxu0 0.0
    %637 = vmatpush1.msra.mxu0 0.0
    %638 = vmatprep.subr.mxu0 0.0
    %639 = vmatpush1.msra.mxu0 0.0
    %640 = vmatprep.subr.mxu0 0.0
    %641 = vmatpush1.msra.mxu0 0.0
    %642 = vmatprep.subr.mxu0 0.0
    %643 = vmatpush1.msra.mxu0 0.0
    %644 = vmatprep.subr.mxu0 0.0
    %645 = vmatpush1.msra.mxu0 0.0
    %646 = vmatprep.mubr.f32.mxu0 0.0
    %647 = vmatmul.mubr.f32.gmra.mrb[0].mxu0 0.0
    %v648 = vpop.f32.mrb[0].mxu0
    %v649 = vadd.f32 0.0, %v648
    %v650 = vpop.f32.mrb[0].mxu0
    %v651 = vadd.f32 0.0, %v650
    %652 = vdwg.mxu0
    %653 = vmatprep.subr.mxu0 %v371
    %654 = vmatpush1.msra.mxu0 %v370
    %655 = vmatprep.subr.mxu0 %v375
    %656 = vmatpush1.msra.mxu0 %v374
    %657 = vmatprep.subr.mxu0 %v379
    %658 = vmatpush1.msra.mxu0 %v378
    %659 = vmatprep.subr.mxu0 %v383
    %660 = vmatpush1.msra.mxu0 %v382
    %661 = vmatprep.subr.mxu0 %v387
    %662 = vmatpush1.msra.mxu0 %v386
    %663 = vmatprep.subr.mxu0 %v391
    %664 = vmatpush1.msra.mxu0 %v390
    %665 = vmatprep.subr.mxu0 %v395
    %666 = vmatpush1.msra.mxu0 %v394
    %667 = vmatprep.subr.mxu0 %v399
    %668 = vmatpush1.msra.mxu0 %v398
    %669 = vmatprep.subr.mxu0 %v403
    %670 = vmatpush1.msra.mxu0 %v402
    %671 = vmatprep.subr.mxu0 %v407
    %672 = vmatpush1.msra.mxu0 %v406
    %673 = vmatprep.subr.mxu0 %v411
    %674 = vmatpush1.msra.mxu0 %v410
    %675 = vmatprep.subr.mxu0 %v415
    %676 = vmatpush1.msra.mxu0 %v414
    %677 = vmatprep.subr.mxu0 %v419
    %678 = vmatpush1.msra.mxu0 %v418
    %679 = vmatprep.subr.mxu0 %v423
    %680 = vmatpush1.msra.mxu0 %v422
    %681 = vmatprep.subr.mxu0 %v427
    %682 = vmatpush1.msra.mxu0 %v426
    %683 = vmatprep.subr.mxu0 %v431
    %684 = vmatpush1.msra.mxu0 %v430
    %685 = vmatprep.subr.mxu0 0.0
    %686 = vmatpush1.msra.mxu0 0.0
    %687 = vmatprep.subr.mxu0 0.0
    %688 = vmatpush1.msra.mxu0 0.0
    %689 = vmatprep.subr.mxu0 0.0
    %690 = vmatpush1.msra.mxu0 0.0
    %691 = vmatprep.subr.mxu0 0.0
    %692 = vmatpush1.msra.mxu0 0.0
    %693 = vmatprep.subr.mxu0 0.0
    %694 = vmatpush1.msra.mxu0 0.0
    %695 = vmatprep.subr.mxu0 0.0
    %696 = vmatpush1.msra.mxu0 0.0
    %697 = vmatprep.subr.mxu0 0.0
    %698 = vmatpush1.msra.mxu0 0.0
    %699 = vmatprep.subr.mxu0 0.0
    %700 = vmatpush1.msra.mxu0 0.0
    %701 = vmatprep.subr.mxu0 0.0
    %702 = vmatpush1.msra.mxu0 0.0
    %703 = vmatprep.subr.mxu0 0.0
    %704 = vmatpush1.msra.mxu0 0.0
    %705 = vmatprep.subr.mxu0 0.0
    %706 = vmatpush1.msra.mxu0 0.0
    %707 = vmatprep.subr.mxu0 0.0
    %708 = vmatpush1.msra.mxu0 0.0
    %709 = vmatprep.subr.mxu0 0.0
    %710 = vmatpush1.msra.mxu0 0.0
    %711 = vmatprep.subr.mxu0 0.0
    %712 = vmatpush1.msra.mxu0 0.0
    %713 = vmatprep.subr.mxu0 0.0
    %714 = vmatpush1.msra.mxu0 0.0
    %715 = vmatprep.subr.mxu0 0.0
    %716 = vmatpush1.msra.mxu0 0.0
    %717 = vmatprep.mubr.f32.mxu0 0.0
    %718 = vmatmul.mubr.f32.gmra.mrb[0].mxu0 0.0
    %v719 = vpop.f32.mrb[0].mxu0
    %v720 = vadd.f32 0.0, %v719
    %v721 = vpop.f32.mrb[0].mxu0
    %v722 = vadd.f32 0.0, %v721
    %723 = vdwg.mxu0
    %v724 = vadd.f32 %v209, %v649
    %v725 = vadd.f32 %v211, %v651
    %v726 = vadd.f32 %v322, %v720
    %v727 = vadd.f32 %v324, %v722
    %v728 = vxor.u32 %v724, 2147483648
    %v729 = vmul.f32 %v728, 1.442695
    %v730 = vpow.pop %v729
    %v731 = vadd.f32 %v730, 1.0
    %v732 = vrcp.pop %v731
    %v733 = vmul.f32 1.0, %v732
    %v734 = vxor.u32 %v725, 2147483648
    %v735 = vmul.f32 %v734, 1.442695
    %v736 = vpow.pop %v735
    %v737 = vadd.f32 %v736, 1.0
    %v738 = vrcp.pop %v737
    %v739 = vmul.f32 1.0, %v738
    %v740 = vtanh.pop %v726
    %v741 = vxor.u32 %v727, 2147483648
    %v742 = vmul.f32 %v741, 1.442695
    %v743 = vpow.pop %v742
    %v744 = vadd.f32 %v743, 1.0
    %v745 = vrcp.pop %v744
    %v746 = vmul.f32 1.0, %v745
    %v747 = vmul.f32 %v739, 0.0
    %v748 = vmul.f32 %v733, %v740
    %v749 = vadd.f32 %v747, %v748
    %v750 = vtanh.pop %v749
    %v751 = vmul.f32 %v746, %v750
    %752 = vmatprep.subr.mxu0 %v433
    %753 = vmatpush1.msra.mxu0 %v432
    %754 = vmatprep.subr.mxu0 %v437
    %755 = vmatpush1.msra.mxu0 %v436
    %756 = vmatprep.subr.mxu0 %v441
    %757 = vmatpush1.msra.mxu0 %v440
    %758 = vmatprep.subr.mxu0 %v445
    %759 = vmatpush1.msra.mxu0 %v444
    %760 = vmatprep.subr.mxu0 %v449
    %761 = vmatpush1.msra.mxu0 %v448
    %762 = vmatprep.subr.mxu0 %v453
    %763 = vmatpush1.msra.mxu0 %v452
    %764 = vmatprep.subr.mxu0 %v457
    %765 = vmatpush1.msra.mxu0 %v456
    %766 = vmatprep.subr.mxu0 %v461
    %767 = vmatpush1.msra.mxu0 %v460
    %768 = vmatprep.subr.mxu0 %v465
    %769 = vmatpush1.msra.mxu0 %v464
    %770 = vmatprep.subr.mxu0 %v469
    %771 = vmatpush1.msra.mxu0 %v468
    %772 = vmatprep.subr.mxu0 %v473
    %773 = vmatpush1.msra.mxu0 %v472
    %774 = vmatprep.subr.mxu0 %v477
    %775 = vmatpush1.msra.mxu0 %v476
    %776 = vmatprep.subr.mxu0 %v481
    %777 = vmatpush1.msra.mxu0 %v480
    %778 = vmatprep.subr.mxu0 %v485
    %779 = vmatpush1.msra.mxu0 %v484
    %780 = vmatprep.subr.mxu0 %v489
    %781 = vmatpush1.msra.mxu0 %v488
    %782 = vmatprep.subr.mxu0 %v493
    %783 = vmatpush1.msra.mxu0 %v492
    %784 = vmatprep.subr.mxu0 %v497
    %785 = vmatpush1.msra.mxu0 %v496
    %786 = vmatprep.subr.mxu0 %v501
    %787 = vmatpush1.msra.mxu0 %v500
    %788 = vmatprep.subr.mxu0 %v505
    %789 = vmatpush1.msra.mxu0 %v504
    %790 = vmatprep.subr.mxu0 %v509
    %791 = vmatpush1.msra.mxu0 %v508
    %792 = vmatprep.subr.mxu0 %v513
    %793 = vmatpush1.msra.mxu0 %v512
    %794 = vmatprep.subr.mxu0 %v517
    %795 = vmatpush1.msra.mxu0 %v516
    %796 = vmatprep.subr.mxu0 %v521
    %797 = vmatpush1.msra.mxu0 %v520
    %798 = vmatprep.subr.mxu0 %v525
    %799 = vmatpush1.msra.mxu0 %v524
    %800 = vmatprep.subr.mxu0 %v529
    %801 = vmatpush1.msra.mxu0 %v528
    %802 = vmatprep.subr.mxu0 %v533
    %803 = vmatpush1.msra.mxu0 %v532
    %804 = vmatprep.subr.mxu0 %v537
    %805 = vmatpush1.msra.mxu0 %v536
    %806 = vmatprep.subr.mxu0 %v541
    %807 = vmatpush1.msra.mxu0 %v540
    %808 = vmatprep.subr.mxu0 %v545
    %809 = vmatpush1.msra.mxu0 %v544
    %810 = vmatprep.subr.mxu0 %v549
    %811 = vmatpush1.msra.mxu0 %v548
    %812 = vmatprep.subr.mxu0 %v553
    %813 = vmatpush1.msra.mxu0 %v552
    %814 = vmatprep.subr.mxu0 %v557
    %815 = vmatpush1.msra.mxu0 %v556
    %816 = vmatprep.mubr.f32.mxu0 0.0
    %817 = vmatmul.mubr.f32.gmra.mrb[0].mxu0 %v751
    %v818 = vpop.f32.mrb[0].mxu0
    %v819 = vadd.f32 %v565, %v818
    %v820 = vpop.f32.mrb[0].mxu0
    %v821 = vadd.f32 %v569, %v820
    %822 = vdwg.mxu0
    %823 = vmatprep.subr.mxu0 %v435
    %824 = vmatpush1.msra.mxu0 %v434
    %825 = vmatprep.subr.mxu0 %v439
    %826 = vmatpush1.msra.mxu0 %v438
    %827 = vmatprep.subr.mxu0 %v443
    %828 = vmatpush1.msra.mxu0 %v442
    %829 = vmatprep.subr.mxu0 %v447
    %830 = vmatpush1.msra.mxu0 %v446
    %831 = vmatprep.subr.mxu0 %v451
    %832 = vmatpush1.msra.mxu0 %v450
    %833 = vmatprep.subr.mxu0 %v455
    %834 = vmatpush1.msra.mxu0 %v454
    %835 = vmatprep.subr.mxu0 %v459
    %836 = vmatpush1.msra.mxu0 %v458
    %837 = vmatprep.subr.mxu0 %v463
    %838 = vmatpush1.msra.mxu0 %v462
    %839 = vmatprep.subr.mxu0 %v467
    %840 = vmatpush1.msra.mxu0 %v466
    %841 = vmatprep.subr.mxu0 %v471
    %842 = vmatpush1.msra.mxu0 %v470
    %843 = vmatprep.subr.mxu0 %v475
    %844 = vmatpush1.msra.mxu0 %v474
    %845 = vmatprep.subr.mxu0 %v479
    %846 = vmatpush1.msra.mxu0 %v478
    %847 = vmatprep.subr.mxu0 %v483
    %848 = vmatpush1.msra.mxu0 %v482
    %849 = vmatprep.subr.mxu0 %v487
    %850 = vmatpush1.msra.mxu0 %v486
    %851 = vmatprep.subr.mxu0 %v491
    %852 = vmatpush1.msra.mxu0 %v490
    %853 = vmatprep.subr.mxu0 %v495
    %854 = vmatpush1.msra.mxu0 %v494
    %855 = vmatprep.subr.mxu0 %v499
    %856 = vmatpush1.msra.mxu0 %v498
    %857 = vmatprep.subr.mxu0 %v503
    %858 = vmatpush1.msra.mxu0 %v502
    %859 = vmatprep.subr.mxu0 %v507
    %860 = vmatpush1.msra.mxu0 %v506
    %861 = vmatprep.subr.mxu0 %v511
    %862 = vmatpush1.msra.mxu0 %v510
    %863 = vmatprep.subr.mxu0 %v515
    %864 = vmatpush1.msra.mxu0 %v514
    %865 = vmatprep.subr.mxu0 %v519
    %866 = vmatpush1.msra.mxu0 %v518
    %867 = vmatprep.subr.mxu0 %v523
    %868 = vmatpush1.msra.mxu0 %v522
    %869 = vmatprep.subr.mxu0 %v527
    %870 = vmatpush1.msra.mxu0 %v526
    %871 = vmatprep.subr.mxu0 %v531
    %872 = vmatpush1.msra.mxu0 %v530
    %873 = vmatprep.subr.mxu0 %v535
    %874 = vmatpush1.msra.mxu0 %v534
    %875 = vmatprep.subr.mxu0 %v539
    %876 = vmatpush1.msra.mxu0 %v538
    %877 = vmatprep.subr.mxu0 %v543
    %878 = vmatpush1.msra.mxu0 %v542
    %879 = vmatprep.subr.mxu0 %v547
    %880 = vmatpush1.msra.mxu0 %v546
    %881 = vmatprep.subr.mxu0 %v551
    %882 = vmatpush1.msra.mxu0 %v550
    %883 = vmatprep.subr.mxu0 %v555
    %884 = vmatpush1.msra.mxu0 %v554
    %885 = vmatprep.subr.mxu0 %v559
    %886 = vmatpush1.msra.mxu0 %v558
    %887 = vmatprep.mubr.f32.mxu0 0.0
    %888 = vmatmul.mubr.f32.gmra.mrb[0].mxu0 %v751
    %v889 = vpop.f32.mrb[0].mxu0
    %v890 = vadd.f32 %v573, %v889
    %v891 = vpop.f32.mrb[0].mxu0
    %v892 = vadd.f32 %v577, %v891
    %893 = vdwg.mxu0
    %v894 = vxor.u32 %v819, 2147483648
    %v895 = vmul.f32 %v894, 1.442695
    %v896 = vpow.pop %v895
    %v897 = vadd.f32 %v896, 1.0
    %v898 = vrcp.pop %v897
    %v899 = vmul.f32 1.0, %v898
    %v900 = vxor.u32 %v821, 2147483648
    %v901 = vmul.f32 %v900, 1.442695
    %v902 = vpow.pop %v901
    %v903 = vadd.f32 %v902, 1.0
    %v904 = vrcp.pop %v903
    %v905 = vmul.f32 1.0, %v904
    %v906 = vtanh.pop %v890
    %v907 = vxor.u32 %v892, 2147483648
    %v908 = vmul.f32 %v907, 1.442695
    %v909 = vpow.pop %v908
    %v910 = vadd.f32 %v909, 1.0
    %v911 = vrcp.pop %v910
    %v912 = vmul.f32 1.0, %v911
    %v913 = vmul.f32 %v905, 0.0
    %v914 = vmul.f32 %v899, %v906
    %v915 = vadd.f32 %v913, %v914
    %v916 = vtanh.pop %v915
    %v917 = vmul.f32 %v912, %v916
    %918 = vmatprep.subr.mxu0 %v369
    %919 = vmatpush1.msra.mxu0 %v368
    %920 = vmatprep.subr.mxu0 %v373
    %921 = vmatpush1.msra.mxu0 %v372
    %922 = vmatprep.subr.mxu0 %v377
    %923 = vmatpush1.msra.mxu0 %v376
    %924 = vmatprep.subr.mxu0 %v381
    %925 = vmatpush1.msra.mxu0 %v380
    %926 = vmatprep.subr.mxu0 %v385
    %927 = vmatpush1.msra.mxu0 %v384
    %928 = vmatprep.subr.mxu0 %v389
    %929 = vmatpush1.msra.mxu0 %v388
    %930 = vmatprep.subr.mxu0 %v393
    %931 = vmatpush1.msra.mxu0 %v392
    %932 = vmatprep.subr.mxu0 %v397
    %933 = vmatpush1.msra.mxu0 %v396
    %934 = vmatprep.subr.mxu0 %v401
    %935 = vmatpush1.msra.mxu0 %v400
    %936 = vmatprep.subr.mxu0 %v405
    %937 = vmatpush1.msra.mxu0 %v404
    %938 = vmatprep.subr.mxu0 %v409
    %939 = vmatpush1.msra.mxu0 %v408
    %940 = vmatprep.subr.mxu0 %v413
    %941 = vmatpush1.msra.mxu0 %v412
    %942 = vmatprep.subr.mxu0 %v417
    %943 = vmatpush1.msra.mxu0 %v416
    %944 = vmatprep.subr.mxu0 %v421
    %945 = vmatpush1.msra.mxu0 %v420
    %946 = vmatprep.subr.mxu0 %v425
    %947 = vmatpush1.msra.mxu0 %v424
    %948 = vmatprep.subr.mxu0 %v429
    %949 = vmatpush1.msra.mxu0 %v428
    %950 = vmatprep.subr.mxu0 0.0
    %951 = vmatpush1.msra.mxu0 0.0
    %952 = vmatprep.subr.mxu0 0.0
    %953 = vmatpush1.msra.mxu0 0.0
    %954 = vmatprep.subr.mxu0 0.0
    %955 = vmatpush1.msra.mxu0 0.0
    %956 = vmatprep.subr.mxu0 0.0
    %957 = vmatpush1.msra.mxu0 0.0
    %958 = vmatprep.subr.mxu0 0.0
    %959 = vmatpush1.msra.mxu0 0.0
    %960 = vmatprep.subr.mxu0 0.0
    %961 = vmatpush1.msra.mxu0 0.0
    %962 = vmatprep.subr.mxu0 0.0
    %963 = vmatpush1.msra.mxu0 0.0
    %964 = vmatprep.subr.mxu0 0.0
    %965 = vmatpush1.msra.mxu0 0.0
    %966 = vmatprep.subr.mxu0 0.0
    %967 = vmatpush1.msra.mxu0 0.0
    %968 = vmatprep.subr.mxu0 0.0
    %969 = vmatpush1.msra.mxu0 0.0
    %970 = vmatprep.subr.mxu0 0.0
    %971 = vmatpush1.msra.mxu0 0.0
    %972 = vmatprep.subr.mxu0 0.0
    %973 = vmatpush1.msra.mxu0 0.0
    %974 = vmatprep.subr.mxu0 0.0
    %975 = vmatpush1.msra.mxu0 0.0
    %976 = vmatprep.subr.mxu0 0.0
    %977 = vmatpush1.msra.mxu0 0.0
    %978 = vmatprep.subr.mxu0 0.0
    %979 = vmatpush1.msra.mxu0 0.0
    %980 = vmatprep.subr.mxu0 0.0
    %981 = vmatpush1.msra.mxu0 0.0
    %982 = vmatprep.mubr.f32.mxu0 0.0
    %983 = vmatmul.mubr.f32.gmra.mrb[0].mxu0 %v751
    %v984 = vpop.f32.mrb[0].mxu0
    %v985 = vadd.f32 0.0, %v984
    %v986 = vpop.f32.mrb[0].mxu0
    %v987 = vadd.f32 0.0, %v986
    %988 = vdwg.mxu0
    %989 = vmatprep.subr.mxu0 %v371
    %990 = vmatpush1.msra.mxu0 %v370
    %991 = vmatprep.subr.mxu0 %v375
    %992 = vmatpush1.msra.mxu0 %v374
    %993 = vmatprep.subr.mxu0 %v379
    %994 = vmatpush1.msra.mxu0 %v378
    %995 = vmatprep.subr.mxu0 %v383
    %996 = vmatpush1.msra.mxu0 %v382
    %997 = vmatprep.subr.mxu0 %v387
    %998 = vmatpush1.msra.mxu0 %v386
    %999 = vmatprep.subr.mxu0 %v391
    %1000 = vmatpush1.msra.mxu0 %v390
    %1001 = vmatprep.subr.mxu0 %v395
    %1002 = vmatpush1.msra.mxu0 %v394
    %1003 = vmatprep.subr.mxu0 %v399
    %1004 = vmatpush1.msra.mxu0 %v398
    %1005 = vmatprep.subr.mxu0 %v403
    %1006 = vmatpush1.msra.mxu0 %v402
    %1007 = vmatprep.subr.mxu0 %v407
    %1008 = vmatpush1.msra.mxu0 %v406
    %1009 = vmatprep.subr.mxu0 %v411
    %1010 = vmatpush1.msra.mxu0 %v410
    %1011 = vmatprep.subr.mxu0 %v415
    %1012 = vmatpush1.msra.mxu0 %v414
    %1013 = vmatprep.subr.mxu0 %v419
    %1014 = vmatpush1.msra.mxu0 %v418
    %1015 = vmatprep.subr.mxu0 %v423
    %1016 = vmatpush1.msra.mxu0 %v422
    %1017 = vmatprep.subr.mxu0 %v427
    %1018 = vmatpush1.msra.mxu0 %v426
    %1019 = vmatprep.subr.mxu0 %v431
    %1020 = vmatpush1.msra.mxu0 %v430
    %1021 = vmatprep.subr.mxu0 0.0
    %1022 = vmatpush1.msra.mxu0 0.0
    %1023 = vmatprep.subr.mxu0 0.0
    %1024 = vmatpush1.msra.mxu0 0.0
    %1025 = vmatprep.subr.mxu0 0.0
    %1026 = vmatpush1.msra.mxu0 0.0
    %1027 = vmatprep.subr.mxu0 0.0
    %1028 = vmatpush1.msra.mxu0 0.0
    %1029 = vmatprep.subr.mxu0 0.0
    %1030 = vmatpush1.msra.mxu0 0.0
    %1031 = vmatprep.subr.mxu0 0.0
    %1032 = vmatpush1.msra.mxu0 0.0
    %1033 = vmatprep.subr.mxu0 0.0
    %1034 = vmatpush1.msra.mxu0 0.0
    %1035 = vmatprep.subr.mxu0 0.0
    %1036 = vmatpush1.msra.mxu0 0.0
    %1037 = vmatprep.subr.mxu0 0.0
    %1038 = vmatpush1.msra.mxu0 0.0
    %1039 = vmatprep.subr.mxu0 0.0
    %1040 = vmatpush1.msra.mxu0 0.0
    %1041 = vmatprep.subr.mxu0 0.0
    %1042 = vmatpush1.msra.mxu0 0.0
    %1043 = vmatprep.subr.mxu0 0.0
    %1044 = vmatpush1.msra.mxu0 0.0
    %1045 = vmatprep.subr.mxu0 0.0
    %1046 = vmatpush1.msra.mxu0 0.0
    %1047 = vmatprep.subr.mxu0 0.0
    %1048 = vmatpush1.msra.mxu0 0.0
    %1049 = vmatprep.subr.mxu0 0.0
    %1050 = vmatpush1.msra.mxu0 0.0
    %1051 = vmatprep.subr.mxu0 0.0
    %1052 = vmatpush1.msra.mxu0 0.0
    %1053 = vmatprep.mubr.f32.mxu0 0.0
    %1054 = vmatmul.mubr.f32.gmra.mrb[0].mxu0 %v751
    %v1055 = vpop.f32.mrb[0].mxu0
    %v1056 = vadd.f32 0.0, %v1055
    %v1057 = vpop.f32.mrb[0].mxu0
    %v1058 = vadd.f32 0.0, %v1057
    %1059 = vdwg.mxu0
    %v1060 = vadd.f32 %v215, %v985
    %v1061 = vadd.f32 %v217, %v987
    %v1062 = vadd.f32 %v328, %v1056
    %v1063 = vadd.f32 %v330, %v1058
    %v1064 = vxor.u32 %v1060, 2147483648
    %v1065 = vmul.f32 %v1064, 1.442695
    %v1066 = vpow.pop %v1065
    %v1067 = vadd.f32 %v1066, 1.0
    %v1068 = vrcp.pop %v1067
    %v1069 = vmul.f32 1.0, %v1068
    %v1070 = vxor.u32 %v1061, 2147483648
    %v1071 = vmul.f32 %v1070, 1.442695
    %v1072 = vpow.pop %v1071
    %v1073 = vadd.f32 %v1072, 1.0
    %v1074 = vrcp.pop %v1073
    %v1075 = vmul.f32 1.0, %v1074
    %v1076 = vtanh.pop %v1062
    %v1077 = vxor.u32 %v1063, 2147483648
    %v1078 = vmul.f32 %v1077, 1.442695
    %v1079 = vpow.pop %v1078
    %v1080 = vadd.f32 %v1079, 1.0
    %v1081 = vrcp.pop %v1080
    %v1082 = vmul.f32 1.0, %v1081
    %v1083 = vmul.f32 %v1075, %v749
    %v1084 = vmul.f32 %v1069, %v1076
    %v1085 = vadd.f32 %v1083, %v1084
    %v1086 = vtanh.pop %v1085
    %v1087 = vmul.f32 %v1082, %v1086
    %1088 = vmatprep.subr.mxu0 %v433
    %1089 = vmatpush1.msra.mxu0 %v432
    %1090 = vmatprep.subr.mxu0 %v437
    %1091 = vmatpush1.msra.mxu0 %v436
    %1092 = vmatprep.subr.mxu0 %v441
    %1093 = vmatpush1.msra.mxu0 %v440
    %1094 = vmatprep.subr.mxu0 %v445
    %1095 = vmatpush1.msra.mxu0 %v444
    %1096 = vmatprep.subr.mxu0 %v449
    %1097 = vmatpush1.msra.mxu0 %v448
    %1098 = vmatprep.subr.mxu0 %v453
    %1099 = vmatpush1.msra.mxu0 %v452
    %1100 = vmatprep.subr.mxu0 %v457
    %1101 = vmatpush1.msra.mxu0 %v456
    %1102 = vmatprep.subr.mxu0 %v461
    %1103 = vmatpush1.msra.mxu0 %v460
    %1104 = vmatprep.subr.mxu0 %v465
    %1105 = vmatpush1.msra.mxu0 %v464
    %1106 = vmatprep.subr.mxu0 %v469
    %1107 = vmatpush1.msra.mxu0 %v468
    %1108 = vmatprep.subr.mxu0 %v473
    %1109 = vmatpush1.msra.mxu0 %v472
    %1110 = vmatprep.subr.mxu0 %v477
    %1111 = vmatpush1.msra.mxu0 %v476
    %1112 = vmatprep.subr.mxu0 %v481
    %1113 = vmatpush1.msra.mxu0 %v480
    %1114 = vmatprep.subr.mxu0 %v485
    %1115 = vmatpush1.msra.mxu0 %v484
    %1116 = vmatprep.subr.mxu0 %v489
    %1117 = vmatpush1.msra.mxu0 %v488
    %1118 = vmatprep.subr.mxu0 %v493
    %1119 = vmatpush1.msra.mxu0 %v492
    %1120 = vmatprep.subr.mxu0 %v497
    %1121 = vmatpush1.msra.mxu0 %v496
    %1122 = vmatprep.subr.mxu0 %v501
    %1123 = vmatpush1.msra.mxu0 %v500
    %1124 = vmatprep.subr.mxu0 %v505
    %1125 = vmatpush1.msra.mxu0 %v504
    %1126 = vmatprep.subr.mxu0 %v509
    %1127 = vmatpush1.msra.mxu0 %v508
    %1128 = vmatprep.subr.mxu0 %v513
    %1129 = vmatpush1.msra.mxu0 %v512
    %1130 = vmatprep.subr.mxu0 %v517
    %1131 = vmatpush1.msra.mxu0 %v516
    %1132 = vmatprep.subr.mxu0 %v521
    %1133 = vmatpush1.msra.mxu0 %v520
    %1134 = vmatprep.subr.mxu0 %v525
    %1135 = vmatpush1.msra.mxu0 %v524
    %1136 = vmatprep.subr.mxu0 %v529
    %1137 = vmatpush1.msra.mxu0 %v528
    %1138 = vmatprep.subr.mxu0 %v533
    %1139 = vmatpush1.msra.mxu0 %v532
    %1140 = vmatprep.subr.mxu0 %v537
    %1141 = vmatpush1.msra.mxu0 %v536
    %1142 = vmatprep.subr.mxu0 %v541
    %1143 = vmatpush1.msra.mxu0 %v540
    %1144 = vmatprep.subr.mxu0 %v545
    %1145 = vmatpush1.msra.mxu0 %v544
    %1146 = vmatprep.subr.mxu0 %v549
    %1147 = vmatpush1.msra.mxu0 %v548
    %1148 = vmatprep.subr.mxu0 %v553
    %1149 = vmatpush1.msra.mxu0 %v552
    %1150 = vmatprep.subr.mxu0 %v557
    %1151 = vmatpush1.msra.mxu0 %v556
    %1152 = vmatprep.mubr.f32.mxu0 %v917
    %1153 = vmatmul.mubr.f32.gmra.mrb[0].mxu0 %v1087
    %v1154 = vpop.f32.mrb[0].mxu0
    %v1155 = vadd.f32 %v565, %v1154
    %v1156 = vpop.f32.mrb[0].mxu0
    %v1157 = vadd.f32 %v569, %v1156
    %1158 = vdwg.mxu0
    %1159 = vmatprep.subr.mxu0 %v435
    %1160 = vmatpush1.msra.mxu0 %v434
    %1161 = vmatprep.subr.mxu0 %v439
    %1162 = vmatpush1.msra.mxu0 %v438
    %1163 = vmatprep.subr.mxu0 %v443
    %1164 = vmatpush1.msra.mxu0 %v442
    %1165 = vmatprep.subr.mxu0 %v447
    %1166 = vmatpush1.msra.mxu0 %v446
    %1167 = vmatprep.subr.mxu0 %v451
    %1168 = vmatpush1.msra.mxu0 %v450
    %1169 = vmatprep.subr.mxu0 %v455
    %1170 = vmatpush1.msra.mxu0 %v454
    %1171 = vmatprep.subr.mxu0 %v459
    %1172 = vmatpush1.msra.mxu0 %v458
    %1173 = vmatprep.subr.mxu0 %v463
    %1174 = vmatpush1.msra.mxu0 %v462
    %1175 = vmatprep.subr.mxu0 %v467
    %1176 = vmatpush1.msra.mxu0 %v466
    %1177 = vmatprep.subr.mxu0 %v471
    %1178 = vmatpush1.msra.mxu0 %v470
    %1179 = vmatprep.subr.mxu0 %v475
    %1180 = vmatpush1.msra.mxu0 %v474
    %1181 = vmatprep.subr.mxu0 %v479
    %1182 = vmatpush1.msra.mxu0 %v478
    %1183 = vmatprep.subr.mxu0 %v483
    %1184 = vmatpush1.msra.mxu0 %v482
    %1185 = vmatprep.subr.mxu0 %v487
    %1186 = vmatpush1.msra.mxu0 %v486
    %1187 = vmatprep.subr.mxu0 %v491
    %1188 = vmatpush1.msra.mxu0 %v490
    %1189 = vmatprep.subr.mxu0 %v495
    %1190 = vmatpush1.msra.mxu0 %v494
    %1191 = vmatprep.subr.mxu0 %v499
    %1192 = vmatpush1.msra.mxu0 %v498
    %1193 = vmatprep.subr.mxu0 %v503
    %1194 = vmatpush1.msra.mxu0 %v502
    %1195 = vmatprep.subr.mxu0 %v507
    %1196 = vmatpush1.msra.mxu0 %v506
    %1197 = vmatprep.subr.mxu0 %v511
    %1198 = vmatpush1.msra.mxu0 %v510
    %1199 = vmatprep.subr.mxu0 %v515
    %1200 = vmatpush1.msra.mxu0 %v514
    %1201 = vmatprep.subr.mxu0 %v519
    %1202 = vmatpush1.msra.mxu0 %v518
    %1203 = vmatprep.subr.mxu0 %v523
    %1204 = vmatpush1.msra.mxu0 %v522
    %1205 = vmatprep.subr.mxu0 %v527
    %1206 = vmatpush1.msra.mxu0 %v526
    %1207 = vmatprep.subr.mxu0 %v531
    %1208 = vmatpush1.msra.mxu0 %v530
    %1209 = vmatprep.subr.mxu0 %v535
    %1210 = vmatpush1.msra.mxu0 %v534
    %1211 = vmatprep.subr.mxu0 %v539
    %1212 = vmatpush1.msra.mxu0 %v538
    %1213 = vmatprep.subr.mxu0 %v543
    %1214 = vmatpush1.msra.mxu0 %v542
    %1215 = vmatprep.subr.mxu0 %v547
    %1216 = vmatpush1.msra.mxu0 %v546
    %1217 = vmatprep.subr.mxu0 %v551
    %1218 = vmatpush1.msra.mxu0 %v550
    %1219 = vmatprep.subr.mxu0 %v555
    %1220 = vmatpush1.msra.mxu0 %v554
    %1221 = vmatprep.subr.mxu0 %v559
    %1222 = vmatpush1.msra.mxu0 %v558
    %1223 = vmatprep.mubr.f32.mxu0 %v917
    %1224 = vmatmul.mubr.f32.gmra.mrb[0].mxu0 %v1087
    %v1225 = vpop.f32.mrb[0].mxu0
    %v1226 = vadd.f32 %v573, %v1225
    %v1227 = vpop.f32.mrb[0].mxu0
    %v1228 = vadd.f32 %v577, %v1227
    %1229 = vdwg.mxu0
    %v1230 = vxor.u32 %v1155, 2147483648
    %v1231 = vmul.f32 %v1230, 1.442695
    %v1232 = vpow.pop %v1231
    %v1233 = vadd.f32 %v1232, 1.0
    %v1234 = vrcp.pop %v1233
    %v1235 = vmul.f32 1.0, %v1234
    %v1236 = vxor.u32 %v1157, 2147483648
    %v1237 = vmul.f32 %v1236, 1.442695
    %v1238 = vpow.pop %v1237
    %v1239 = vadd.f32 %v1238, 1.0
    %v1240 = vrcp.pop %v1239
    %v1241 = vmul.f32 1.0, %v1240
    %v1242 = vtanh.pop %v1226
    %v1243 = vxor.u32 %v1228, 2147483648
    %v1244 = vmul.f32 %v1243, 1.442695
    %v1245 = vpow.pop %v1244
    %v1246 = vadd.f32 %v1245, 1.0
    %v1247 = vrcp.pop %v1246
    %v1248 = vmul.f32 1.0, %v1247
    %v1249 = vmul.f32 %v1241, %v915
    %v1250 = vmul.f32 %v1235, %v1242
    %v1251 = vadd.f32 %v1249, %v1250
    %v1252 = vtanh.pop %v1251
    %v1253 = vmul.f32 %v1248, %v1252
    %1254 = vmatprep.subr.mxu0 %v369
    %1255 = vmatpush1.msra.mxu0 %v368
    %1256 = vmatprep.subr.mxu0 %v373
    %1257 = vmatpush1.msra.mxu0 %v372
    %1258 = vmatprep.subr.mxu0 %v377
    %1259 = vmatpush1.msra.mxu0 %v376
    %1260 = vmatprep.subr.mxu0 %v381
    %1261 = vmatpush1.msra.mxu0 %v380
    %1262 = vmatprep.subr.mxu0 %v385
    %1263 = vmatpush1.msra.mxu0 %v384
    %1264 = vmatprep.subr.mxu0 %v389
    %1265 = vmatpush1.msra.mxu0 %v388
    %1266 = vmatprep.subr.mxu0 %v393
    %1267 = vmatpush1.msra.mxu0 %v392
    %1268 = vmatprep.subr.mxu0 %v397
    %1269 = vmatpush1.msra.mxu0 %v396
    %1270 = vmatprep.subr.mxu0 %v401
    %1271 = vmatpush1.msra.mxu0 %v400
    %1272 = vmatprep.subr.mxu0 %v405
    %1273 = vmatpush1.msra.mxu0 %v404
    %1274 = vmatprep.subr.mxu0 %v409
    %1275 = vmatpush1.msra.mxu0 %v408
    %1276 = vmatprep.subr.mxu0 %v413
    %1277 = vmatpush1.msra.mxu0 %v412
    %1278 = vmatprep.subr.mxu0 %v417
    %1279 = vmatpush1.msra.mxu0 %v416
    %1280 = vmatprep.subr.mxu0 %v421
    %1281 = vmatpush1.msra.mxu0 %v420
    %1282 = vmatprep.subr.mxu0 %v425
    %1283 = vmatpush1.msra.mxu0 %v424
    %1284 = vmatprep.subr.mxu0 %v429
    %1285 = vmatpush1.msra.mxu0 %v428
    %1286 = vmatprep.subr.mxu0 0.0
    %1287 = vmatpush1.msra.mxu0 0.0
    %1288 = vmatprep.subr.mxu0 0.0
    %1289 = vmatpush1.msra.mxu0 0.0
    %1290 = vmatprep.subr.mxu0 0.0
    %1291 = vmatpush1.msra.mxu0 0.0
    %1292 = vmatprep.subr.mxu0 0.0
    %1293 = vmatpush1.msra.mxu0 0.0
    %1294 = vmatprep.subr.mxu0 0.0
    %1295 = vmatpush1.msra.mxu0 0.0
    %1296 = vmatprep.subr.mxu0 0.0
    %1297 = vmatpush1.msra.mxu0 0.0
    %1298 = vmatprep.subr.mxu0 0.0
    %1299 = vmatpush1.msra.mxu0 0.0
    %1300 = vmatprep.subr.mxu0 0.0
    %1301 = vmatpush1.msra.mxu0 0.0
    %1302 = vmatprep.subr.mxu0 0.0
    %1303 = vmatpush1.msra.mxu0 0.0
    %1304 = vmatprep.subr.mxu0 0.0
    %1305 = vmatpush1.msra.mxu0 0.0
    %1306 = vmatprep.subr.mxu0 0.0
    %1307 = vmatpush1.msra.mxu0 0.0
    %1308 = vmatprep.subr.mxu0 0.0
    %1309 = vmatpush1.msra.mxu0 0.0
    %1310 = vmatprep.subr.mxu0 0.0
    %1311 = vmatpush1.msra.mxu0 0.0
    %1312 = vmatprep.subr.mxu0 0.0
    %1313 = vmatpush1.msra.mxu0 0.0
    %1314 = vmatprep.subr.mxu0 0.0
    %1315 = vmatpush1.msra.mxu0 0.0
    %1316 = vmatprep.subr.mxu0 0.0
    %1317 = vmatpush1.msra.mxu0 0.0
    %1318 = vmatprep.mubr.f32.mxu0 0.0
    %1319 = vmatmul.mubr.f32.gmra.mrb[0].mxu0 %v1087
    %v1320 = vpop.f32.mrb[0].mxu0
    %v1321 = vadd.f32 0.0, %v1320
    %v1322 = vpop.f32.mrb[0].mxu0
    %v1323 = vadd.f32 0.0, %v1322
    %1324 = vdwg.mxu0
    %1325 = vmatprep.subr.mxu0 %v371
    %1326 = vmatpush1.msra.mxu0 %v370
    %1327 = vmatprep.subr.mxu0 %v375
    %1328 = vmatpush1.msra.mxu0 %v374
    %1329 = vmatprep.subr.mxu0 %v379
    %1330 = vmatpush1.msra.mxu0 %v378
    %1331 = vmatprep.subr.mxu0 %v383
    %1332 = vmatpush1.msra.mxu0 %v382
    %1333 = vmatprep.subr.mxu0 %v387
    %1334 = vmatpush1.msra.mxu0 %v386
    %1335 = vmatprep.subr.mxu0 %v391
    %1336 = vmatpush1.msra.mxu0 %v390
    %1337 = vmatprep.subr.mxu0 %v395
    %1338 = vmatpush1.msra.mxu0 %v394
    %1339 = vmatprep.subr.mxu0 %v399
    %1340 = vmatpush1.msra.mxu0 %v398
    %1341 = vmatprep.subr.mxu0 %v403
    %1342 = vmatpush1.msra.mxu0 %v402
    %1343 = vmatprep.subr.mxu0 %v407
    %1344 = vmatpush1.msra.mxu0 %v406
    %1345 = vmatprep.subr.mxu0 %v411
    %1346 = vmatpush1.msra.mxu0 %v410
    %1347 = vmatprep.subr.mxu0 %v415
    %1348 = vmatpush1.msra.mxu0 %v414
    %1349 = vmatprep.subr.mxu0 %v419
    %1350 = vmatpush1.msra.mxu0 %v418
    %1351 = vmatprep.subr.mxu0 %v423
    %1352 = vmatpush1.msra.mxu0 %v422
    %1353 = vmatprep.subr.mxu0 %v427
    %1354 = vmatpush1.msra.mxu0 %v426
    %1355 = vmatprep.subr.mxu0 %v431
    %1356 = vmatpush1.msra.mxu0 %v430
    %1357 = vmatprep.subr.mxu0 0.0
    %1358 = vmatpush1.msra.mxu0 0.0
    %1359 = vmatprep.subr.mxu0 0.0
    %1360 = vmatpush1.msra.mxu0 0.0
    %1361 = vmatprep.subr.mxu0 0.0
    %1362 = vmatpush1.msra.mxu0 0.0
    %1363 = vmatprep.subr.mxu0 0.0
    %1364 = vmatpush1.msra.mxu0 0.0
    %1365 = vmatprep.subr.mxu0 0.0
    %1366 = vmatpush1.msra.mxu0 0.0
    %1367 = vmatprep.subr.mxu0 0.0
    %1368 = vmatpush1.msra.mxu0 0.0
    %1369 = vmatprep.subr.mxu0 0.0
    %1370 = vmatpush1.msra.mxu0 0.0
    %1371 = vmatprep.subr.mxu0 0.0
    %1372 = vmatpush1.msra.mxu0 0.0
    %1373 = vmatprep.subr.mxu0 0.0
    %1374 = vmatpush1.msra.mxu0 0.0
    %1375 = vmatprep.subr.mxu0 0.0
    %1376 = vmatpush1.msra.mxu0 0.0
    %1377 = vmatprep.subr.mxu0 0.0
    %1378 = vmatpush1.msra.mxu0 0.0
    %1379 = vmatprep.subr.mxu0 0.0
    %1380 = vmatpush1.msra.mxu0 0.0
    %1381 = vmatprep.subr.mxu0 0.0
    %1382 = vmatpush1.msra.mxu0 0.0
    %1383 = vmatprep.subr.mxu0 0.0
    %1384 = vmatpush1.msra.mxu0 0.0
    %1385 = vmatprep.subr.mxu0 0.0
    %1386 = vmatpush1.msra.mxu0 0.0
    %1387 = vmatprep.subr.mxu0 0.0
    %1388 = vmatpush1.msra.mxu0 0.0
    %1389 = vmatprep.mubr.f32.mxu0 0.0
    %1390 = vmatmul.mubr.f32.gmra.mrb[0].mxu0 %v1087
    %v1391 = vpop.f32.mrb[0].mxu0
    %v1392 = vadd.f32 0.0, %v1391
    %v1393 = vpop.f32.mrb[0].mxu0
    %v1394 = vadd.f32 0.0, %v1393
    %1395 = vdwg.mxu0
    %v1396 = vadd.f32 %v221, %v1321
    %v1397 = vadd.f32 %v223, %v1323
    %v1398 = vadd.f32 %v334, %v1392
    %v1399 = vadd.f32 %v336, %v1394
    %v1400 = vxor.u32 %v1396, 2147483648
    %v1401 = vmul.f32 %v1400, 1.442695
    %v1402 = vpow.pop %v1401
    %v1403 = vadd.f32 %v1402, 1.0
    %v1404 = vrcp.pop %v1403
    %v1405 = vmul.f32 1.0, %v1404
    %v1406 = vxor.u32 %v1397, 2147483648
    %v1407 = vmul.f32 %v1406, 1.442695
    %v1408 = vpow.pop %v1407
    %v1409 = vadd.f32 %v1408, 1.0
    %v1410 = vrcp.pop %v1409
    %v1411 = vmul.f32 1.0, %v1410
    %v1412 = vtanh.pop %v1398
    %v1413 = vxor.u32 %v1399, 2147483648
    %v1414 = vmul.f32 %v1413, 1.442695
    %v1415 = vpow.pop %v1414
    %v1416 = vadd.f32 %v1415, 1.0
    %v1417 = vrcp.pop %v1416
    %v1418 = vmul.f32 1.0, %v1417
    %v1419 = vmul.f32 %v1411, %v1085
    %v1420 = vmul.f32 %v1405, %v1412
    %v1421 = vadd.f32 %v1419, %v1420
    %v1422 = vtanh.pop %v1421
    %v1423 = vmul.f32 %v1418, %v1422
    %1424 = vmatprep.subr.mxu0 %v433
    %1425 = vmatpush1.msra.mxu0 %v432
    %1426 = vmatprep.subr.mxu0 %v437
    %1427 = vmatpush1.msra.mxu0 %v436
    %1428 = vmatprep.subr.mxu0 %v441
    %1429 = vmatpush1.msra.mxu0 %v440
    %1430 = vmatprep.subr.mxu0 %v445
    %1431 = vmatpush1.msra.mxu0 %v444
    %1432 = vmatprep.subr.mxu0 %v449
    %1433 = vmatpush1.msra.mxu0 %v448
    %1434 = vmatprep.subr.mxu0 %v453
    %1435 = vmatpush1.msra.mxu0 %v452
    %1436 = vmatprep.subr.mxu0 %v457
    %1437 = vmatpush1.msra.mxu0 %v456
    %1438 = vmatprep.subr.mxu0 %v461
    %1439 = vmatpush1.msra.mxu0 %v460
    %1440 = vmatprep.subr.mxu0 %v465
    %1441 = vmatpush1.msra.mxu0 %v464
    %1442 = vmatprep.subr.mxu0 %v469
    %1443 = vmatpush1.msra.mxu0 %v468
    %1444 = vmatprep.subr.mxu0 %v473
    %1445 = vmatpush1.msra.mxu0 %v472
    %1446 = vmatprep.subr.mxu0 %v477
    %1447 = vmatpush1.msra.mxu0 %v476
    %1448 = vmatprep.subr.mxu0 %v481
    %1449 = vmatpush1.msra.mxu0 %v480
    %1450 = vmatprep.subr.mxu0 %v485
    %1451 = vmatpush1.msra.mxu0 %v484
    %1452 = vmatprep.subr.mxu0 %v489
    %1453 = vmatpush1.msra.mxu0 %v488
    %1454 = vmatprep.subr.mxu0 %v493
    %1455 = vmatpush1.msra.mxu0 %v492
    %1456 = vmatprep.subr.mxu0 %v497
    %1457 = vmatpush1.msra.mxu0 %v496
    %1458 = vmatprep.subr.mxu0 %v501
    %1459 = vmatpush1.msra.mxu0 %v500
    %1460 = vmatprep.subr.mxu0 %v505
    %1461 = vmatpush1.msra.mxu0 %v504
    %1462 = vmatprep.subr.mxu0 %v509
    %1463 = vmatpush1.msra.mxu0 %v508
    %1464 = vmatprep.subr.mxu0 %v513
    %1465 = vmatpush1.msra.mxu0 %v512
    %1466 = vmatprep.subr.mxu0 %v517
    %1467 = vmatpush1.msra.mxu0 %v516
    %1468 = vmatprep.subr.mxu0 %v521
    %1469 = vmatpush1.msra.mxu0 %v520
    %1470 = vmatprep.subr.mxu0 %v525
    %1471 = vmatpush1.msra.mxu0 %v524
    %1472 = vmatprep.subr.mxu0 %v529
    %1473 = vmatpush1.msra.mxu0 %v528
    %1474 = vmatprep.subr.mxu0 %v533
    %1475 = vmatpush1.msra.mxu0 %v532
    %1476 = vmatprep.subr.mxu0 %v537
    %1477 = vmatpush1.msra.mxu0 %v536
    %1478 = vmatprep.subr.mxu0 %v541
    %1479 = vmatpush1.msra.mxu0 %v540
    %1480 = vmatprep.subr.mxu0 %v545
    %1481 = vmatpush1.msra.mxu0 %v544
    %1482 = vmatprep.subr.mxu0 %v549
    %1483 = vmatpush1.msra.mxu0 %v548
    %1484 = vmatprep.subr.mxu0 %v553
    %1485 = vmatpush1.msra.mxu0 %v552
    %1486 = vmatprep.subr.mxu0 %v557
    %1487 = vmatpush1.msra.mxu0 %v556
    %1488 = vmatprep.mubr.f32.mxu0 %v1253
    %1489 = vmatmul.mubr.f32.gmra.mrb[0].mxu0 %v1423
    %v1490 = vpop.f32.mrb[0].mxu0
    %v1491 = vadd.f32 %v565, %v1490
    %v1492 = vpop.f32.mrb[0].mxu0
    %v1493 = vadd.f32 %v569, %v1492
    %1494 = vdwg.mxu0
    %1495 = vmatprep.subr.mxu0 %v435
    %1496 = vmatpush1.msra.mxu0 %v434
    %1497 = vmatprep.subr.mxu0 %v439
    %1498 = vmatpush1.msra.mxu0 %v438
    %1499 = vmatprep.subr.mxu0 %v443
    %1500 = vmatpush1.msra.mxu0 %v442
    %1501 = vmatprep.subr.mxu0 %v447
    %1502 = vmatpush1.msra.mxu0 %v446
    %1503 = vmatprep.subr.mxu0 %v451
    %1504 = vmatpush1.msra.mxu0 %v450
    %1505 = vmatprep.subr.mxu0 %v455
    %1506 = vmatpush1.msra.mxu0 %v454
    %1507 = vmatprep.subr.mxu0 %v459
    %1508 = vmatpush1.msra.mxu0 %v458
    %1509 = vmatprep.subr.mxu0 %v463
    %1510 = vmatpush1.msra.mxu0 %v462
    %1511 = vmatprep.subr.mxu0 %v467
    %1512 = vmatpush1.msra.mxu0 %v466
    %1513 = vmatprep.subr.mxu0 %v471
    %1514 = vmatpush1.msra.mxu0 %v470
    %1515 = vmatprep.subr.mxu0 %v475
    %1516 = vmatpush1.msra.mxu0 %v474
    %1517 = vmatprep.subr.mxu0 %v479
    %1518 = vmatpush1.msra.mxu0 %v478
    %1519 = vmatprep.subr.mxu0 %v483
    %1520 = vmatpush1.msra.mxu0 %v482
    %1521 = vmatprep.subr.mxu0 %v487
    %1522 = vmatpush1.msra.mxu0 %v486
    %1523 = vmatprep.subr.mxu0 %v491
    %1524 = vmatpush1.msra.mxu0 %v490
    %1525 = vmatprep.subr.mxu0 %v495
    %1526 = vmatpush1.msra.mxu0 %v494
    %1527 = vmatprep.subr.mxu0 %v499
    %1528 = vmatpush1.msra.mxu0 %v498
    %1529 = vmatprep.subr.mxu0 %v503
    %1530 = vmatpush1.msra.mxu0 %v502
    %1531 = vmatprep.subr.mxu0 %v507
    %1532 = vmatpush1.msra.mxu0 %v506
    %1533 = vmatprep.subr.mxu0 %v511
    %1534 = vmatpush1.msra.mxu0 %v510
    %1535 = vmatprep.subr.mxu0 %v515
    %1536 = vmatpush1.msra.mxu0 %v514
    %1537 = vmatprep.subr.mxu0 %v519
    %1538 = vmatpush1.msra.mxu0 %v518
    %1539 = vmatprep.subr.mxu0 %v523
    %1540 = vmatpush1.msra.mxu0 %v522
    %1541 = vmatprep.subr.mxu0 %v527
    %1542 = vmatpush1.msra.mxu0 %v526
    %1543 = vmatprep.subr.mxu0 %v531
    %1544 = vmatpush1.msra.mxu0 %v530
    %1545 = vmatprep.subr.mxu0 %v535
    %1546 = vmatpush1.msra.mxu0 %v534
    %1547 = vmatprep.subr.mxu0 %v539
    %1548 = vmatpush1.msra.mxu0 %v538
    %1549 = vmatprep.subr.mxu0 %v543
    %1550 = vmatpush1.msra.mxu0 %v542
    %1551 = vmatprep.subr.mxu0 %v547
    %1552 = vmatpush1.msra.mxu0 %v546
    %1553 = vmatprep.subr.mxu0 %v551
    %1554 = vmatpush1.msra.mxu0 %v550
    %1555 = vmatprep.subr.mxu0 %v555
    %1556 = vmatpush1.msra.mxu0 %v554
    %1557 = vmatprep.subr.mxu0 %v559
    %1558 = vmatpush1.msra.mxu0 %v558
    %1559 = vmatprep.mubr.f32.mxu0 %v1253
    %1560 = vmatmul.mubr.f32.gmra.mrb[0].mxu0 %v1423
    %v1561 = vpop.f32.mrb[0].mxu0
    %v1562 = vadd.f32 %v573, %v1561
    %v1563 = vpop.f32.mrb[0].mxu0
    %v1564 = vadd.f32 %v577, %v1563
    %1565 = vdwg.mxu0
    %v1566 = vxor.u32 %v1491, 2147483648
    %v1567 = vmul.f32 %v1566, 1.442695
    %v1568 = vpow.pop %v1567
    %v1569 = vadd.f32 %v1568, 1.0
    %v1570 = vrcp.pop %v1569
    %v1571 = vmul.f32 1.0, %v1570
    %v1572 = vxor.u32 %v1493, 2147483648
    %v1573 = vmul.f32 %v1572, 1.442695
    %v1574 = vpow.pop %v1573
    %v1575 = vadd.f32 %v1574, 1.0
    %v1576 = vrcp.pop %v1575
    %v1577 = vmul.f32 1.0, %v1576
    %v1578 = vtanh.pop %v1562
    %v1579 = vxor.u32 %v1564, 2147483648
    %v1580 = vmul.f32 %v1579, 1.442695
    %v1581 = vpow.pop %v1580
    %v1582 = vadd.f32 %v1581, 1.0
    %v1583 = vrcp.pop %v1582
    %v1584 = vmul.f32 1.0, %v1583
    %v1585 = vmul.f32 %v1577, %v1251
    %v1586 = vmul.f32 %v1571, %v1578
    %v1587 = vadd.f32 %v1585, %v1586
    %v1588 = vtanh.pop %v1587
    %v1589 = vmul.f32 %v1584, %v1588
    %1590 = vmatprep.subr.mxu0 %v369
    %1591 = vmatpush1.msra.mxu0 %v368
    %1592 = vmatprep.subr.mxu0 %v373
    %1593 = vmatpush1.msra.mxu0 %v372
    %1594 = vmatprep.subr.mxu0 %v377
    %1595 = vmatpush1.msra.mxu0 %v376
    %1596 = vmatprep.subr.mxu0 %v381
    %1597 = vmatpush1.msra.mxu0 %v380
    %1598 = vmatprep.subr.mxu0 %v385
    %1599 = vmatpush1.msra.mxu0 %v384
    %1600 = vmatprep.subr.mxu0 %v389
    %1601 = vmatpush1.msra.mxu0 %v388
    %1602 = vmatprep.subr.mxu0 %v393
    %1603 = vmatpush1.msra.mxu0 %v392
    %1604 = vmatprep.subr.mxu0 %v397
    %1605 = vmatpush1.msra.mxu0 %v396
    %1606 = vmatprep.subr.mxu0 %v401
    %1607 = vmatpush1.msra.mxu0 %v400
    %1608 = vmatprep.subr.mxu0 %v405
    %1609 = vmatpush1.msra.mxu0 %v404
    %1610 = vmatprep.subr.mxu0 %v409
    %1611 = vmatpush1.msra.mxu0 %v408
    %1612 = vmatprep.subr.mxu0 %v413
    %1613 = vmatpush1.msra.mxu0 %v412
    %1614 = vmatprep.subr.mxu0 %v417
    %1615 = vmatpush1.msra.mxu0 %v416
    %1616 = vmatprep.subr.mxu0 %v421
    %1617 = vmatpush1.msra.mxu0 %v420
    %1618 = vmatprep.subr.mxu0 %v425
    %1619 = vmatpush1.msra.mxu0 %v424
    %1620 = vmatprep.subr.mxu0 %v429
    %1621 = vmatpush1.msra.mxu0 %v428
    %1622 = vmatprep.subr.mxu0 0.0
    %1623 = vmatpush1.msra.mxu0 0.0
    %1624 = vmatprep.subr.mxu0 0.0
    %1625 = vmatpush1.msra.mxu0 0.0
    %1626 = vmatprep.subr.mxu0 0.0
    %1627 = vmatpush1.msra.mxu0 0.0
    %1628 = vmatprep.subr.mxu0 0.0
    %1629 = vmatpush1.msra.mxu0 0.0
    %1630 = vmatprep.subr.mxu0 0.0
    %1631 = vmatpush1.msra.mxu0 0.0
    %1632 = vmatprep.subr.mxu0 0.0
    %1633 = vmatpush1.msra.mxu0 0.0
    %1634 = vmatprep.subr.mxu0 0.0
    %1635 = vmatpush1.msra.mxu0 0.0
    %1636 = vmatprep.subr.mxu0 0.0
    %1637 = vmatpush1.msra.mxu0 0.0
    %1638 = vmatprep.subr.mxu0 0.0
    %1639 = vmatpush1.msra.mxu0 0.0
    %1640 = vmatprep.subr.mxu0 0.0
    %1641 = vmatpush1.msra.mxu0 0.0
    %1642 = vmatprep.subr.mxu0 0.0
    %1643 = vmatpush1.msra.mxu0 0.0
    %1644 = vmatprep.subr.mxu0 0.0
    %1645 = vmatpush1.msra.mxu0 0.0
    %1646 = vmatprep.subr.mxu0 0.0
    %1647 = vmatpush1.msra.mxu0 0.0
    %1648 = vmatprep.subr.mxu0 0.0
    %1649 = vmatpush1.msra.mxu0 0.0
    %1650 = vmatprep.subr.mxu0 0.0
    %1651 = vmatpush1.msra.mxu0 0.0
    %1652 = vmatprep.subr.mxu0 0.0
    %1653 = vmatpush1.msra.mxu0 0.0
    %1654 = vmatprep.mubr.f32.mxu0 0.0
    %1655 = vmatmul.mubr.f32.gmra.mrb[0].mxu0 %v1423
    %v1656 = vpop.f32.mrb[0].mxu0
    %v1657 = vadd.f32 0.0, %v1656
    %v1658 = vpop.f32.mrb[0].mxu0
    %v1659 = vadd.f32 0.0, %v1658
    %1660 = vdwg.mxu0
    %1661 = vmatprep.subr.mxu0 %v371
    %1662 = vmatpush1.msra.mxu0 %v370
    %1663 = vmatprep.subr.mxu0 %v375
    %1664 = vmatpush1.msra.mxu0 %v374
    %1665 = vmatprep.subr.mxu0 %v379
    %1666 = vmatpush1.msra.mxu0 %v378
    %1667 = vmatprep.subr.mxu0 %v383
    %1668 = vmatpush1.msra.mxu0 %v382
    %1669 = vmatprep.subr.mxu0 %v387
    %1670 = vmatpush1.msra.mxu0 %v386
    %1671 = vmatprep.subr.mxu0 %v391
    %1672 = vmatpush1.msra.mxu0 %v390
    %1673 = vmatprep.subr.mxu0 %v395
    %1674 = vmatpush1.msra.mxu0 %v394
    %1675 = vmatprep.subr.mxu0 %v399
    %1676 = vmatpush1.msra.mxu0 %v398
    %1677 = vmatprep.subr.mxu0 %v403
    %1678 = vmatpush1.msra.mxu0 %v402
    %1679 = vmatprep.subr.mxu0 %v407
    %1680 = vmatpush1.msra.mxu0 %v406
    %1681 = vmatprep.subr.mxu0 %v411
    %1682 = vmatpush1.msra.mxu0 %v410
    %1683 = vmatprep.subr.mxu0 %v415
    %1684 = vmatpush1.msra.mxu0 %v414
    %1685 = vmatprep.subr.mxu0 %v419
    %1686 = vmatpush1.msra.mxu0 %v418
    %1687 = vmatprep.subr.mxu0 %v423
    %1688 = vmatpush1.msra.mxu0 %v422
    %1689 = vmatprep.subr.mxu0 %v427
    %1690 = vmatpush1.msra.mxu0 %v426
    %1691 = vmatprep.subr.mxu0 %v431
    %1692 = vmatpush1.msra.mxu0 %v430
    %1693 = vmatprep.subr.mxu0 0.0
    %1694 = vmatpush1.msra.mxu0 0.0
    %1695 = vmatprep.subr.mxu0 0.0
    %1696 = vmatpush1.msra.mxu0 0.0
    %1697 = vmatprep.subr.mxu0 0.0
    %1698 = vmatpush1.msra.mxu0 0.0
    %1699 = vmatprep.subr.mxu0 0.0
    %1700 = vmatpush1.msra.mxu0 0.0
    %1701 = vmatprep.subr.mxu0 0.0
    %1702 = vmatpush1.msra.mxu0 0.0
    %1703 = vmatprep.subr.mxu0 0.0
    %1704 = vmatpush1.msra.mxu0 0.0
    %1705 = vmatprep.subr.mxu0 0.0
    %1706 = vmatpush1.msra.mxu0 0.0
    %1707 = vmatprep.subr.mxu0 0.0
    %1708 = vmatpush1.msra.mxu0 0.0
    %1709 = vmatprep.subr.mxu0 0.0
    %1710 = vmatpush1.msra.mxu0 0.0
    %1711 = vmatprep.subr.mxu0 0.0
    %1712 = vmatpush1.msra.mxu0 0.0
    %1713 = vmatprep.subr.mxu0 0.0
    %1714 = vmatpush1.msra.mxu0 0.0
    %1715 = vmatprep.subr.mxu0 0.0
    %1716 = vmatpush1.msra.mxu0 0.0
    %1717 = vmatprep.subr.mxu0 0.0
    %1718 = vmatpush1.msra.mxu0 0.0
    %1719 = vmatprep.subr.mxu0 0.0
    %1720 = vmatpush1.msra.mxu0 0.0
    %1721 = vmatprep.subr.mxu0 0.0
    %1722 = vmatpush1.msra.mxu0 0.0
    %1723 = vmatprep.subr.mxu0 0.0
    %1724 = vmatpush1.msra.mxu0 0.0
    %1725 = vmatprep.mubr.f32.mxu0 0.0
    %1726 = vmatmul.mubr.f32.gmra.mrb[0].mxu0 %v1423
    %v1727 = vpop.f32.mrb[0].mxu0
    %v1728 = vadd.f32 0.0, %v1727
    %v1729 = vpop.f32.mrb[0].mxu0
    %v1730 = vadd.f32 0.0, %v1729
    %1731 = vdwg.mxu0
    %v1732 = vadd.f32 %v227, %v1657
    %v1733 = vadd.f32 %v229, %v1659
    %v1734 = vadd.f32 %v340, %v1728
    %v1735 = vadd.f32 %v342, %v1730
    %v1736 = vxor.u32 %v1732, 2147483648
    %v1737 = vmul.f32 %v1736, 1.442695
    %v1738 = vpow.pop %v1737
    %v1739 = vadd.f32 %v1738, 1.0
    %v1740 = vrcp.pop %v1739
    %v1741 = vmul.f32 1.0, %v1740
    %v1742 = vxor.u32 %v1733, 2147483648
    %v1743 = vmul.f32 %v1742, 1.442695
    %v1744 = vpow.pop %v1743
    %v1745 = vadd.f32 %v1744, 1.0
    %v1746 = vrcp.pop %v1745
    %v1747 = vmul.f32 1.0, %v1746
    %v1748 = vtanh.pop %v1734
    %v1749 = vxor.u32 %v1735, 2147483648
    %v1750 = vmul.f32 %v1749, 1.442695
    %v1751 = vpow.pop %v1750
    %v1752 = vadd.f32 %v1751, 1.0
    %v1753 = vrcp.pop %v1752
    %v1754 = vmul.f32 1.0, %v1753
    %v1755 = vmul.f32 %v1747, %v1421
    %v1756 = vmul.f32 %v1741, %v1748
    %v1757 = vadd.f32 %v1755, %v1756
    %v1758 = vtanh.pop %v1757
    %v1759 = vmul.f32 %v1754, %v1758
    %1760 = vmatprep.subr.mxu0 %v433
    %1761 = vmatpush1.msra.mxu0 %v432
    %1762 = vmatprep.subr.mxu0 %v437
    %1763 = vmatpush1.msra.mxu0 %v436
    %1764 = vmatprep.subr.mxu0 %v441
    %1765 = vmatpush1.msra.mxu0 %v440
    %1766 = vmatprep.subr.mxu0 %v445
    %1767 = vmatpush1.msra.mxu0 %v444
    %1768 = vmatprep.subr.mxu0 %v449
    %1769 = vmatpush1.msra.mxu0 %v448
    %1770 = vmatprep.subr.mxu0 %v453
    %1771 = vmatpush1.msra.mxu0 %v452
    %1772 = vmatprep.subr.mxu0 %v457
    %1773 = vmatpush1.msra.mxu0 %v456
    %1774 = vmatprep.subr.mxu0 %v461
    %1775 = vmatpush1.msra.mxu0 %v460
    %1776 = vmatprep.subr.mxu0 %v465
    %1777 = vmatpush1.msra.mxu0 %v464
    %1778 = vmatprep.subr.mxu0 %v469
    %1779 = vmatpush1.msra.mxu0 %v468
    %1780 = vmatprep.subr.mxu0 %v473
    %1781 = vmatpush1.msra.mxu0 %v472
    %1782 = vmatprep.subr.mxu0 %v477
    %1783 = vmatpush1.msra.mxu0 %v476
    %1784 = vmatprep.subr.mxu0 %v481
    %1785 = vmatpush1.msra.mxu0 %v480
    %1786 = vmatprep.subr.mxu0 %v485
    %1787 = vmatpush1.msra.mxu0 %v484
    %1788 = vmatprep.subr.mxu0 %v489
    %1789 = vmatpush1.msra.mxu0 %v488
    %1790 = vmatprep.subr.mxu0 %v493
    %1791 = vmatpush1.msra.mxu0 %v492
    %1792 = vmatprep.subr.mxu0 %v497
    %1793 = vmatpush1.msra.mxu0 %v496
    %1794 = vmatprep.subr.mxu0 %v501
    %1795 = vmatpush1.msra.mxu0 %v500
    %1796 = vmatprep.subr.mxu0 %v505
    %1797 = vmatpush1.msra.mxu0 %v504
    %1798 = vmatprep.subr.mxu0 %v509
    %1799 = vmatpush1.msra.mxu0 %v508
    %1800 = vmatprep.subr.mxu0 %v513
    %1801 = vmatpush1.msra.mxu0 %v512
    %1802 = vmatprep.subr.mxu0 %v517
    %1803 = vmatpush1.msra.mxu0 %v516
    %1804 = vmatprep.subr.mxu0 %v521
    %1805 = vmatpush1.msra.mxu0 %v520
    %1806 = vmatprep.subr.mxu0 %v525
    %1807 = vmatpush1.msra.mxu0 %v524
    %1808 = vmatprep.subr.mxu0 %v529
    %1809 = vmatpush1.msra.mxu0 %v528
    %1810 = vmatprep.subr.mxu0 %v533
    %1811 = vmatpush1.msra.mxu0 %v532
    %1812 = vmatprep.subr.mxu0 %v537
    %1813 = vmatpush1.msra.mxu0 %v536
    %1814 = vmatprep.subr.mxu0 %v541
    %1815 = vmatpush1.msra.mxu0 %v540
    %1816 = vmatprep.subr.mxu0 %v545
    %1817 = vmatpush1.msra.mxu0 %v544
    %1818 = vmatprep.subr.mxu0 %v549
    %1819 = vmatpush1.msra.mxu0 %v548
    %1820 = vmatprep.subr.mxu0 %v553
    %1821 = vmatpush1.msra.mxu0 %v552
    %1822 = vmatprep.subr.mxu0 %v557
    %1823 = vmatpush1.msra.mxu0 %v556
    %1824 = vmatprep.mubr.f32.mxu0 %v1589
    %1825 = vmatmul.mubr.f32.gmra.mrb[0].mxu0 %v1759
    %v1826 = vpop.f32.mrb[0].mxu0
    %v1827 = vadd.f32 %v565, %v1826
    %v1828 = vpop.f32.mrb[0].mxu0
    %v1829 = vadd.f32 %v569, %v1828
    %1830 = vdwg.mxu0
    %1831 = vmatprep.subr.mxu0 %v435
    %1832 = vmatpush1.msra.mxu0 %v434
    %1833 = vmatprep.subr.mxu0 %v439
    %1834 = vmatpush1.msra.mxu0 %v438
    %1835 = vmatprep.subr.mxu0 %v443
    %1836 = vmatpush1.msra.mxu0 %v442
    %1837 = vmatprep.subr.mxu0 %v447
    %1838 = vmatpush1.msra.mxu0 %v446
    %1839 = vmatprep.subr.mxu0 %v451
    %1840 = vmatpush1.msra.mxu0 %v450
    %1841 = vmatprep.subr.mxu0 %v455
    %1842 = vmatpush1.msra.mxu0 %v454
    %1843 = vmatprep.subr.mxu0 %v459
    %1844 = vmatpush1.msra.mxu0 %v458
    %1845 = vmatprep.subr.mxu0 %v463
    %1846 = vmatpush1.msra.mxu0 %v462
    %1847 = vmatprep.subr.mxu0 %v467
    %1848 = vmatpush1.msra.mxu0 %v466
    %1849 = vmatprep.subr.mxu0 %v471
    %1850 = vmatpush1.msra.mxu0 %v470
    %1851 = vmatprep.subr.mxu0 %v475
    %1852 = vmatpush1.msra.mxu0 %v474
    %1853 = vmatprep.subr.mxu0 %v479
    %1854 = vmatpush1.msra.mxu0 %v478
    %1855 = vmatprep.subr.mxu0 %v483
    %1856 = vmatpush1.msra.mxu0 %v482
    %1857 = vmatprep.subr.mxu0 %v487
    %1858 = vmatpush1.msra.mxu0 %v486
    %1859 = vmatprep.subr.mxu0 %v491
    %1860 = vmatpush1.msra.mxu0 %v490
    %1861 = vmatprep.subr.mxu0 %v495
    %1862 = vmatpush1.msra.mxu0 %v494
    %1863 = vmatprep.subr.mxu0 %v499
    %1864 = vmatpush1.msra.mxu0 %v498
    %1865 = vmatprep.subr.mxu0 %v503
    %1866 = vmatpush1.msra.mxu0 %v502
    %1867 = vmatprep.subr.mxu0 %v507
    %1868 = vmatpush1.msra.mxu0 %v506
    %1869 = vmatprep.subr.mxu0 %v511
    %1870 = vmatpush1.msra.mxu0 %v510
    %1871 = vmatprep.subr.mxu0 %v515
    %1872 = vmatpush1.msra.mxu0 %v514
    %1873 = vmatprep.subr.mxu0 %v519
    %1874 = vmatpush1.msra.mxu0 %v518
    %1875 = vmatprep.subr.mxu0 %v523
    %1876 = vmatpush1.msra.mxu0 %v522
    %1877 = vmatprep.subr.mxu0 %v527
    %1878 = vmatpush1.msra.mxu0 %v526
    %1879 = vmatprep.subr.mxu0 %v531
    %1880 = vmatpush1.msra.mxu0 %v530
    %1881 = vmatprep.subr.mxu0 %v535
    %1882 = vmatpush1.msra.mxu0 %v534
    %1883 = vmatprep.subr.mxu0 %v539
    %1884 = vmatpush1.msra.mxu0 %v538
    %1885 = vmatprep.subr.mxu0 %v543
    %1886 = vmatpush1.msra.mxu0 %v542
    %1887 = vmatprep.subr.mxu0 %v547
    %1888 = vmatpush1.msra.mxu0 %v546
    %1889 = vmatprep.subr.mxu0 %v551
    %1890 = vmatpush1.msra.mxu0 %v550
    %1891 = vmatprep.subr.mxu0 %v555
    %1892 = vmatpush1.msra.mxu0 %v554
    %1893 = vmatprep.subr.mxu0 %v559
    %1894 = vmatpush1.msra.mxu0 %v558
    %1895 = vmatprep.mubr.f32.mxu0 %v1589
    %1896 = vmatmul.mubr.f32.gmra.mrb[0].mxu0 %v1759
    %v1897 = vpop.f32.mrb[0].mxu0
    %v1898 = vadd.f32 %v573, %v1897
    %v1899 = vpop.f32.mrb[0].mxu0
    %v1900 = vadd.f32 %v577, %v1899
    %1901 = vdwg.mxu0
    %v1902 = vxor.u32 %v1827, 2147483648
    %v1903 = vmul.f32 %v1902, 1.442695
    %v1904 = vpow.pop %v1903
    %v1905 = vadd.f32 %v1904, 1.0
    %v1906 = vrcp.pop %v1905
    %v1907 = vmul.f32 1.0, %v1906
    %v1908 = vxor.u32 %v1829, 2147483648
    %v1909 = vmul.f32 %v1908, 1.442695
    %v1910 = vpow.pop %v1909
    %v1911 = vadd.f32 %v1910, 1.0
    %v1912 = vrcp.pop %v1911
    %v1913 = vmul.f32 1.0, %v1912
    %v1914 = vtanh.pop %v1898
    %v1915 = vxor.u32 %v1900, 2147483648
    %v1916 = vmul.f32 %v1915, 1.442695
    %v1917 = vpow.pop %v1916
    %v1918 = vadd.f32 %v1917, 1.0
    %v1919 = vrcp.pop %v1918
    %v1920 = vmul.f32 1.0, %v1919
    %v1921 = vmul.f32 %v1913, %v1587
    %v1922 = vmul.f32 %v1907, %v1914
    %v1923 = vadd.f32 %v1921, %v1922
    %v1924 = vtanh.pop %v1923
    %v1925 = vmul.f32 %v1920, %v1924
    %1926 = vmatprep.subr.mxu0 %v369
    %1927 = vmatpush1.msra.mxu0 %v368
    %1928 = vmatprep.subr.mxu0 %v373
    %1929 = vmatpush1.msra.mxu0 %v372
    %1930 = vmatprep.subr.mxu0 %v377
    %1931 = vmatpush1.msra.mxu0 %v376
    %1932 = vmatprep.subr.mxu0 %v381
    %1933 = vmatpush1.msra.mxu0 %v380
    %1934 = vmatprep.subr.mxu0 %v385
    %1935 = vmatpush1.msra.mxu0 %v384
    %1936 = vmatprep.subr.mxu0 %v389
    %1937 = vmatpush1.msra.mxu0 %v388
    %1938 = vmatprep.subr.mxu0 %v393
    %1939 = vmatpush1.msra.mxu0 %v392
    %1940 = vmatprep.subr.mxu0 %v397
    %1941 = vmatpush1.msra.mxu0 %v396
    %1942 = vmatprep.subr.mxu0 %v401
    %1943 = vmatpush1.msra.mxu0 %v400
    %1944 = vmatprep.subr.mxu0 %v405
    %1945 = vmatpush1.msra.mxu0 %v404
    %1946 = vmatprep.subr.mxu0 %v409
    %1947 = vmatpush1.msra.mxu0 %v408
    %1948 = vmatprep.subr.mxu0 %v413
    %1949 = vmatpush1.msra.mxu0 %v412
    %1950 = vmatprep.subr.mxu0 %v417
    %1951 = vmatpush1.msra.mxu0 %v416
    %1952 = vmatprep.subr.mxu0 %v421
    %1953 = vmatpush1.msra.mxu0 %v420
    %1954 = vmatprep.subr.mxu0 %v425
    %1955 = vmatpush1.msra.mxu0 %v424
    %1956 = vmatprep.subr.mxu0 %v429
    %1957 = vmatpush1.msra.mxu0 %v428
    %1958 = vmatprep.subr.mxu0 0.0
    %1959 = vmatpush1.msra.mxu0 0.0
    %1960 = vmatprep.subr.mxu0 0.0
    %1961 = vmatpush1.msra.mxu0 0.0
    %1962 = vmatprep.subr.mxu0 0.0
    %1963 = vmatpush1.msra.mxu0 0.0
    %1964 = vmatprep.subr.mxu0 0.0
    %1965 = vmatpush1.msra.mxu0 0.0
    %1966 = vmatprep.subr.mxu0 0.0
    %1967 = vmatpush1.msra.mxu0 0.0
    %1968 = vmatprep.subr.mxu0 0.0
    %1969 = vmatpush1.msra.mxu0 0.0
    %1970 = vmatprep.subr.mxu0 0.0
    %1971 = vmatpush1.msra.mxu0 0.0
    %1972 = vmatprep.subr.mxu0 0.0
    %1973 = vmatpush1.msra.mxu0 0.0
    %1974 = vmatprep.subr.mxu0 0.0
    %1975 = vmatpush1.msra.mxu0 0.0
    %1976 = vmatprep.subr.mxu0 0.0
    %1977 = vmatpush1.msra.mxu0 0.0
    %1978 = vmatprep.subr.mxu0 0.0
    %1979 = vmatpush1.msra.mxu0 0.0
    %1980 = vmatprep.subr.mxu0 0.0
    %1981 = vmatpush1.msra.mxu0 0.0
    %1982 = vmatprep.subr.mxu0 0.0
    %1983 = vmatpush1.msra.mxu0 0.0
    %1984 = vmatprep.subr.mxu0 0.0
    %1985 = vmatpush1.msra.mxu0 0.0
    %1986 = vmatprep.subr.mxu0 0.0
    %1987 = vmatpush1.msra.mxu0 0.0
    %1988 = vmatprep.subr.mxu0 0.0
    %1989 = vmatpush1.msra.mxu0 0.0
    %1990 = vmatprep.mubr.f32.mxu0 0.0
    %1991 = vmatmul.mubr.f32.gmra.mrb[0].mxu0 %v1759
    %v1992 = vpop.f32.mrb[0].mxu0
    %v1993 = vadd.f32 0.0, %v1992
    %v1994 = vpop.f32.mrb[0].mxu0
    %v1995 = vadd.f32 0.0, %v1994
    %1996 = vdwg.mxu0
    %1997 = vmatprep.subr.mxu0 %v371
    %1998 = vmatpush1.msra.mxu0 %v370
    %1999 = vmatprep.subr.mxu0 %v375
    %2000 = vmatpush1.msra.mxu0 %v374
    %2001 = vmatprep.subr.mxu0 %v379
    %2002 = vmatpush1.msra.mxu0 %v378
    %2003 = vmatprep.subr.mxu0 %v383
    %2004 = vmatpush1.msra.mxu0 %v382
    %2005 = vmatprep.subr.mxu0 %v387
    %2006 = vmatpush1.msra.mxu0 %v386
    %2007 = vmatprep.subr.mxu0 %v391
    %2008 = vmatpush1.msra.mxu0 %v390
    %2009 = vmatprep.subr.mxu0 %v395
    %2010 = vmatpush1.msra.mxu0 %v394
    %2011 = vmatprep.subr.mxu0 %v399
    %2012 = vmatpush1.msra.mxu0 %v398
    %2013 = vmatprep.subr.mxu0 %v403
    %2014 = vmatpush1.msra.mxu0 %v402
    %2015 = vmatprep.subr.mxu0 %v407
    %2016 = vmatpush1.msra.mxu0 %v406
    %2017 = vmatprep.subr.mxu0 %v411
    %2018 = vmatpush1.msra.mxu0 %v410
    %2019 = vmatprep.subr.mxu0 %v415
    %2020 = vmatpush1.msra.mxu0 %v414
    %2021 = vmatprep.subr.mxu0 %v419
    %2022 = vmatpush1.msra.mxu0 %v418
    %2023 = vmatprep.subr.mxu0 %v423
    %2024 = vmatpush1.msra.mxu0 %v422
    %2025 = vmatprep.subr.mxu0 %v427
    %2026 = vmatpush1.msra.mxu0 %v426
    %2027 = vmatprep.subr.mxu0 %v431
    %2028 = vmatpush1.msra.mxu0 %v430
    %2029 = vmatprep.subr.mxu0 0.0
    %2030 = vmatpush1.msra.mxu0 0.0
    %2031 = vmatprep.subr.mxu0 0.0
    %2032 = vmatpush1.msra.mxu0 0.0
    %2033 = vmatprep.subr.mxu0 0.0
    %2034 = vmatpush1.msra.mxu0 0.0
    %2035 = vmatprep.subr.mxu0 0.0
    %2036 = vmatpush1.msra.mxu0 0.0
    %2037 = vmatprep.subr.mxu0 0.0
    %2038 = vmatpush1.msra.mxu0 0.0
    %2039 = vmatprep.subr.mxu0 0.0
    %2040 = vmatpush1.msra.mxu0 0.0
    %2041 = vmatprep.subr.mxu0 0.0
    %2042 = vmatpush1.msra.mxu0 0.0
    %2043 = vmatprep.subr.mxu0 0.0
    %2044 = vmatpush1.msra.mxu0 0.0
    %2045 = vmatprep.subr.mxu0 0.0
    %2046 = vmatpush1.msra.mxu0 0.0
    %2047 = vmatprep.subr.mxu0 0.0
    %2048 = vmatpush1.msra.mxu0 0.0
    %2049 = vmatprep.subr.mxu0 0.0
    %2050 = vmatpush1.msra.mxu0 0.0
    %2051 = vmatprep.subr.mxu0 0.0
    %2052 = vmatpush1.msra.mxu0 0.0
    %2053 = vmatprep.subr.mxu0 0.0
    %2054 = vmatpush1.msra.mxu0 0.0
    %2055 = vmatprep.subr.mxu0 0.0
    %2056 = vmatpush1.msra.mxu0 0.0
    %2057 = vmatprep.subr.mxu0 0.0
    %2058 = vmatpush1.msra.mxu0 0.0
    %2059 = vmatprep.subr.mxu0 0.0
    %2060 = vmatpush1.msra.mxu0 0.0
    %2061 = vmatprep.mubr.f32.mxu0 0.0
    %2062 = vmatmul.mubr.f32.gmra.mrb[0].mxu0 %v1759
    %v2063 = vpop.f32.mrb[0].mxu0
    %v2064 = vadd.f32 0.0, %v2063
    %v2065 = vpop.f32.mrb[0].mxu0
    %v2066 = vadd.f32 0.0, %v2065
    %2067 = vdwg.mxu0
    %v2068 = vadd.f32 %v233, %v1993
    %v2069 = vadd.f32 %v235, %v1995
    %v2070 = vadd.f32 %v346, %v2064
    %v2071 = vadd.f32 %v348, %v2066
    %v2072 = vxor.u32 %v2068, 2147483648
    %v2073 = vmul.f32 %v2072, 1.442695
    %v2074 = vpow.pop %v2073
    %v2075 = vadd.f32 %v2074, 1.0
    %v2076 = vrcp.pop %v2075
    %v2077 = vmul.f32 1.0, %v2076
    %v2078 = vxor.u32 %v2069, 2147483648
    %v2079 = vmul.f32 %v2078, 1.442695
    %v2080 = vpow.pop %v2079
    %v2081 = vadd.f32 %v2080, 1.0
    %v2082 = vrcp.pop %v2081
    %v2083 = vmul.f32 1.0, %v2082
    %v2084 = vtanh.pop %v2070
    %v2085 = vxor.u32 %v2071, 2147483648
    %v2086 = vmul.f32 %v2085, 1.442695
    %v2087 = vpow.pop %v2086
    %v2088 = vadd.f32 %v2087, 1.0
    %v2089 = vrcp.pop %v2088
    %v2090 = vmul.f32 1.0, %v2089
    %v2091 = vmul.f32 %v2083, %v1757
    %v2092 = vmul.f32 %v2077, %v2084
    %v2093 = vadd.f32 %v2091, %v2092
    %v2094 = vtanh.pop %v2093
    %v2095 = vmul.f32 %v2090, %v2094
    %2096 = vmatprep.subr.mxu0 %v433
    %2097 = vmatpush1.msra.mxu0 %v432
    %2098 = vmatprep.subr.mxu0 %v437
    %2099 = vmatpush1.msra.mxu0 %v436
    %2100 = vmatprep.subr.mxu0 %v441
    %2101 = vmatpush1.msra.mxu0 %v440
    %2102 = vmatprep.subr.mxu0 %v445
    %2103 = vmatpush1.msra.mxu0 %v444
    %2104 = vmatprep.subr.mxu0 %v449
    %2105 = vmatpush1.msra.mxu0 %v448
    %2106 = vmatprep.subr.mxu0 %v453
    %2107 = vmatpush1.msra.mxu0 %v452
    %2108 = vmatprep.subr.mxu0 %v457
    %2109 = vmatpush1.msra.mxu0 %v456
    %2110 = vmatprep.subr.mxu0 %v461
    %2111 = vmatpush1.msra.mxu0 %v460
    %2112 = vmatprep.subr.mxu0 %v465
    %2113 = vmatpush1.msra.mxu0 %v464
    %2114 = vmatprep.subr.mxu0 %v469
    %2115 = vmatpush1.msra.mxu0 %v468
    %2116 = vmatprep.subr.mxu0 %v473
    %2117 = vmatpush1.msra.mxu0 %v472
    %2118 = vmatprep.subr.mxu0 %v477
    %2119 = vmatpush1.msra.mxu0 %v476
    %2120 = vmatprep.subr.mxu0 %v481
    %2121 = vmatpush1.msra.mxu0 %v480
    %2122 = vmatprep.subr.mxu0 %v485
    %2123 = vmatpush1.msra.mxu0 %v484
    %2124 = vmatprep.subr.mxu0 %v489
    %2125 = vmatpush1.msra.mxu0 %v488
    %2126 = vmatprep.subr.mxu0 %v493
    %2127 = vmatpush1.msra.mxu0 %v492
    %2128 = vmatprep.subr.mxu0 %v497
    %2129 = vmatpush1.msra.mxu0 %v496
    %2130 = vmatprep.subr.mxu0 %v501
    %2131 = vmatpush1.msra.mxu0 %v500
    %2132 = vmatprep.subr.mxu0 %v505
    %2133 = vmatpush1.msra.mxu0 %v504
    %2134 = vmatprep.subr.mxu0 %v509
    %2135 = vmatpush1.msra.mxu0 %v508
    %2136 = vmatprep.subr.mxu0 %v513
    %2137 = vmatpush1.msra.mxu0 %v512
    %2138 = vmatprep.subr.mxu0 %v517
    %2139 = vmatpush1.msra.mxu0 %v516
    %2140 = vmatprep.subr.mxu0 %v521
    %2141 = vmatpush1.msra.mxu0 %v520
    %2142 = vmatprep.subr.mxu0 %v525
    %2143 = vmatpush1.msra.mxu0 %v524
    %2144 = vmatprep.subr.mxu0 %v529
    %2145 = vmatpush1.msra.mxu0 %v528
    %2146 = vmatprep.subr.mxu0 %v533
    %2147 = vmatpush1.msra.mxu0 %v532
    %2148 = vmatprep.subr.mxu0 %v537
    %2149 = vmatpush1.msra.mxu0 %v536
    %2150 = vmatprep.subr.mxu0 %v541
    %2151 = vmatpush1.msra.mxu0 %v540
    %2152 = vmatprep.subr.mxu0 %v545
    %2153 = vmatpush1.msra.mxu0 %v544
    %2154 = vmatprep.subr.mxu0 %v549
    %2155 = vmatpush1.msra.mxu0 %v548
    %2156 = vmatprep.subr.mxu0 %v553
    %2157 = vmatpush1.msra.mxu0 %v552
    %2158 = vmatprep.subr.mxu0 %v557
    %2159 = vmatpush1.msra.mxu0 %v556
    %2160 = vmatprep.mubr.f32.mxu0 %v1925
    %2161 = vmatmul.mubr.f32.gmra.mrb[0].mxu0 %v2095
    %v2162 = vpop.f32.mrb[0].mxu0
    %v2163 = vadd.f32 %v565, %v2162
    %v2164 = vpop.f32.mrb[0].mxu0
    %v2165 = vadd.f32 %v569, %v2164
    %2166 = vdwg.mxu0
    %2167 = vmatprep.subr.mxu0 %v435
    %2168 = vmatpush1.msra.mxu0 %v434
    %2169 = vmatprep.subr.mxu0 %v439
    %2170 = vmatpush1.msra.mxu0 %v438
    %2171 = vmatprep.subr.mxu0 %v443
    %2172 = vmatpush1.msra.mxu0 %v442
    %2173 = vmatprep.subr.mxu0 %v447
    %2174 = vmatpush1.msra.mxu0 %v446
    %2175 = vmatprep.subr.mxu0 %v451
    %2176 = vmatpush1.msra.mxu0 %v450
    %2177 = vmatprep.subr.mxu0 %v455
    %2178 = vmatpush1.msra.mxu0 %v454
    %2179 = vmatprep.subr.mxu0 %v459
    %2180 = vmatpush1.msra.mxu0 %v458
    %2181 = vmatprep.subr.mxu0 %v463
    %2182 = vmatpush1.msra.mxu0 %v462
    %2183 = vmatprep.subr.mxu0 %v467
    %2184 = vmatpush1.msra.mxu0 %v466
    %2185 = vmatprep.subr.mxu0 %v471
    %2186 = vmatpush1.msra.mxu0 %v470
    %2187 = vmatprep.subr.mxu0 %v475
    %2188 = vmatpush1.msra.mxu0 %v474
    %2189 = vmatprep.subr.mxu0 %v479
    %2190 = vmatpush1.msra.mxu0 %v478
    %2191 = vmatprep.subr.mxu0 %v483
    %2192 = vmatpush1.msra.mxu0 %v482
    %2193 = vmatprep.subr.mxu0 %v487
    %2194 = vmatpush1.msra.mxu0 %v486
    %2195 = vmatprep.subr.mxu0 %v491
    %2196 = vmatpush1.msra.mxu0 %v490
    %2197 = vmatprep.subr.mxu0 %v495
    %2198 = vmatpush1.msra.mxu0 %v494
    %2199 = vmatprep.subr.mxu0 %v499
    %2200 = vmatpush1.msra.mxu0 %v498
    %2201 = vmatprep.subr.mxu0 %v503
    %2202 = vmatpush1.msra.mxu0 %v502
    %2203 = vmatprep.subr.mxu0 %v507
    %2204 = vmatpush1.msra.mxu0 %v506
    %2205 = vmatprep.subr.mxu0 %v511
    %2206 = vmatpush1.msra.mxu0 %v510
    %2207 = vmatprep.subr.mxu0 %v515
    %2208 = vmatpush1.msra.mxu0 %v514
    %2209 = vmatprep.subr.mxu0 %v519
    %2210 = vmatpush1.msra.mxu0 %v518
    %2211 = vmatprep.subr.mxu0 %v523
    %2212 = vmatpush1.msra.mxu0 %v522
    %2213 = vmatprep.subr.mxu0 %v527
    %2214 = vmatpush1.msra.mxu0 %v526
    %2215 = vmatprep.subr.mxu0 %v531
    %2216 = vmatpush1.msra.mxu0 %v530
    %2217 = vmatprep.subr.mxu0 %v535
    %2218 = vmatpush1.msra.mxu0 %v534
    %2219 = vmatprep.subr.mxu0 %v539
    %2220 = vmatpush1.msra.mxu0 %v538
    %2221 = vmatprep.subr.mxu0 %v543
    %2222 = vmatpush1.msra.mxu0 %v542
    %2223 = vmatprep.subr.mxu0 %v547
    %2224 = vmatpush1.msra.mxu0 %v546
    %2225 = vmatprep.subr.mxu0 %v551
    %2226 = vmatpush1.msra.mxu0 %v550
    %2227 = vmatprep.subr.mxu0 %v555
    %2228 = vmatpush1.msra.mxu0 %v554
    %2229 = vmatprep.subr.mxu0 %v559
    %2230 = vmatpush1.msra.mxu0 %v558
    %2231 = vmatprep.mubr.f32.mxu0 %v1925
    %2232 = vmatmul.mubr.f32.gmra.mrb[0].mxu0 %v2095
    %v2233 = vpop.f32.mrb[0].mxu0
    %v2234 = vadd.f32 %v573, %v2233
    %v2235 = vpop.f32.mrb[0].mxu0
    %v2236 = vadd.f32 %v577, %v2235
    %2237 = vdwg.mxu0
    %v2238 = vxor.u32 %v2163, 2147483648
    %v2239 = vmul.f32 %v2238, 1.442695
    %v2240 = vpow.pop %v2239
    %v2241 = vadd.f32 %v2240, 1.0
    %v2242 = vrcp.pop %v2241
    %v2243 = vmul.f32 1.0, %v2242
    %v2244 = vxor.u32 %v2165, 2147483648
    %v2245 = vmul.f32 %v2244, 1.442695
    %v2246 = vpow.pop %v2245
    %v2247 = vadd.f32 %v2246, 1.0
    %v2248 = vrcp.pop %v2247
    %v2249 = vmul.f32 1.0, %v2248
    %v2250 = vtanh.pop %v2234
    %v2251 = vxor.u32 %v2236, 2147483648
    %v2252 = vmul.f32 %v2251, 1.442695
    %v2253 = vpow.pop %v2252
    %v2254 = vadd.f32 %v2253, 1.0
    %v2255 = vrcp.pop %v2254
    %v2256 = vmul.f32 1.0, %v2255
    %v2257 = vmul.f32 %v2249, %v1923
    %v2258 = vmul.f32 %v2243, %v2250
    %v2259 = vadd.f32 %v2257, %v2258
    %v2260 = vtanh.pop %v2259
    %v2261 = vmul.f32 %v2256, %v2260
    %2262 = vmatprep.subr.mxu0 %v369
    %2263 = vmatpush1.msra.mxu0 %v368
    %2264 = vmatprep.subr.mxu0 %v373
    %2265 = vmatpush1.msra.mxu0 %v372
    %2266 = vmatprep.subr.mxu0 %v377
    %2267 = vmatpush1.msra.mxu0 %v376
    %2268 = vmatprep.subr.mxu0 %v381
    %2269 = vmatpush1.msra.mxu0 %v380
    %2270 = vmatprep.subr.mxu0 %v385
    %2271 = vmatpush1.msra.mxu0 %v384
    %2272 = vmatprep.subr.mxu0 %v389
    %2273 = vmatpush1.msra.mxu0 %v388
    %2274 = vmatprep.subr.mxu0 %v393
    %2275 = vmatpush1.msra.mxu0 %v392
    %2276 = vmatprep.subr.mxu0 %v397
    %2277 = vmatpush1.msra.mxu0 %v396
    %2278 = vmatprep.subr.mxu0 %v401
    %2279 = vmatpush1.msra.mxu0 %v400
    %2280 = vmatprep.subr.mxu0 %v405
    %2281 = vmatpush1.msra.mxu0 %v404
    %2282 = vmatprep.subr.mxu0 %v409
    %2283 = vmatpush1.msra.mxu0 %v408
    %2284 = vmatprep.subr.mxu0 %v413
    %2285 = vmatpush1.msra.mxu0 %v412
    %2286 = vmatprep.subr.mxu0 %v417
    %2287 = vmatpush1.msra.mxu0 %v416
    %2288 = vmatprep.subr.mxu0 %v421
    %2289 = vmatpush1.msra.mxu0 %v420
    %2290 = vmatprep.subr.mxu0 %v425
    %2291 = vmatpush1.msra.mxu0 %v424
    %2292 = vmatprep.subr.mxu0 %v429
    %2293 = vmatpush1.msra.mxu0 %v428
    %2294 = vmatprep.subr.mxu0 0.0
    %2295 = vmatpush1.msra.mxu0 0.0
    %2296 = vmatprep.subr.mxu0 0.0
    %2297 = vmatpush1.msra.mxu0 0.0
    %2298 = vmatprep.subr.mxu0 0.0
    %2299 = vmatpush1.msra.mxu0 0.0
    %2300 = vmatprep.subr.mxu0 0.0
    %2301 = vmatpush1.msra.mxu0 0.0
    %2302 = vmatprep.subr.mxu0 0.0
    %2303 = vmatpush1.msra.mxu0 0.0
    %2304 = vmatprep.subr.mxu0 0.0
    %2305 = vmatpush1.msra.mxu0 0.0
    %2306 = vmatprep.subr.mxu0 0.0
    %2307 = vmatpush1.msra.mxu0 0.0
    %2308 = vmatprep.subr.mxu0 0.0
    %2309 = vmatpush1.msra.mxu0 0.0
    %2310 = vmatprep.subr.mxu0 0.0
    %2311 = vmatpush1.msra.mxu0 0.0
    %2312 = vmatprep.subr.mxu0 0.0
    %2313 = vmatpush1.msra.mxu0 0.0
    %2314 = vmatprep.subr.mxu0 0.0
    %2315 = vmatpush1.msra.mxu0 0.0
    %2316 = vmatprep.subr.mxu0 0.0
    %2317 = vmatpush1.msra.mxu0 0.0
    %2318 = vmatprep.subr.mxu0 0.0
    %2319 = vmatpush1.msra.mxu0 0.0
    %2320 = vmatprep.subr.mxu0 0.0
    %2321 = vmatpush1.msra.mxu0 0.0
    %2322 = vmatprep.subr.mxu0 0.0
    %2323 = vmatpush1.msra.mxu0 0.0
    %2324 = vmatprep.subr.mxu0 0.0
    %2325 = vmatpush1.msra.mxu0 0.0
    %2326 = vmatprep.mubr.f32.mxu0 0.0
    %2327 = vmatmul.mubr.f32.gmra.mrb[0].mxu0 %v2095
    %v2328 = vpop.f32.mrb[0].mxu0
    %v2329 = vadd.f32 0.0, %v2328
    %v2330 = vpop.f32.mrb[0].mxu0
    %v2331 = vadd.f32 0.0, %v2330
    %2332 = vdwg.mxu0
    %2333 = vmatprep.subr.mxu0 %v371
    %2334 = vmatpush1.msra.mxu0 %v370
    %2335 = vmatprep.subr.mxu0 %v375
    %2336 = vmatpush1.msra.mxu0 %v374
    %2337 = vmatprep.subr.mxu0 %v379
    %2338 = vmatpush1.msra.mxu0 %v378
    %2339 = vmatprep.subr.mxu0 %v383
    %2340 = vmatpush1.msra.mxu0 %v382
    %2341 = vmatprep.subr.mxu0 %v387
    %2342 = vmatpush1.msra.mxu0 %v386
    %2343 = vmatprep.subr.mxu0 %v391
    %2344 = vmatpush1.msra.mxu0 %v390
    %2345 = vmatprep.subr.mxu0 %v395
    %2346 = vmatpush1.msra.mxu0 %v394
    %2347 = vmatprep.subr.mxu0 %v399
    %2348 = vmatpush1.msra.mxu0 %v398
    %2349 = vmatprep.subr.mxu0 %v403
    %2350 = vmatpush1.msra.mxu0 %v402
    %2351 = vmatprep.subr.mxu0 %v407
    %2352 = vmatpush1.msra.mxu0 %v406
    %2353 = vmatprep.subr.mxu0 %v411
    %2354 = vmatpush1.msra.mxu0 %v410
    %2355 = vmatprep.subr.mxu0 %v415
    %2356 = vmatpush1.msra.mxu0 %v414
    %2357 = vmatprep.subr.mxu0 %v419
    %2358 = vmatpush1.msra.mxu0 %v418
    %2359 = vmatprep.subr.mxu0 %v423
    %2360 = vmatpush1.msra.mxu0 %v422
    %2361 = vmatprep.subr.mxu0 %v427
    %2362 = vmatpush1.msra.mxu0 %v426
    %2363 = vmatprep.subr.mxu0 %v431
    %2364 = vmatpush1.msra.mxu0 %v430
    %2365 = vmatprep.subr.mxu0 0.0
    %2366 = vmatpush1.msra.mxu0 0.0
    %2367 = vmatprep.subr.mxu0 0.0
    %2368 = vmatpush1.msra.mxu0 0.0
    %2369 = vmatprep.subr.mxu0 0.0
    %2370 = vmatpush1.msra.mxu0 0.0
    %2371 = vmatprep.subr.mxu0 0.0
    %2372 = vmatpush1.msra.mxu0 0.0
    %2373 = vmatprep.subr.mxu0 0.0
    %2374 = vmatpush1.msra.mxu0 0.0
    %2375 = vmatprep.subr.mxu0 0.0
    %2376 = vmatpush1.msra.mxu0 0.0
    %2377 = vmatprep.subr.mxu0 0.0
    %2378 = vmatpush1.msra.mxu0 0.0
    %2379 = vmatprep.subr.mxu0 0.0
    %2380 = vmatpush1.msra.mxu0 0.0
    %2381 = vmatprep.subr.mxu0 0.0
    %2382 = vmatpush1.msra.mxu0 0.0
    %2383 = vmatprep.subr.mxu0 0.0
    %2384 = vmatpush1.msra.mxu0 0.0
    %2385 = vmatprep.subr.mxu0 0.0
    %2386 = vmatpush1.msra.mxu0 0.0
    %2387 = vmatprep.subr.mxu0 0.0
    %2388 = vmatpush1.msra.mxu0 0.0
    %2389 = vmatprep.subr.mxu0 0.0
    %2390 = vmatpush1.msra.mxu0 0.0
    %2391 = vmatprep.subr.mxu0 0.0
    %2392 = vmatpush1.msra.mxu0 0.0
    %2393 = vmatprep.subr.mxu0 0.0
    %2394 = vmatpush1.msra.mxu0 0.0
    %2395 = vmatprep.subr.mxu0 0.0
    %2396 = vmatpush1.msra.mxu0 0.0
    %2397 = vmatprep.mubr.f32.mxu0 0.0
    %2398 = vmatmul.mubr.f32.gmra.mrb[0].mxu0 %v2095
    %v2399 = vpop.f32.mrb[0].mxu0
    %v2400 = vadd.f32 0.0, %v2399
    %v2401 = vpop.f32.mrb[0].mxu0
    %v2402 = vadd.f32 0.0, %v2401
    %2403 = vdwg.mxu0
    %v2404 = vadd.f32 %v239, %v2329
    %v2405 = vadd.f32 %v241, %v2331
    %v2406 = vadd.f32 %v352, %v2400
    %v2407 = vadd.f32 %v354, %v2402
    %v2408 = vxor.u32 %v2404, 2147483648
    %v2409 = vmul.f32 %v2408, 1.442695
    %v2410 = vpow.pop %v2409
    %v2411 = vadd.f32 %v2410, 1.0
    %v2412 = vrcp.pop %v2411
    %v2413 = vmul.f32 1.0, %v2412
    %v2414 = vxor.u32 %v2405, 2147483648
    %v2415 = vmul.f32 %v2414, 1.442695
    %v2416 = vpow.pop %v2415
    %v2417 = vadd.f32 %v2416, 1.0
    %v2418 = vrcp.pop %v2417
    %v2419 = vmul.f32 1.0, %v2418
    %v2420 = vtanh.pop %v2406
    %v2421 = vxor.u32 %v2407, 2147483648
    %v2422 = vmul.f32 %v2421, 1.442695
    %v2423 = vpow.pop %v2422
    %v2424 = vadd.f32 %v2423, 1.0
    %v2425 = vrcp.pop %v2424
    %v2426 = vmul.f32 1.0, %v2425
    %v2427 = vmul.f32 %v2419, %v2093
    %v2428 = vmul.f32 %v2413, %v2420
    %v2429 = vadd.f32 %v2427, %v2428
    %v2430 = vtanh.pop %v2429
    %v2431 = vmul.f32 %v2426, %v2430
    %2432 = vmatprep.subr.mxu0 %v433
    %2433 = vmatpush1.msra.mxu0 %v432
    %2434 = vmatprep.subr.mxu0 %v437
    %2435 = vmatpush1.msra.mxu0 %v436
    %2436 = vmatprep.subr.mxu0 %v441
    %2437 = vmatpush1.msra.mxu0 %v440
    %2438 = vmatprep.subr.mxu0 %v445
    %2439 = vmatpush1.msra.mxu0 %v444
    %2440 = vmatprep.subr.mxu0 %v449
    %2441 = vmatpush1.msra.mxu0 %v448
    %2442 = vmatprep.subr.mxu0 %v453
    %2443 = vmatpush1.msra.mxu0 %v452
    %2444 = vmatprep.subr.mxu0 %v457
    %2445 = vmatpush1.msra.mxu0 %v456
    %2446 = vmatprep.subr.mxu0 %v461
    %2447 = vmatpush1.msra.mxu0 %v460
    %2448 = vmatprep.subr.mxu0 %v465
    %2449 = vmatpush1.msra.mxu0 %v464
    %2450 = vmatprep.subr.mxu0 %v469
    %2451 = vmatpush1.msra.mxu0 %v468
    %2452 = vmatprep.subr.mxu0 %v473
    %2453 = vmatpush1.msra.mxu0 %v472
    %2454 = vmatprep.subr.mxu0 %v477
    %2455 = vmatpush1.msra.mxu0 %v476
    %2456 = vmatprep.subr.mxu0 %v481
    %2457 = vmatpush1.msra.mxu0 %v480
    %2458 = vmatprep.subr.mxu0 %v485
    %2459 = vmatpush1.msra.mxu0 %v484
    %2460 = vmatprep.subr.mxu0 %v489
    %2461 = vmatpush1.msra.mxu0 %v488
    %2462 = vmatprep.subr.mxu0 %v493
    %2463 = vmatpush1.msra.mxu0 %v492
    %2464 = vmatprep.subr.mxu0 %v497
    %2465 = vmatpush1.msra.mxu0 %v496
    %2466 = vmatprep.subr.mxu0 %v501
    %2467 = vmatpush1.msra.mxu0 %v500
    %2468 = vmatprep.subr.mxu0 %v505
    %2469 = vmatpush1.msra.mxu0 %v504
    %2470 = vmatprep.subr.mxu0 %v509
    %2471 = vmatpush1.msra.mxu0 %v508
    %2472 = vmatprep.subr.mxu0 %v513
    %2473 = vmatpush1.msra.mxu0 %v512
    %2474 = vmatprep.subr.mxu0 %v517
    %2475 = vmatpush1.msra.mxu0 %v516
    %2476 = vmatprep.subr.mxu0 %v521
    %2477 = vmatpush1.msra.mxu0 %v520
    %2478 = vmatprep.subr.mxu0 %v525
    %2479 = vmatpush1.msra.mxu0 %v524
    %2480 = vmatprep.subr.mxu0 %v529
    %2481 = vmatpush1.msra.mxu0 %v528
    %2482 = vmatprep.subr.mxu0 %v533
    %2483 = vmatpush1.msra.mxu0 %v532
    %2484 = vmatprep.subr.mxu0 %v537
    %2485 = vmatpush1.msra.mxu0 %v536
    %2486 = vmatprep.subr.mxu0 %v541
    %2487 = vmatpush1.msra.mxu0 %v540
    %2488 = vmatprep.subr.mxu0 %v545
    %2489 = vmatpush1.msra.mxu0 %v544
    %2490 = vmatprep.subr.mxu0 %v549
    %2491 = vmatpush1.msra.mxu0 %v548
    %2492 = vmatprep.subr.mxu0 %v553
    %2493 = vmatpush1.msra.mxu0 %v552
    %2494 = vmatprep.subr.mxu0 %v557
    %2495 = vmatpush1.msra.mxu0 %v556
    %2496 = vmatprep.mubr.f32.mxu0 %v2261
    %2497 = vmatmul.mubr.f32.gmra.mrb[0].mxu0 %v2431
    %v2498 = vpop.f32.mrb[0].mxu0
    %v2499 = vadd.f32 %v565, %v2498
    %v2500 = vpop.f32.mrb[0].mxu0
    %v2501 = vadd.f32 %v569, %v2500
    %2502 = vdwg.mxu0
    %2503 = vmatprep.subr.mxu0 %v435
    %2504 = vmatpush1.msra.mxu0 %v434
    %2505 = vmatprep.subr.mxu0 %v439
    %2506 = vmatpush1.msra.mxu0 %v438
    %2507 = vmatprep.subr.mxu0 %v443
    %2508 = vmatpush1.msra.mxu0 %v442
    %2509 = vmatprep.subr.mxu0 %v447
    %2510 = vmatpush1.msra.mxu0 %v446
    %2511 = vmatprep.subr.mxu0 %v451
    %2512 = vmatpush1.msra.mxu0 %v450
    %2513 = vmatprep.subr.mxu0 %v455
    %2514 = vmatpush1.msra.mxu0 %v454
    %2515 = vmatprep.subr.mxu0 %v459
    %2516 = vmatpush1.msra.mxu0 %v458
    %2517 = vmatprep.subr.mxu0 %v463
    %2518 = vmatpush1.msra.mxu0 %v462
    %2519 = vmatprep.subr.mxu0 %v467
    %2520 = vmatpush1.msra.mxu0 %v466
    %2521 = vmatprep.subr.mxu0 %v471
    %2522 = vmatpush1.msra.mxu0 %v470
    %2523 = vmatprep.subr.mxu0 %v475
    %2524 = vmatpush1.msra.mxu0 %v474
    %2525 = vmatprep.subr.mxu0 %v479
    %2526 = vmatpush1.msra.mxu0 %v478
    %2527 = vmatprep.subr.mxu0 %v483
    %2528 = vmatpush1.msra.mxu0 %v482
    %2529 = vmatprep.subr.mxu0 %v487
    %2530 = vmatpush1.msra.mxu0 %v486
    %2531 = vmatprep.subr.mxu0 %v491
    %2532 = vmatpush1.msra.mxu0 %v490
    %2533 = vmatprep.subr.mxu0 %v495
    %2534 = vmatpush1.msra.mxu0 %v494
    %2535 = vmatprep.subr.mxu0 %v499
    %2536 = vmatpush1.msra.mxu0 %v498
    %2537 = vmatprep.subr.mxu0 %v503
    %2538 = vmatpush1.msra.mxu0 %v502
    %2539 = vmatprep.subr.mxu0 %v507
    %2540 = vmatpush1.msra.mxu0 %v506
    %2541 = vmatprep.subr.mxu0 %v511
    %2542 = vmatpush1.msra.mxu0 %v510
    %2543 = vmatprep.subr.mxu0 %v515
    %2544 = vmatpush1.msra.mxu0 %v514
    %2545 = vmatprep.subr.mxu0 %v519
    %2546 = vmatpush1.msra.mxu0 %v518
    %2547 = vmatprep.subr.mxu0 %v523
    %2548 = vmatpush1.msra.mxu0 %v522
    %2549 = vmatprep.subr.mxu0 %v527
    %2550 = vmatpush1.msra.mxu0 %v526
    %2551 = vmatprep.subr.mxu0 %v531
    %2552 = vmatpush1.msra.mxu0 %v530
    %2553 = vmatprep.subr.mxu0 %v535
    %2554 = vmatpush1.msra.mxu0 %v534
    %2555 = vmatprep.subr.mxu0 %v539
    %2556 = vmatpush1.msra.mxu0 %v538
    %2557 = vmatprep.subr.mxu0 %v543
    %2558 = vmatpush1.msra.mxu0 %v542
    %2559 = vmatprep.subr.mxu0 %v547
    %2560 = vmatpush1.msra.mxu0 %v546
    %2561 = vmatprep.subr.mxu0 %v551
    %2562 = vmatpush1.msra.mxu0 %v550
    %2563 = vmatprep.subr.mxu0 %v555
    %2564 = vmatpush1.msra.mxu0 %v554
    %2565 = vmatprep.subr.mxu0 %v559
    %2566 = vmatpush1.msra.mxu0 %v558
    %2567 = vmatprep.mubr.f32.mxu0 %v2261
    %2568 = vmatmul.mubr.f32.gmra.mrb[0].mxu0 %v2431
    %v2569 = vpop.f32.mrb[0].mxu0
    %v2570 = vadd.f32 %v573, %v2569
    %v2571 = vpop.f32.mrb[0].mxu0
    %v2572 = vadd.f32 %v577, %v2571
    %2573 = vdwg.mxu0
    %v2574 = vxor.u32 %v2499, 2147483648
    %v2575 = vmul.f32 %v2574, 1.442695
    %v2576 = vpow.pop %v2575
    %v2577 = vadd.f32 %v2576, 1.0
    %v2578 = vrcp.pop %v2577
    %v2579 = vmul.f32 1.0, %v2578
    %v2580 = vxor.u32 %v2501, 2147483648
    %v2581 = vmul.f32 %v2580, 1.442695
    %v2582 = vpow.pop %v2581
    %v2583 = vadd.f32 %v2582, 1.0
    %v2584 = vrcp.pop %v2583
    %v2585 = vmul.f32 1.0, %v2584
    %v2586 = vtanh.pop %v2570
    %v2587 = vxor.u32 %v2572, 2147483648
    %v2588 = vmul.f32 %v2587, 1.442695
    %v2589 = vpow.pop %v2588
    %v2590 = vadd.f32 %v2589, 1.0
    %v2591 = vrcp.pop %v2590
    %v2592 = vmul.f32 1.0, %v2591
    %v2593 = vmul.f32 %v2585, %v2259
    %v2594 = vmul.f32 %v2579, %v2586
    %v2595 = vadd.f32 %v2593, %v2594
    %v2596 = vtanh.pop %v2595
    %v2597 = vmul.f32 %v2592, %v2596
    %2598 = vmatprep.subr.mxu0 %v369
    %2599 = vmatpush1.msra.mxu0 %v368
    %2600 = vmatprep.subr.mxu0 %v373
    %2601 = vmatpush1.msra.mxu0 %v372
    %2602 = vmatprep.subr.mxu0 %v377
    %2603 = vmatpush1.msra.mxu0 %v376
    %2604 = vmatprep.subr.mxu0 %v381
    %2605 = vmatpush1.msra.mxu0 %v380
    %2606 = vmatprep.subr.mxu0 %v385
    %2607 = vmatpush1.msra.mxu0 %v384
    %2608 = vmatprep.subr.mxu0 %v389
    %2609 = vmatpush1.msra.mxu0 %v388
    %2610 = vmatprep.subr.mxu0 %v393
    %2611 = vmatpush1.msra.mxu0 %v392
    %2612 = vmatprep.subr.mxu0 %v397
    %2613 = vmatpush1.msra.mxu0 %v396
    %2614 = vmatprep.subr.mxu0 %v401
    %2615 = vmatpush1.msra.mxu0 %v400
    %2616 = vmatprep.subr.mxu0 %v405
    %2617 = vmatpush1.msra.mxu0 %v404
    %2618 = vmatprep.subr.mxu0 %v409
    %2619 = vmatpush1.msra.mxu0 %v408
    %2620 = vmatprep.subr.mxu0 %v413
    %2621 = vmatpush1.msra.mxu0 %v412
    %2622 = vmatprep.subr.mxu0 %v417
    %2623 = vmatpush1.msra.mxu0 %v416
    %2624 = vmatprep.subr.mxu0 %v421
    %2625 = vmatpush1.msra.mxu0 %v420
    %2626 = vmatprep.subr.mxu0 %v425
    %2627 = vmatpush1.msra.mxu0 %v424
    %2628 = vmatprep.subr.mxu0 %v429
    %2629 = vmatpush1.msra.mxu0 %v428
    %2630 = vmatprep.subr.mxu0 0.0
    %2631 = vmatpush1.msra.mxu0 0.0
    %2632 = vmatprep.subr.mxu0 0.0
    %2633 = vmatpush1.msra.mxu0 0.0
    %2634 = vmatprep.subr.mxu0 0.0
    %2635 = vmatpush1.msra.mxu0 0.0
    %2636 = vmatprep.subr.mxu0 0.0
    %2637 = vmatpush1.msra.mxu0 0.0
    %2638 = vmatprep.subr.mxu0 0.0
    %2639 = vmatpush1.msra.mxu0 0.0
    %2640 = vmatprep.subr.mxu0 0.0
    %2641 = vmatpush1.msra.mxu0 0.0
    %2642 = vmatprep.subr.mxu0 0.0
    %2643 = vmatpush1.msra.mxu0 0.0
    %2644 = vmatprep.subr.mxu0 0.0
    %2645 = vmatpush1.msra.mxu0 0.0
    %2646 = vmatprep.subr.mxu0 0.0
    %2647 = vmatpush1.msra.mxu0 0.0
    %2648 = vmatprep.subr.mxu0 0.0
    %2649 = vmatpush1.msra.mxu0 0.0
    %2650 = vmatprep.subr.mxu0 0.0
    %2651 = vmatpush1.msra.mxu0 0.0
    %2652 = vmatprep.subr.mxu0 0.0
    %2653 = vmatpush1.msra.mxu0 0.0
    %2654 = vmatprep.subr.mxu0 0.0
    %2655 = vmatpush1.msra.mxu0 0.0
    %2656 = vmatprep.subr.mxu0 0.0
    %2657 = vmatpush1.msra.mxu0 0.0
    %2658 = vmatprep.subr.mxu0 0.0
    %2659 = vmatpush1.msra.mxu0 0.0
    %2660 = vmatprep.subr.mxu0 0.0
    %2661 = vmatpush1.msra.mxu0 0.0
    %2662 = vmatprep.mubr.f32.mxu0 0.0
    %2663 = vmatmul.mubr.f32.gmra.mrb[0].mxu0 %v2431
    %v2664 = vpop.f32.mrb[0].mxu0
    %v2665 = vadd.f32 0.0, %v2664
    %v2666 = vpop.f32.mrb[0].mxu0
    %v2667 = vadd.f32 0.0, %v2666
    %2668 = vdwg.mxu0
    %2669 = vmatprep.subr.mxu0 %v371
    %2670 = vmatpush1.msra.mxu0 %v370
    %2671 = vmatprep.subr.mxu0 %v375
    %2672 = vmatpush1.msra.mxu0 %v374
    %2673 = vmatprep.subr.mxu0 %v379
    %2674 = vmatpush1.msra.mxu0 %v378
    %2675 = vmatprep.subr.mxu0 %v383
    %2676 = vmatpush1.msra.mxu0 %v382
    %2677 = vmatprep.subr.mxu0 %v387
    %2678 = vmatpush1.msra.mxu0 %v386
    %2679 = vmatprep.subr.mxu0 %v391
    %2680 = vmatpush1.msra.mxu0 %v390
    %2681 = vmatprep.subr.mxu0 %v395
    %2682 = vmatpush1.msra.mxu0 %v394
    %2683 = vmatprep.subr.mxu0 %v399
    %2684 = vmatpush1.msra.mxu0 %v398
    %2685 = vmatprep.subr.mxu0 %v403
    %2686 = vmatpush1.msra.mxu0 %v402
    %2687 = vmatprep.subr.mxu0 %v407
    %2688 = vmatpush1.msra.mxu0 %v406
    %2689 = vmatprep.subr.mxu0 %v411
    %2690 = vmatpush1.msra.mxu0 %v410
    %2691 = vmatprep.subr.mxu0 %v415
    %2692 = vmatpush1.msra.mxu0 %v414
    %2693 = vmatprep.subr.mxu0 %v419
    %2694 = vmatpush1.msra.mxu0 %v418
    %2695 = vmatprep.subr.mxu0 %v423
    %2696 = vmatpush1.msra.mxu0 %v422
    %2697 = vmatprep.subr.mxu0 %v427
    %2698 = vmatpush1.msra.mxu0 %v426
    %2699 = vmatprep.subr.mxu0 %v431
    %2700 = vmatpush1.msra.mxu0 %v430
    %2701 = vmatprep.subr.mxu0 0.0
    %2702 = vmatpush1.msra.mxu0 0.0
    %2703 = vmatprep.subr.mxu0 0.0
    %2704 = vmatpush1.msra.mxu0 0.0
    %2705 = vmatprep.subr.mxu0 0.0
    %2706 = vmatpush1.msra.mxu0 0.0
    %2707 = vmatprep.subr.mxu0 0.0
    %2708 = vmatpush1.msra.mxu0 0.0
    %2709 = vmatprep.subr.mxu0 0.0
    %2710 = vmatpush1.msra.mxu0 0.0
    %2711 = vmatprep.subr.mxu0 0.0
    %2712 = vmatpush1.msra.mxu0 0.0
    %2713 = vmatprep.subr.mxu0 0.0
    %2714 = vmatpush1.msra.mxu0 0.0
    %2715 = vmatprep.subr.mxu0 0.0
    %2716 = vmatpush1.msra.mxu0 0.0
    %2717 = vmatprep.subr.mxu0 0.0
    %2718 = vmatpush1.msra.mxu0 0.0
    %2719 = vmatprep.subr.mxu0 0.0
    %2720 = vmatpush1.msra.mxu0 0.0
    %2721 = vmatprep.subr.mxu0 0.0
    %2722 = vmatpush1.msra.mxu0 0.0
    %2723 = vmatprep.subr.mxu0 0.0
    %2724 = vmatpush1.msra.mxu0 0.0
    %2725 = vmatprep.subr.mxu0 0.0
    %2726 = vmatpush1.msra.mxu0 0.0
    %2727 = vmatprep.subr.mxu0 0.0
    %2728 = vmatpush1.msra.mxu0 0.0
    %2729 = vmatprep.subr.mxu0 0.0
    %2730 = vmatpush1.msra.mxu0 0.0
    %2731 = vmatprep.subr.mxu0 0.0
    %2732 = vmatpush1.msra.mxu0 0.0
    %2733 = vmatprep.mubr.f32.mxu0 0.0
    %2734 = vmatmul.mubr.f32.gmra.mrb[0].mxu0 %v2431
    %v2735 = vpop.f32.mrb[0].mxu0
    %v2736 = vadd.f32 0.0, %v2735
    %v2737 = vpop.f32.mrb[0].mxu0
    %v2738 = vadd.f32 0.0, %v2737
    %2739 = vdwg.mxu0
    %v2740 = vadd.f32 %v245, %v2665
    %v2741 = vadd.f32 %v247, %v2667
    %v2742 = vadd.f32 %v358, %v2736
    %v2743 = vadd.f32 %v360, %v2738
    %v2744 = vxor.u32 %v2740, 2147483648
    %v2745 = vmul.f32 %v2744, 1.442695
    %v2746 = vpow.pop %v2745
    %v2747 = vadd.f32 %v2746, 1.0
    %v2748 = vrcp.pop %v2747
    %v2749 = vmul.f32 1.0, %v2748
    %v2750 = vxor.u32 %v2741, 2147483648
    %v2751 = vmul.f32 %v2750, 1.442695
    %v2752 = vpow.pop %v2751
    %v2753 = vadd.f32 %v2752, 1.0
    %v2754 = vrcp.pop %v2753
    %v2755 = vmul.f32 1.0, %v2754
    %v2756 = vtanh.pop %v2742
    %v2757 = vxor.u32 %v2743, 2147483648
    %v2758 = vmul.f32 %v2757, 1.442695
    %v2759 = vpow.pop %v2758
    %v2760 = vadd.f32 %v2759, 1.0
    %v2761 = vrcp.pop %v2760
    %v2762 = vmul.f32 1.0, %v2761
    %v2763 = vmul.f32 %v2755, %v2429
    %v2764 = vmul.f32 %v2749, %v2756
    %v2765 = vadd.f32 %v2763, %v2764
    %v2766 = vtanh.pop %v2765
    %v2767 = vmul.f32 %v2762, %v2766
    %2768 = vmatprep.subr.mxu0 %v433
    %2769 = vmatpush1.msra.mxu0 %v432
    %2770 = vmatprep.subr.mxu0 %v437
    %2771 = vmatpush1.msra.mxu0 %v436
    %2772 = vmatprep.subr.mxu0 %v441
    %2773 = vmatpush1.msra.mxu0 %v440
    %2774 = vmatprep.subr.mxu0 %v445
    %2775 = vmatpush1.msra.mxu0 %v444
    %2776 = vmatprep.subr.mxu0 %v449
    %2777 = vmatpush1.msra.mxu0 %v448
    %2778 = vmatprep.subr.mxu0 %v453
    %2779 = vmatpush1.msra.mxu0 %v452
    %2780 = vmatprep.subr.mxu0 %v457
    %2781 = vmatpush1.msra.mxu0 %v456
    %2782 = vmatprep.subr.mxu0 %v461
    %2783 = vmatpush1.msra.mxu0 %v460
    %2784 = vmatprep.subr.mxu0 %v465
    %2785 = vmatpush1.msra.mxu0 %v464
    %2786 = vmatprep.subr.mxu0 %v469
    %2787 = vmatpush1.msra.mxu0 %v468
    %2788 = vmatprep.subr.mxu0 %v473
    %2789 = vmatpush1.msra.mxu0 %v472
    %2790 = vmatprep.subr.mxu0 %v477
    %2791 = vmatpush1.msra.mxu0 %v476
    %2792 = vmatprep.subr.mxu0 %v481
    %2793 = vmatpush1.msra.mxu0 %v480
    %2794 = vmatprep.subr.mxu0 %v485
    %2795 = vmatpush1.msra.mxu0 %v484
    %2796 = vmatprep.subr.mxu0 %v489
    %2797 = vmatpush1.msra.mxu0 %v488
    %2798 = vmatprep.subr.mxu0 %v493
    %2799 = vmatpush1.msra.mxu0 %v492
    %2800 = vmatprep.subr.mxu0 %v497
    %2801 = vmatpush1.msra.mxu0 %v496
    %2802 = vmatprep.subr.mxu0 %v501
    %2803 = vmatpush1.msra.mxu0 %v500
    %2804 = vmatprep.subr.mxu0 %v505
    %2805 = vmatpush1.msra.mxu0 %v504
    %2806 = vmatprep.subr.mxu0 %v509
    %2807 = vmatpush1.msra.mxu0 %v508
    %2808 = vmatprep.subr.mxu0 %v513
    %2809 = vmatpush1.msra.mxu0 %v512
    %2810 = vmatprep.subr.mxu0 %v517
    %2811 = vmatpush1.msra.mxu0 %v516
    %2812 = vmatprep.subr.mxu0 %v521
    %2813 = vmatpush1.msra.mxu0 %v520
    %2814 = vmatprep.subr.mxu0 %v525
    %2815 = vmatpush1.msra.mxu0 %v524
    %2816 = vmatprep.subr.mxu0 %v529
    %2817 = vmatpush1.msra.mxu0 %v528
    %2818 = vmatprep.subr.mxu0 %v533
    %2819 = vmatpush1.msra.mxu0 %v532
    %2820 = vmatprep.subr.mxu0 %v537
    %2821 = vmatpush1.msra.mxu0 %v536
    %2822 = vmatprep.subr.mxu0 %v541
    %2823 = vmatpush1.msra.mxu0 %v540
    %2824 = vmatprep.subr.mxu0 %v545
    %2825 = vmatpush1.msra.mxu0 %v544
    %2826 = vmatprep.subr.mxu0 %v549
    %2827 = vmatpush1.msra.mxu0 %v548
    %2828 = vmatprep.subr.mxu0 %v553
    %2829 = vmatpush1.msra.mxu0 %v552
    %2830 = vmatprep.subr.mxu0 %v557
    %2831 = vmatpush1.msra.mxu0 %v556
    %2832 = vmatprep.mubr.f32.mxu0 %v2597
    %2833 = vmatmul.mubr.f32.gmra.mrb[0].mxu0 %v2767
    %v2834 = vpop.f32.mrb[0].mxu0
    %v2835 = vadd.f32 %v565, %v2834
    %v2836 = vpop.f32.mrb[0].mxu0
    %v2837 = vadd.f32 %v569, %v2836
    %2838 = vdwg.mxu0
    %2839 = vmatprep.subr.mxu0 %v435
    %2840 = vmatpush1.msra.mxu0 %v434
    %2841 = vmatprep.subr.mxu0 %v439
    %2842 = vmatpush1.msra.mxu0 %v438
    %2843 = vmatprep.subr.mxu0 %v443
    %2844 = vmatpush1.msra.mxu0 %v442
    %2845 = vmatprep.subr.mxu0 %v447
    %2846 = vmatpush1.msra.mxu0 %v446
    %2847 = vmatprep.subr.mxu0 %v451
    %2848 = vmatpush1.msra.mxu0 %v450
    %2849 = vmatprep.subr.mxu0 %v455
    %2850 = vmatpush1.msra.mxu0 %v454
    %2851 = vmatprep.subr.mxu0 %v459
    %2852 = vmatpush1.msra.mxu0 %v458
    %2853 = vmatprep.subr.mxu0 %v463
    %2854 = vmatpush1.msra.mxu0 %v462
    %2855 = vmatprep.subr.mxu0 %v467
    %2856 = vmatpush1.msra.mxu0 %v466
    %2857 = vmatprep.subr.mxu0 %v471
    %2858 = vmatpush1.msra.mxu0 %v470
    %2859 = vmatprep.subr.mxu0 %v475
    %2860 = vmatpush1.msra.mxu0 %v474
    %2861 = vmatprep.subr.mxu0 %v479
    %2862 = vmatpush1.msra.mxu0 %v478
    %2863 = vmatprep.subr.mxu0 %v483
    %2864 = vmatpush1.msra.mxu0 %v482
    %2865 = vmatprep.subr.mxu0 %v487
    %2866 = vmatpush1.msra.mxu0 %v486
    %2867 = vmatprep.subr.mxu0 %v491
    %2868 = vmatpush1.msra.mxu0 %v490
    %2869 = vmatprep.subr.mxu0 %v495
    %2870 = vmatpush1.msra.mxu0 %v494
    %2871 = vmatprep.subr.mxu0 %v499
    %2872 = vmatpush1.msra.mxu0 %v498
    %2873 = vmatprep.subr.mxu0 %v503
    %2874 = vmatpush1.msra.mxu0 %v502
    %2875 = vmatprep.subr.mxu0 %v507
    %2876 = vmatpush1.msra.mxu0 %v506
    %2877 = vmatprep.subr.mxu0 %v511
    %2878 = vmatpush1.msra.mxu0 %v510
    %2879 = vmatprep.subr.mxu0 %v515
    %2880 = vmatpush1.msra.mxu0 %v514
    %2881 = vmatprep.subr.mxu0 %v519
    %2882 = vmatpush1.msra.mxu0 %v518
    %2883 = vmatprep.subr.mxu0 %v523
    %2884 = vmatpush1.msra.mxu0 %v522
    %2885 = vmatprep.subr.mxu0 %v527
    %2886 = vmatpush1.msra.mxu0 %v526
    %2887 = vmatprep.subr.mxu0 %v531
    %2888 = vmatpush1.msra.mxu0 %v530
    %2889 = vmatprep.subr.mxu0 %v535
    %2890 = vmatpush1.msra.mxu0 %v534
    %2891 = vmatprep.subr.mxu0 %v539
    %2892 = vmatpush1.msra.mxu0 %v538
    %2893 = vmatprep.subr.mxu0 %v543
    %2894 = vmatpush1.msra.mxu0 %v542
    %2895 = vmatprep.subr.mxu0 %v547
    %2896 = vmatpush1.msra.mxu0 %v546
    %2897 = vmatprep.subr.mxu0 %v551
    %2898 = vmatpush1.msra.mxu0 %v550
    %2899 = vmatprep.subr.mxu0 %v555
    %2900 = vmatpush1.msra.mxu0 %v554
    %2901 = vmatprep.subr.mxu0 %v559
    %2902 = vmatpush1.msra.mxu0 %v558
    %2903 = vmatprep.mubr.f32.mxu0 %v2597
    %2904 = vmatmul.mubr.f32.gmra.mrb[0].mxu0 %v2767
    %v2905 = vpop.f32.mrb[0].mxu0
    %v2906 = vadd.f32 %v573, %v2905
    %v2907 = vpop.f32.mrb[0].mxu0
    %v2908 = vadd.f32 %v577, %v2907
    %2909 = vdwg.mxu0
    %v2910 = vxor.u32 %v2835, 2147483648
    %v2911 = vmul.f32 %v2910, 1.442695
    %v2912 = vpow.pop %v2911
    %v2913 = vadd.f32 %v2912, 1.0
    %v2914 = vrcp.pop %v2913
    %v2915 = vmul.f32 1.0, %v2914
    %v2916 = vxor.u32 %v2837, 2147483648
    %v2917 = vmul.f32 %v2916, 1.442695
    %v2918 = vpow.pop %v2917
    %v2919 = vadd.f32 %v2918, 1.0
    %v2920 = vrcp.pop %v2919
    %v2921 = vmul.f32 1.0, %v2920
    %v2922 = vtanh.pop %v2906
    %v2923 = vxor.u32 %v2908, 2147483648
    %v2924 = vmul.f32 %v2923, 1.442695
    %v2925 = vpow.pop %v2924
    %v2926 = vadd.f32 %v2925, 1.0
    %v2927 = vrcp.pop %v2926
    %v2928 = vmul.f32 1.0, %v2927
    %v2929 = vmul.f32 %v2921, %v2595
    %v2930 = vmul.f32 %v2915, %v2922
    %v2931 = vadd.f32 %v2929, %v2930
    %v2932 = vtanh.pop %v2931
    %v2933 = vmul.f32 %v2928, %v2932
    %2934 = vmatprep.subr.mxu0 %v369
    %2935 = vmatpush1.msra.mxu0 %v368
    %2936 = vmatprep.subr.mxu0 %v373
    %2937 = vmatpush1.msra.mxu0 %v372
    %2938 = vmatprep.subr.mxu0 %v377
    %2939 = vmatpush1.msra.mxu0 %v376
    %2940 = vmatprep.subr.mxu0 %v381
    %2941 = vmatpush1.msra.mxu0 %v380
    %2942 = vmatprep.subr.mxu0 %v385
    %2943 = vmatpush1.msra.mxu0 %v384
    %2944 = vmatprep.subr.mxu0 %v389
    %2945 = vmatpush1.msra.mxu0 %v388
    %2946 = vmatprep.subr.mxu0 %v393
    %2947 = vmatpush1.msra.mxu0 %v392
    %2948 = vmatprep.subr.mxu0 %v397
    %2949 = vmatpush1.msra.mxu0 %v396
    %2950 = vmatprep.subr.mxu0 %v401
    %2951 = vmatpush1.msra.mxu0 %v400
    %2952 = vmatprep.subr.mxu0 %v405
    %2953 = vmatpush1.msra.mxu0 %v404
    %2954 = vmatprep.subr.mxu0 %v409
    %2955 = vmatpush1.msra.mxu0 %v408
    %2956 = vmatprep.subr.mxu0 %v413
    %2957 = vmatpush1.msra.mxu0 %v412
    %2958 = vmatprep.subr.mxu0 %v417
    %2959 = vmatpush1.msra.mxu0 %v416
    %2960 = vmatprep.subr.mxu0 %v421
    %2961 = vmatpush1.msra.mxu0 %v420
    %2962 = vmatprep.subr.mxu0 %v425
    %2963 = vmatpush1.msra.mxu0 %v424
    %2964 = vmatprep.subr.mxu0 %v429
    %2965 = vmatpush1.msra.mxu0 %v428
    %2966 = vmatprep.subr.mxu0 0.0
    %2967 = vmatpush1.msra.mxu0 0.0
    %2968 = vmatprep.subr.mxu0 0.0
    %2969 = vmatpush1.msra.mxu0 0.0
    %2970 = vmatprep.subr.mxu0 0.0
    %2971 = vmatpush1.msra.mxu0 0.0
    %2972 = vmatprep.subr.mxu0 0.0
    %2973 = vmatpush1.msra.mxu0 0.0
    %2974 = vmatprep.subr.mxu0 0.0
    %2975 = vmatpush1.msra.mxu0 0.0
    %2976 = vmatprep.subr.mxu0 0.0
    %2977 = vmatpush1.msra.mxu0 0.0
    %2978 = vmatprep.subr.mxu0 0.0
    %2979 = vmatpush1.msra.mxu0 0.0
    %2980 = vmatprep.subr.mxu0 0.0
    %2981 = vmatpush1.msra.mxu0 0.0
    %2982 = vmatprep.subr.mxu0 0.0
    %2983 = vmatpush1.msra.mxu0 0.0
    %2984 = vmatprep.subr.mxu0 0.0
    %2985 = vmatpush1.msra.mxu0 0.0
    %2986 = vmatprep.subr.mxu0 0.0
    %2987 = vmatpush1.msra.mxu0 0.0
    %2988 = vmatprep.subr.mxu0 0.0
    %2989 = vmatpush1.msra.mxu0 0.0
    %2990 = vmatprep.subr.mxu0 0.0
    %2991 = vmatpush1.msra.mxu0 0.0
    %2992 = vmatprep.subr.mxu0 0.0
    %2993 = vmatpush1.msra.mxu0 0.0
    %2994 = vmatprep.subr.mxu0 0.0
    %2995 = vmatpush1.msra.mxu0 0.0
    %2996 = vmatprep.subr.mxu0 0.0
    %2997 = vmatpush1.msra.mxu0 0.0
    %2998 = vmatprep.mubr.f32.mxu0 0.0
    %2999 = vmatmul.mubr.f32.gmra.mrb[0].mxu0 %v2767
    %v3000 = vpop.f32.mrb[0].mxu0
    %v3001 = vadd.f32 0.0, %v3000
    %v3002 = vpop.f32.mrb[0].mxu0
    %v3003 = vadd.f32 0.0, %v3002
    %3004 = vdwg.mxu0
    %3005 = vmatprep.subr.mxu0 %v371
    %3006 = vmatpush1.msra.mxu0 %v370
    %3007 = vmatprep.subr.mxu0 %v375
    %3008 = vmatpush1.msra.mxu0 %v374
    %3009 = vmatprep.subr.mxu0 %v379
    %3010 = vmatpush1.msra.mxu0 %v378
    %3011 = vmatprep.subr.mxu0 %v383
    %3012 = vmatpush1.msra.mxu0 %v382
    %3013 = vmatprep.subr.mxu0 %v387
    %3014 = vmatpush1.msra.mxu0 %v386
    %3015 = vmatprep.subr.mxu0 %v391
    %3016 = vmatpush1.msra.mxu0 %v390
    %3017 = vmatprep.subr.mxu0 %v395
    %3018 = vmatpush1.msra.mxu0 %v394
    %3019 = vmatprep.subr.mxu0 %v399
    %3020 = vmatpush1.msra.mxu0 %v398
    %3021 = vmatprep.subr.mxu0 %v403
    %3022 = vmatpush1.msra.mxu0 %v402
    %3023 = vmatprep.subr.mxu0 %v407
    %3024 = vmatpush1.msra.mxu0 %v406
    %3025 = vmatprep.subr.mxu0 %v411
    %3026 = vmatpush1.msra.mxu0 %v410
    %3027 = vmatprep.subr.mxu0 %v415
    %3028 = vmatpush1.msra.mxu0 %v414
    %3029 = vmatprep.subr.mxu0 %v419
    %3030 = vmatpush1.msra.mxu0 %v418
    %3031 = vmatprep.subr.mxu0 %v423
    %3032 = vmatpush1.msra.mxu0 %v422
    %3033 = vmatprep.subr.mxu0 %v427
    %3034 = vmatpush1.msra.mxu0 %v426
    %3035 = vmatprep.subr.mxu0 %v431
    %3036 = vmatpush1.msra.mxu0 %v430
    %3037 = vmatprep.subr.mxu0 0.0
    %3038 = vmatpush1.msra.mxu0 0.0
    %3039 = vmatprep.subr.mxu0 0.0
    %3040 = vmatpush1.msra.mxu0 0.0
    %3041 = vmatprep.subr.mxu0 0.0
    %3042 = vmatpush1.msra.mxu0 0.0
    %3043 = vmatprep.subr.mxu0 0.0
    %3044 = vmatpush1.msra.mxu0 0.0
    %3045 = vmatprep.subr.mxu0 0.0
    %3046 = vmatpush1.msra.mxu0 0.0
    %3047 = vmatprep.subr.mxu0 0.0
    %3048 = vmatpush1.msra.mxu0 0.0
    %3049 = vmatprep.subr.mxu0 0.0
    %3050 = vmatpush1.msra.mxu0 0.0
    %3051 = vmatprep.subr.mxu0 0.0
    %3052 = vmatpush1.msra.mxu0 0.0
    %3053 = vmatprep.subr.mxu0 0.0
    %3054 = vmatpush1.msra.mxu0 0.0
    %3055 = vmatprep.subr.mxu0 0.0
    %3056 = vmatpush1.msra.mxu0 0.0
    %3057 = vmatprep.subr.mxu0 0.0
    %3058 = vmatpush1.msra.mxu0 0.0
    %3059 = vmatprep.subr.mxu0 0.0
    %3060 = vmatpush1.msra.mxu0 0.0
    %3061 = vmatprep.subr.mxu0 0.0
    %3062 = vmatpush1.msra.mxu0 0.0
    %3063 = vmatprep.subr.mxu0 0.0
    %3064 = vmatpush1.msra.mxu0 0.0
    %3065 = vmatprep.subr.mxu0 0.0
    %3066 = vmatpush1.msra.mxu0 0.0
    %3067 = vmatprep.subr.mxu0 0.0
    %3068 = vmatpush1.msra.mxu0 0.0
    %3069 = vmatprep.mubr.f32.mxu0 0.0
    %3070 = vmatmul.mubr.f32.gmra.mrb[0].mxu0 %v2767
    %v3071 = vpop.f32.mrb[0].mxu0
    %v3072 = vadd.f32 0.0, %v3071
    %v3073 = vpop.f32.mrb[0].mxu0
    %v3074 = vadd.f32 0.0, %v3073
    %3075 = vdwg.mxu0
    %v3076 = vadd.f32 %v251, %v3001
    %v3077 = vadd.f32 %v253, %v3003
    %v3078 = vadd.f32 %v364, %v3072
    %v3079 = vadd.f32 %v366, %v3074
    %v3080 = vxor.u32 %v3076, 2147483648
    %v3081 = vmul.f32 %v3080, 1.442695
    %v3082 = vpow.pop %v3081
    %v3083 = vadd.f32 %v3082, 1.0
    %v3084 = vrcp.pop %v3083
    %v3085 = vmul.f32 1.0, %v3084
    %v3086 = vxor.u32 %v3077, 2147483648
    %v3087 = vmul.f32 %v3086, 1.442695
    %v3088 = vpow.pop %v3087
    %v3089 = vadd.f32 %v3088, 1.0
    %v3090 = vrcp.pop %v3089
    %v3091 = vmul.f32 1.0, %v3090
    %v3092 = vtanh.pop %v3078
    %v3093 = vxor.u32 %v3079, 2147483648
    %v3094 = vmul.f32 %v3093, 1.442695
    %v3095 = vpow.pop %v3094
    %v3096 = vadd.f32 %v3095, 1.0
    %v3097 = vrcp.pop %v3096
    %v3098 = vmul.f32 1.0, %v3097
    %v3099 = vmul.f32 %v3091, %v2765
    %v3100 = vmul.f32 %v3085, %v3092
    %v3101 = vadd.f32 %v3099, %v3100
    %v3102 = vtanh.pop %v3101
    %v3103 = vmul.f32 %v3098, %v3102
    %3104 = vmatprep.subr.mxu0 %v433
    %3105 = vmatpush1.msra.mxu0 %v432
    %3106 = vmatprep.subr.mxu0 %v437
    %3107 = vmatpush1.msra.mxu0 %v436
    %3108 = vmatprep.subr.mxu0 %v441
    %3109 = vmatpush1.msra.mxu0 %v440
    %3110 = vmatprep.subr.mxu0 %v445
    %3111 = vmatpush1.msra.mxu0 %v444
    %3112 = vmatprep.subr.mxu0 %v449
    %3113 = vmatpush1.msra.mxu0 %v448
    %3114 = vmatprep.subr.mxu0 %v453
    %3115 = vmatpush1.msra.mxu0 %v452
    %3116 = vmatprep.subr.mxu0 %v457
    %3117 = vmatpush1.msra.mxu0 %v456
    %3118 = vmatprep.subr.mxu0 %v461
    %3119 = vmatpush1.msra.mxu0 %v460
    %3120 = vmatprep.subr.mxu0 %v465
    %3121 = vmatpush1.msra.mxu0 %v464
    %3122 = vmatprep.subr.mxu0 %v469
    %3123 = vmatpush1.msra.mxu0 %v468
    %3124 = vmatprep.subr.mxu0 %v473
    %3125 = vmatpush1.msra.mxu0 %v472
    %3126 = vmatprep.subr.mxu0 %v477
    %3127 = vmatpush1.msra.mxu0 %v476
    %3128 = vmatprep.subr.mxu0 %v481
    %3129 = vmatpush1.msra.mxu0 %v480
    %3130 = vmatprep.subr.mxu0 %v485
    %3131 = vmatpush1.msra.mxu0 %v484
    %3132 = vmatprep.subr.mxu0 %v489
    %3133 = vmatpush1.msra.mxu0 %v488
    %3134 = vmatprep.subr.mxu0 %v493
    %3135 = vmatpush1.msra.mxu0 %v492
    %3136 = vmatprep.subr.mxu0 %v497
    %3137 = vmatpush1.msra.mxu0 %v496
    %3138 = vmatprep.subr.mxu0 %v501
    %3139 = vmatpush1.msra.mxu0 %v500
    %3140 = vmatprep.subr.mxu0 %v505
    %3141 = vmatpush1.msra.mxu0 %v504
    %3142 = vmatprep.subr.mxu0 %v509
    %3143 = vmatpush1.msra.mxu0 %v508
    %3144 = vmatprep.subr.mxu0 %v513
    %3145 = vmatpush1.msra.mxu0 %v512
    %3146 = vmatprep.subr.mxu0 %v517
    %3147 = vmatpush1.msra.mxu0 %v516
    %3148 = vmatprep.subr.mxu0 %v521
    %3149 = vmatpush1.msra.mxu0 %v520
    %3150 = vmatprep.subr.mxu0 %v525
    %3151 = vmatpush1.msra.mxu0 %v524
    %3152 = vmatprep.subr.mxu0 %v529
    %3153 = vmatpush1.msra.mxu0 %v528
    %3154 = vmatprep.subr.mxu0 %v533
    %3155 = vmatpush1.msra.mxu0 %v532
    %3156 = vmatprep.subr.mxu0 %v537
    %3157 = vmatpush1.msra.mxu0 %v536
    %3158 = vmatprep.subr.mxu0 %v541
    %3159 = vmatpush1.msra.mxu0 %v540
    %3160 = vmatprep.subr.mxu0 %v545
    %3161 = vmatpush1.msra.mxu0 %v544
    %3162 = vmatprep.subr.mxu0 %v549
    %3163 = vmatpush1.msra.mxu0 %v548
    %3164 = vmatprep.subr.mxu0 %v553
    %3165 = vmatpush1.msra.mxu0 %v552
    %3166 = vmatprep.subr.mxu0 %v557
    %3167 = vmatpush1.msra.mxu0 %v556
    %3168 = vmatprep.mubr.f32.mxu0 %v2933
    %3169 = vmatmul.mubr.f32.gmra.mrb[0].mxu0 %v3103
    %v3170 = vpop.f32.mrb[0].mxu0
    %v3171 = vadd.f32 %v565, %v3170
    %v3172 = vpop.f32.mrb[0].mxu0
    %v3173 = vadd.f32 %v569, %v3172
    %3174 = vdwg.mxu0
    %3175 = vmatprep.subr.mxu0 %v435
    %3176 = vmatpush1.msra.mxu0 %v434
    %3177 = vmatprep.subr.mxu0 %v439
    %3178 = vmatpush1.msra.mxu0 %v438
    %3179 = vmatprep.subr.mxu0 %v443
    %3180 = vmatpush1.msra.mxu0 %v442
    %3181 = vmatprep.subr.mxu0 %v447
    %3182 = vmatpush1.msra.mxu0 %v446
    %3183 = vmatprep.subr.mxu0 %v451
    %3184 = vmatpush1.msra.mxu0 %v450
    %3185 = vmatprep.subr.mxu0 %v455
    %3186 = vmatpush1.msra.mxu0 %v454
    %3187 = vmatprep.subr.mxu0 %v459
    %3188 = vmatpush1.msra.mxu0 %v458
    %3189 = vmatprep.subr.mxu0 %v463
    %3190 = vmatpush1.msra.mxu0 %v462
    %3191 = vmatprep.subr.mxu0 %v467
    %3192 = vmatpush1.msra.mxu0 %v466
    %3193 = vmatprep.subr.mxu0 %v471
    %3194 = vmatpush1.msra.mxu0 %v470
    %3195 = vmatprep.subr.mxu0 %v475
    %3196 = vmatpush1.msra.mxu0 %v474
    %3197 = vmatprep.subr.mxu0 %v479
    %3198 = vmatpush1.msra.mxu0 %v478
    %3199 = vmatprep.subr.mxu0 %v483
    %3200 = vmatpush1.msra.mxu0 %v482
    %3201 = vmatprep.subr.mxu0 %v487
    %3202 = vmatpush1.msra.mxu0 %v486
    %3203 = vmatprep.subr.mxu0 %v491
    %3204 = vmatpush1.msra.mxu0 %v490
    %3205 = vmatprep.subr.mxu0 %v495
    %3206 = vmatpush1.msra.mxu0 %v494
    %3207 = vmatprep.subr.mxu0 %v499
    %3208 = vmatpush1.msra.mxu0 %v498
    %3209 = vmatprep.subr.mxu0 %v503
    %3210 = vmatpush1.msra.mxu0 %v502
    %3211 = vmatprep.subr.mxu0 %v507
    %3212 = vmatpush1.msra.mxu0 %v506
    %3213 = vmatprep.subr.mxu0 %v511
    %3214 = vmatpush1.msra.mxu0 %v510
    %3215 = vmatprep.subr.mxu0 %v515
    %3216 = vmatpush1.msra.mxu0 %v514
    %3217 = vmatprep.subr.mxu0 %v519
    %3218 = vmatpush1.msra.mxu0 %v518
    %3219 = vmatprep.subr.mxu0 %v523
    %3220 = vmatpush1.msra.mxu0 %v522
    %3221 = vmatprep.subr.mxu0 %v527
    %3222 = vmatpush1.msra.mxu0 %v526
    %3223 = vmatprep.subr.mxu0 %v531
    %3224 = vmatpush1.msra.mxu0 %v530
    %3225 = vmatprep.subr.mxu0 %v535
    %3226 = vmatpush1.msra.mxu0 %v534
    %3227 = vmatprep.subr.mxu0 %v539
    %3228 = vmatpush1.msra.mxu0 %v538
    %3229 = vmatprep.subr.mxu0 %v543
    %3230 = vmatpush1.msra.mxu0 %v542
    %3231 = vmatprep.subr.mxu0 %v547
    %3232 = vmatpush1.msra.mxu0 %v546
    %3233 = vmatprep.subr.mxu0 %v551
    %3234 = vmatpush1.msra.mxu0 %v550
    %3235 = vmatprep.subr.mxu0 %v555
    %3236 = vmatpush1.msra.mxu0 %v554
    %3237 = vmatprep.subr.mxu0 %v559
    %3238 = vmatpush1.msra.mxu0 %v558
    %3239 = vmatprep.mubr.f32.mxu0 %v2933
    %3240 = vmatmul.mubr.f32.gmra.mrb[0].mxu0 %v3103
    %v3241 = vpop.f32.mrb[0].mxu0
    %v3242 = vadd.f32 %v573, %v3241
    %v3243 = vpop.f32.mrb[0].mxu0
    %v3244 = vadd.f32 %v577, %v3243
    %3245 = vdwg.mxu0
    %v3246 = vxor.u32 %v3171, 2147483648
    %v3247 = vmul.f32 %v3246, 1.442695
    %v3248 = vpow.pop %v3247
    %v3249 = vadd.f32 %v3248, 1.0
    %v3250 = vrcp.pop %v3249
    %v3251 = vmul.f32 1.0, %v3250
    %v3252 = vxor.u32 %v3173, 2147483648
    %v3253 = vmul.f32 %v3252, 1.442695
    %v3254 = vpow.pop %v3253
    %v3255 = vadd.f32 %v3254, 1.0
    %v3256 = vrcp.pop %v3255
    %v3257 = vmul.f32 1.0, %v3256
    %v3258 = vtanh.pop %v3242
    %v3259 = vxor.u32 %v3244, 2147483648
    %v3260 = vmul.f32 %v3259, 1.442695
    %v3261 = vpow.pop %v3260
    %v3262 = vadd.f32 %v3261, 1.0
    %v3263 = vrcp.pop %v3262
    %v3264 = vmul.f32 1.0, %v3263
    %v3265 = vmul.f32 %v3257, %v2931
    %v3266 = vmul.f32 %v3251, %v3258
    %v3267 = vadd.f32 %v3265, %v3266
    %v3268 = vtanh.pop %v3267
    %v3269 = vmul.f32 %v3264, %v3268
    %v3270 = vld [vmem:[%s6] sm:$0xff]
    %v3271 = vld [vmem:[%s6 + $0x8] sm:$0xff]
    %v3272 = vld [vmem:[%s6 + $0x10] sm:$0xff]
    %v3273 = vld [vmem:[%s6 + $0x18] sm:$0xff]
    %v3274 = vld [vmem:[%s6 + $0x20] sm:$0xff]
    %v3275 = vld [vmem:[%s6 + $0x28] sm:$0xff]
    %v3276 = vld [vmem:[%s6 + $0x30] sm:$0xff]
    %v3277 = vld [vmem:[%s6 + $0x38] sm:$0xff]
    %v3278 = vld [vmem:[%s6 + $0x40] sm:$0xff]
    %v3279 = vld [vmem:[%s6 + $0x48] sm:$0xff]
    %v3280 = vld [vmem:[%s6 + $0x50] sm:$0xff]
    %v3281 = vld [vmem:[%s6 + $0x58] sm:$0xff]
    %v3282 = vld [vmem:[%s6 + $0x60] sm:$0xff]
    %v3283 = vld [vmem:[%s6 + $0x68] sm:$0xff]
    %v3284 = vld [vmem:[%s6 + $0x70] sm:$0xff]
    %v3285 = vld [vmem:[%s6 + $0x78] sm:$0xff]
    %v3286 = vld [vmem:[%s7] sm:$0x1]
    %v3288 = vlaneseq
    %v3289 = vshrl.u32 %v3288, 7
    %v3290 = vsub.s32 0, %v3289
    %v3291 = vrot.slane %v3286, %v3290
    %3293 = vmatprep.subr.mxu0 0.0
    %3294 = vmatpush1.msra.mxu0 %v3270
    %3295 = vmatprep.subr.mxu0 0.0
    %3296 = vmatpush1.msra.mxu0 %v3271
    %3297 = vmatprep.subr.mxu0 0.0
    %3298 = vmatpush1.msra.mxu0 %v3272
    %3299 = vmatprep.subr.mxu0 0.0
    %3300 = vmatpush1.msra.mxu0 %v3273
    %3301 = vmatprep.subr.mxu0 0.0
    %3302 = vmatpush1.msra.mxu0 %v3274
    %3303 = vmatprep.subr.mxu0 0.0
    %3304 = vmatpush1.msra.mxu0 %v3275
    %3305 = vmatprep.subr.mxu0 0.0
    %3306 = vmatpush1.msra.mxu0 %v3276
    %3307 = vmatprep.subr.mxu0 0.0
    %3308 = vmatpush1.msra.mxu0 %v3277
    %3309 = vmatprep.subr.mxu0 0.0
    %3310 = vmatpush1.msra.mxu0 %v3278
    %3311 = vmatprep.subr.mxu0 0.0
    %3312 = vmatpush1.msra.mxu0 %v3279
    %3313 = vmatprep.subr.mxu0 0.0
    %3314 = vmatpush1.msra.mxu0 %v3280
    %3315 = vmatprep.subr.mxu0 0.0
    %3316 = vmatpush1.msra.mxu0 %v3281
    %3317 = vmatprep.subr.mxu0 0.0
    %3318 = vmatpush1.msra.mxu0 %v3282
    %3319 = vmatprep.subr.mxu0 0.0
    %3320 = vmatpush1.msra.mxu0 %v3283
    %3321 = vmatprep.subr.mxu0 0.0
    %3322 = vmatpush1.msra.mxu0 %v3284
    %3323 = vmatprep.subr.mxu0 0.0
    %3324 = vmatpush1.msra.mxu0 %v3285
    %3325 = vmatprep.subr.mxu0 0.0
    %3326 = vmatpush1.msra.mxu0 0.0
    %3327 = vmatprep.subr.mxu0 0.0
    %3328 = vmatpush1.msra.mxu0 0.0
    %3329 = vmatprep.subr.mxu0 0.0
    %3330 = vmatpush1.msra.mxu0 0.0
    %3331 = vmatprep.subr.mxu0 0.0
    %3332 = vmatpush1.msra.mxu0 0.0
    %3333 = vmatprep.subr.mxu0 0.0
    %3334 = vmatpush1.msra.mxu0 0.0
    %3335 = vmatprep.subr.mxu0 0.0
    %3336 = vmatpush1.msra.mxu0 0.0
    %3337 = vmatprep.subr.mxu0 0.0
    %3338 = vmatpush1.msra.mxu0 0.0
    %3339 = vmatprep.subr.mxu0 0.0
    %3340 = vmatpush1.msra.mxu0 0.0
    %3341 = vmatprep.subr.mxu0 0.0
    %3342 = vmatpush1.msra.mxu0 0.0
    %3343 = vmatprep.subr.mxu0 0.0
    %3344 = vmatpush1.msra.mxu0 0.0
    %3345 = vmatprep.subr.mxu0 0.0
    %3346 = vmatpush1.msra.mxu0 0.0
    %3347 = vmatprep.subr.mxu0 0.0
    %3348 = vmatpush1.msra.mxu0 0.0
    %3349 = vmatprep.subr.mxu0 0.0
    %3350 = vmatpush1.msra.mxu0 0.0
    %3351 = vmatprep.subr.mxu0 0.0
    %3352 = vmatpush1.msra.mxu0 0.0
    %3353 = vmatprep.subr.mxu0 0.0
    %3354 = vmatpush1.msra.mxu0 0.0
    %3355 = vmatprep.subr.mxu0 0.0
    %3356 = vmatpush1.msra.mxu0 0.0
    %3357 = vmatprep.mubr.f32.mxu0 0.0
    %3358 = vmatmul.mubr.f32.gmra.mrb[0].mxu0 %v3269
    %v3359 = vpop.f32.mrb[0].mxu0
    %v3360 = vadd.f32 %v3291, %v3359
    %v3361 = vpop.f32.mrb[0].mxu0
    %3362 = vdwg.mxu0
    %vm3363 = vcmask 80896
    %3364 = vst.msk [vmem:[#allocation7] sm:$0xff] %vm3363, %v3360
    // Predicated region
    $region42: #{tpu_custom_call.1} parent=1 // pred_check
      _
    $region43: #{tpu_custom_call.1} parent=1 // pred_check_branch
      %3366 = sbr.rel (0) target = $region45
    $region44: #{tpu_custom_call.1} parent=1 // pred_region
      %s3368 = ssub.s32 128, 128
      %3369 = vsyncadd [#allocation4], %s3368
      %s3371 = sshll.u32 [#allocation7], 4
      %s3372 = int_to_ptr.vmem [resolvable:$true] %s3371
      %3374 = dma.vmem_to_hbm [thread:$0]  %s3372, 128, %s8, [#allocation4]
    $region45: #{tpu_custom_call.1} parent=1 // pred_fallthru
      _
    // Predicated region
    $region46: #{tpu_custom_call.1} parent=1 // pred_check
      _
    $region47: #{tpu_custom_call.1} parent=1 // pred_check_branch
      %3376 = sbr.rel (0) target = $region49
    $region48: #{tpu_custom_call.1} parent=1 // pred_region
      %3377 = dma.done [#allocation4], 128
    $region49: #{tpu_custom_call.1} parent=1 // pred_fallthru
      _
    %3378 = vsyncpa [#allocation3], 1
    %3379 = vsyncpa [#allocation6], 1
    %3380 = vsyncpa [#allocation4], 1

</llo_original>
